<compile_context>
chip_gen: v6e
topology: v6e:2x2x1
jax: 0.10.0
libtpu: 0.0.40
codegen_flags: <defaults>
</compile_context>

<pallas_src>
import math
import functools

import jax
import jax.numpy as jnp
from jax.experimental import pallas as pl
from jax.experimental.pallas import tpu as pltpu

# ----------------------------- mini config ---------------------------------
VOCAB = 100       # vocab size of the synthetic embedding table
B = 2             # batch
S = 8             # max_length (sequence length)
D = 128           # hidden size (stands in for 768)
N_HEADS = 4
DH = D // N_HEADS # 32
FFN = 256         # intermediate size
N_LAYERS = 2
H_CLS = 50        # classifier hidden (n_hidden=50)
OUT = 2           # out_dim=2
LN_EPS = 1e-5
DTYPE = jnp.float32

CLS_PAD = 128     # lane-dense padding of classifier hidden (50 -> 128)
OUT_PAD = 128     # lane-dense padding of logits (2 -> 128)

N_GLOBAL = 4      # x, bias, emb_ln_g, emb_ln_b
PER_LAYER = 12
N_CLF = 4
N_IN = N_GLOBAL + PER_LAYER * N_LAYERS + N_CLF


# ------------------------- fused forward kernel -----------------------------
def fused_kernel(*args):
    """Whole BertClassifier forward in one grid=(1,) invocation.

    args = (32 input refs, out_ref, attn_scratch).
    Input order: x[B*S,D], bias[B,S], emb_ln_g, emb_ln_b,
                 N_LAYERS x (wqkv, bqkv, wo, bo, ln1_g, ln1_b,
                             w_ffn1, b_ffn1, w_ffn2, b_ffn2, ln2_g, ln2_b),
                 clf_w1p, clf_b1p, clf_w2p, clf_b2p.
    """
    in_refs = args[:N_IN]
    out_ref = args[N_IN]
    attn_scr = args[N_IN + 1]

    x_ref, bias_ref, eg_ref, eb_ref = in_refs[:N_GLOBAL]

    def layer_norm(x, g_ref, b_ref):
        mu = jnp.mean(x, axis=-1, keepdims=True)
        var = jnp.mean((x - mu) * (x - mu), axis=-1, keepdims=True)
        return (x - mu) * jax.lax.rsqrt(var + LN_EPS) * g_ref[...] + b_ref[...]

    def dense(x, w_ref, b_ref, act=None):
        # bf16 MXU operands, f32 accumulation; bias/activation math in f32.
        y = jnp.dot(x.astype(jnp.bfloat16), w_ref[...],
                    preferred_element_type=jnp.float32)
        y = y + b_ref[...]
        if act == "relu":
            y = jnp.maximum(y, 0.0)
        elif act == "gelu":
            y = jax.nn.gelu(y, approximate=True)
        return y

    # Embedding layernorm.
    h = layer_norm(x_ref[...].astype(jnp.float32), eg_ref, eb_ref)
    bias_v = bias_ref[...]                       # [B, S] additive mask (0 / -1e9)

    idx = N_GLOBAL
    for _ in range(N_LAYERS):
        (wqkv_r, bqkv_r, wo_r, bo_r, g1_r, b1_r,
         wf1_r, bf1_r, wf2_r, bf2_r, g2_r, b2_r) = in_refs[idx:idx + PER_LAYER]
        idx += PER_LAYER

        # Fused QKV projection (Wq / bq already pre-scaled by 1/sqrt(DH)).
        qkv = dense(h, wqkv_r, bqkv_r)           # [B*S, 3D]

        # Attention over all (batch, head) pairs, fully inside this kernel.
        for b in range(B):
            r0, r1 = b * S, (b + 1) * S
            bias_b = bias_v[b:b + 1, :]          # [1, S] -> broadcast over queries
            for hd in range(N_HEADS):
                c = hd * DH
                qh = qkv[r0:r1, c:c + DH]                       # [S, DH]
                kh = qkv[r0:r1, D + c:D + c + DH]               # [S, DH]
                vh = qkv[r0:r1, 2 * D + c:2 * D + c + DH]       # [S, DH]
                # q @ k^T without materializing a transpose.
                s = jax.lax.dot_general(
                    qh.astype(jnp.bfloat16), kh.astype(jnp.bfloat16),
                    (((1,), (1,)), ((), ())),
                    preferred_element_type=jnp.float32)          # [S, S]
                s = s + bias_b
                m = jnp.max(s, axis=-1, keepdims=True)
                p = jnp.exp(s - m)
                denom = jnp.sum(p, axis=-1, keepdims=True)
                o = jnp.dot(p.astype(jnp.bfloat16), vh.astype(jnp.bfloat16),
                            preferred_element_type=jnp.float32)  # [S, DH]
                o = o * pl.reciprocal(denom, approx=True)
                attn_scr[r0:r1, c:c + DH] = o
        attn = attn_scr[...]                     # [B*S, D]

        # Attention output proj + residual + LN1.
        h = layer_norm(h + dense(attn, wo_r, bo_r), g1_r, b1_r)
        # FFN (gelu) + residual + LN2; the [B*S, FFN] intermediate stays in VMEM.
        ffn = dense(dense(h, wf1_r, bf1_r, act="gelu"), wf2_r, bf2_r)
        h = layer_norm(h + ffn, g2_r, b2_r)

    # Classifier head on all rows (trivially cheap); wrapper picks CLS rows.
    # Linear(D, 50) -> ReLU -> Dropout(identity) -> Linear(50, 2), lane-padded.
    cw1_r, cb1_r, cw2_r, cb2_r = in_refs[idx:idx + N_CLF]
    hidden = dense(h, cw1_r, cb1_r, act="relu")  # [B*S, CLS_PAD]
    logits = dense(hidden, cw2_r, cb2_r)         # [B*S, OUT_PAD]
    out_ref[...] = logits.astype(out_ref.dtype)


# ---------------------------- parameters ------------------------------------
def init_params(key):
    def nrm(k, shape, scale=0.02):
        return (scale * jax.random.normal(k, shape)).astype(DTYPE)

    keys = iter(jax.random.split(key, 64))
    p = {
        "word_emb": nrm(next(keys), (VOCAB, D)),
        "pos_emb": nrm(next(keys), (S, D)),
        "emb_ln_g": jnp.ones((D,), DTYPE),
        "emb_ln_b": jnp.zeros((D,), DTYPE),
        "layers": [],
        "clf_w1": nrm(next(keys), (D, H_CLS)),
        "clf_b1": jnp.zeros((H_CLS,), DTYPE),
        "clf_w2": nrm(next(keys), (H_CLS, OUT)),
        "clf_b2": jnp.zeros((OUT,), DTYPE),
    }
    for _ in range(N_LAYERS):
        layer = {
            "wq": nrm(next(keys), (D, D)), "bq": jnp.zeros((D,), DTYPE),
            "wk": nrm(next(keys), (D, D)), "bk": jnp.zeros((D,), DTYPE),
            "wv": nrm(next(keys), (D, D)), "bv": jnp.zeros((D,), DTYPE),
            "wo": nrm(next(keys), (D, D)), "bo": jnp.zeros((D,), DTYPE),
            "ln1_g": jnp.ones((D,), DTYPE), "ln1_b": jnp.zeros((D,), DTYPE),
            "w_ffn1": nrm(next(keys), (D, FFN)), "b_ffn1": jnp.zeros((FFN,), DTYPE),
            "w_ffn2": nrm(next(keys), (FFN, D)), "b_ffn2": jnp.zeros((D,), DTYPE),
            "ln2_g": jnp.ones((D,), DTYPE), "ln2_b": jnp.zeros((D,), DTYPE),
        }
        p["layers"].append(layer)
    return p


def prepare_fused_weights(params):
    """Concat/pad/cast weights into the flat list consumed by fused_kernel."""
    scale = 1.0 / math.sqrt(DH)
    r1 = lambda a, n: a.reshape(1, n).astype(jnp.float32)

    flat = [r1(params["emb_ln_g"], D), r1(params["emb_ln_b"], D)]
    for layer in params["layers"]:
        # Fold the attention scale into Wq / bq; fuse QKV into one [D, 3D] matmul.
        wqkv = jnp.concatenate(
            [layer["wq"] * scale, layer["wk"], layer["wv"]], axis=1)
        bqkv = jnp.concatenate(
            [layer["bq"] * scale, layer["bk"], layer["bv"]]).reshape(1, 3 * D)
        flat += [
            wqkv.astype(jnp.bfloat16),
            bqkv.astype(jnp.float32),
            layer["wo"].astype(jnp.bfloat16),
            r1(layer["bo"], D),
            r1(layer["ln1_g"], D), r1(layer["ln1_b"], D),
            layer["w_ffn1"].astype(jnp.bfloat16),
            r1(layer["b_ffn1"], FFN),
            layer["w_ffn2"].astype(jnp.bfloat16),
            r1(layer["b_ffn2"], D),
            r1(layer["ln2_g"], D), r1(layer["ln2_b"], D),
        ]

    # Lane-dense padded classifier (zeros in the padding -> exact logits).
    w1p = jnp.zeros((D, CLS_PAD), jnp.float32).at[:, :H_CLS].set(params["clf_w1"])
    b1p = jnp.zeros((1, CLS_PAD), jnp.float32).at[0, :H_CLS].set(params["clf_b1"])
    w2p = jnp.zeros((CLS_PAD, OUT_PAD), jnp.float32).at[:H_CLS, :OUT].set(params["clf_w2"])
    b2p = jnp.zeros((1, OUT_PAD), jnp.float32).at[0, :OUT].set(params["clf_b2"])
    flat += [w1p.astype(jnp.bfloat16), b1p, w2p.astype(jnp.bfloat16), b2p]
    return flat


# ----------------------------- forward pass ---------------------------------
def make_forward(params):
    fused = prepare_fused_weights(params)
    word_emb = params["word_emb"]
    pos_emb = params["pos_emb"]

    def forward(input_ids, attention_mask, global_attention):
        Bb, Ss = input_ids.shape

        # Embedding gather is glue (plain JAX); everything else is the fused kernel.
        x = jnp.take(word_emb, input_ids, axis=0) + pos_emb[None, :Ss, :]
        x = x.reshape(Bb * Ss, D).astype(jnp.float32)

        # Additive attention bias row per batch (global tokens already visible
        # under the full-attention approximation).
        keep = jnp.maximum(attention_mask, global_attention).astype(jnp.float32)
        bias = (1.0 - keep) * (-1e9)                         # [B, S]

        inputs = [x, bias] + fused
        in_specs = [pl.BlockSpec(a.shape, lambda i: (0, 0)) for a in inputs]

        logits_pad = pl.pallas_call(
            fused_kernel,
            out_shape=jax.ShapeDtypeStruct((Bb * Ss, OUT_PAD), jnp.float32),
            grid=(1,),
            in_specs=in_specs,
            out_specs=pl.BlockSpec((Bb * Ss, OUT_PAD), lambda i: (0, 0)),
            scratch_shapes=[pltpu.VMEM((Bb * Ss, D), jnp.float32)],
            compiler_params=pltpu.CompilerParams(
                dimension_semantics=("arbitrary",)),
        )(*inputs)

        # CLS token rows (token 0 of each sequence), real logit columns.
        return logits_pad[0::Ss, :OUT]

    return forward


# --------------------------------- main --------------------------------------
if __name__ == "__main__":
    key = jax.random.PRNGKey(0)
    k_param, k_ids = jax.random.split(key)

    params = init_params(k_param)

    input_ids = jax.random.randint(k_ids, (B, S), 0, VOCAB, dtype=jnp.int32)
    # second example has its last 2 tokens padded
    attention_mask = jnp.array([[1] * S, [1] * (S - 2) + [0, 0]], dtype=jnp.int32)
    # global attention on the CLS token only (standard longformer classification)
    global_attention = jnp.zeros((B, S), jnp.int32).at[:, 0].set(1)

    fwd = jax.jit(make_forward(params))
    logits = fwd(input_ids, attention_mask, global_attention)
    jax.block_until_ready(logits)

    assert logits.shape == (B, OUT), logits.shape
    assert bool(jnp.all(jnp.isfinite(logits)))
    print("KERNEL_OK")
</pallas_src>

<mosaic_0001>
module attributes {stable_mosaic.version = 11 : i64} {
  func.func @fused_kernel(%arg0: i32, %arg1: memref<16x128xf32, #tpu.memory_space<vmem>>, %arg2: memref<2x8xf32, #tpu.memory_space<vmem>>, %arg3: memref<1x128xf32, #tpu.memory_space<vmem>>, %arg4: memref<1x128xf32, #tpu.memory_space<vmem>>, %arg5: memref<128x384xbf16, #tpu.memory_space<vmem>>, %arg6: memref<1x384xf32, #tpu.memory_space<vmem>>, %arg7: memref<128x128xbf16, #tpu.memory_space<vmem>>, %arg8: memref<1x128xf32, #tpu.memory_space<vmem>>, %arg9: memref<1x128xf32, #tpu.memory_space<vmem>>, %arg10: memref<1x128xf32, #tpu.memory_space<vmem>>, %arg11: memref<128x256xbf16, #tpu.memory_space<vmem>>, %arg12: memref<1x256xf32, #tpu.memory_space<vmem>>, %arg13: memref<256x128xbf16, #tpu.memory_space<vmem>>, %arg14: memref<1x128xf32, #tpu.memory_space<vmem>>, %arg15: memref<1x128xf32, #tpu.memory_space<vmem>>, %arg16: memref<1x128xf32, #tpu.memory_space<vmem>>, %arg17: memref<128x384xbf16, #tpu.memory_space<vmem>>, %arg18: memref<1x384xf32, #tpu.memory_space<vmem>>, %arg19: memref<128x128xbf16, #tpu.memory_space<vmem>>, %arg20: memref<1x128xf32, #tpu.memory_space<vmem>>, %arg21: memref<1x128xf32, #tpu.memory_space<vmem>>, %arg22: memref<1x128xf32, #tpu.memory_space<vmem>>, %arg23: memref<128x256xbf16, #tpu.memory_space<vmem>>, %arg24: memref<1x256xf32, #tpu.memory_space<vmem>>, %arg25: memref<256x128xbf16, #tpu.memory_space<vmem>>, %arg26: memref<1x128xf32, #tpu.memory_space<vmem>>, %arg27: memref<1x128xf32, #tpu.memory_space<vmem>>, %arg28: memref<1x128xf32, #tpu.memory_space<vmem>>, %arg29: memref<128x128xbf16, #tpu.memory_space<vmem>>, %arg30: memref<1x128xf32, #tpu.memory_space<vmem>>, %arg31: memref<128x128xbf16, #tpu.memory_space<vmem>>, %arg32: memref<1x128xf32, #tpu.memory_space<vmem>>, %arg33: memref<16x128xf32, #tpu.memory_space<vmem>>, %arg34: memref<16x128xf32, #tpu.memory_space<vmem>>) attributes {dimension_semantics = [#tpu.dimension_semantics<arbitrary>], iteration_bounds = array<i64: 1>, scalar_prefetch = 0 : i64, scratch_operands = 1 : i64, tpu.core_type = #tpu.core_type<tc>, window_params = [{pipeline_mode = #tpu.pipeline_mode<synchronous>, transform_indices = @transform_0, window_bounds = array<i64: 16, 128>}, {pipeline_mode = #tpu.pipeline_mode<synchronous>, transform_indices = @transform_1, window_bounds = array<i64: 2, 8>}, {pipeline_mode = #tpu.pipeline_mode<synchronous>, transform_indices = @transform_2, window_bounds = array<i64: 1, 128>}, {pipeline_mode = #tpu.pipeline_mode<synchronous>, transform_indices = @transform_3, window_bounds = array<i64: 1, 128>}, {pipeline_mode = #tpu.pipeline_mode<synchronous>, transform_indices = @transform_4, window_bounds = array<i64: 128, 384>}, {pipeline_mode = #tpu.pipeline_mode<synchronous>, transform_indices = @transform_5, window_bounds = array<i64: 1, 384>}, {pipeline_mode = #tpu.pipeline_mode<synchronous>, transform_indices = @transform_6, window_bounds = array<i64: 128, 128>}, {pipeline_mode = #tpu.pipeline_mode<synchronous>, transform_indices = @transform_7, window_bounds = array<i64: 1, 128>}, {pipeline_mode = #tpu.pipeline_mode<synchronous>, transform_indices = @transform_8, window_bounds = array<i64: 1, 128>}, {pipeline_mode = #tpu.pipeline_mode<synchronous>, transform_indices = @transform_9, window_bounds = array<i64: 1, 128>}, {pipeline_mode = #tpu.pipeline_mode<synchronous>, transform_indices = @transform_10, window_bounds = array<i64: 128, 256>}, {pipeline_mode = #tpu.pipeline_mode<synchronous>, transform_indices = @transform_11, window_bounds = array<i64: 1, 256>}, {pipeline_mode = #tpu.pipeline_mode<synchronous>, transform_indices = @transform_12, window_bounds = array<i64: 256, 128>}, {pipeline_mode = #tpu.pipeline_mode<synchronous>, transform_indices = @transform_13, window_bounds = array<i64: 1, 128>}, {pipeline_mode = #tpu.pipeline_mode<synchronous>, transform_indices = @transform_14, window_bounds = array<i64: 1, 128>}, {pipeline_mode = #tpu.pipeline_mode<synchronous>, transform_indices = @transform_15, window_bounds = array<i64: 1, 128>}, {pipeline_mode = #tpu.pipeline_mode<synchronous>, transform_indices = @transform_16, window_bounds = array<i64: 128, 384>}, {pipeline_mode = #tpu.pipeline_mode<synchronous>, transform_indices = @transform_17, window_bounds = array<i64: 1, 384>}, {pipeline_mode = #tpu.pipeline_mode<synchronous>, transform_indices = @transform_18, window_bounds = array<i64: 128, 128>}, {pipeline_mode = #tpu.pipeline_mode<synchronous>, transform_indices = @transform_19, window_bounds = array<i64: 1, 128>}, {pipeline_mode = #tpu.pipeline_mode<synchronous>, transform_indices = @transform_20, window_bounds = array<i64: 1, 128>}, {pipeline_mode = #tpu.pipeline_mode<synchronous>, transform_indices = @transform_21, window_bounds = array<i64: 1, 128>}, {pipeline_mode = #tpu.pipeline_mode<synchronous>, transform_indices = @transform_22, window_bounds = array<i64: 128, 256>}, {pipeline_mode = #tpu.pipeline_mode<synchronous>, transform_indices = @transform_23, window_bounds = array<i64: 1, 256>}, {pipeline_mode = #tpu.pipeline_mode<synchronous>, transform_indices = @transform_24, window_bounds = array<i64: 256, 128>}, {pipeline_mode = #tpu.pipeline_mode<synchronous>, transform_indices = @transform_25, window_bounds = array<i64: 1, 128>}, {pipeline_mode = #tpu.pipeline_mode<synchronous>, transform_indices = @transform_26, window_bounds = array<i64: 1, 128>}, {pipeline_mode = #tpu.pipeline_mode<synchronous>, transform_indices = @transform_27, window_bounds = array<i64: 1, 128>}, {pipeline_mode = #tpu.pipeline_mode<synchronous>, transform_indices = @transform_28, window_bounds = array<i64: 128, 128>}, {pipeline_mode = #tpu.pipeline_mode<synchronous>, transform_indices = @transform_29, window_bounds = array<i64: 1, 128>}, {pipeline_mode = #tpu.pipeline_mode<synchronous>, transform_indices = @transform_30, window_bounds = array<i64: 128, 128>}, {pipeline_mode = #tpu.pipeline_mode<synchronous>, transform_indices = @transform_31, window_bounds = array<i64: 1, 128>}, {pipeline_mode = #tpu.pipeline_mode<synchronous>, transform_indices = @transform_32, window_bounds = array<i64: 16, 128>}]} {
    %c0 = arith.constant 0 : index
    %c0_0 = arith.constant 0 : index
    %0 = vector.load %arg1[%c0, %c0_0] : memref<16x128xf32, #tpu.memory_space<vmem>>, vector<16x128xf32>
    %cst = arith.constant dense<0.000000e+00> : vector<16xf32>
    %1 = vector.multi_reduction <add>, %0, %cst [1] : vector<16x128xf32> to vector<16xf32>
    %2 = vector.shape_cast %1 : vector<16xf32> to vector<16x1xf32>
    %cst_1 = arith.constant 1.280000e+02 : f32
    %3 = vector.broadcast %cst_1 : f32 to vector<16x1xf32>
    %4 = arith.divf %2, %3 : vector<16x1xf32>
    %5 = vector.broadcast %4 : vector<16x1xf32> to vector<16x128xf32>
    %6 = arith.subf %0, %5 : vector<16x128xf32>
    %7 = vector.broadcast %4 : vector<16x1xf32> to vector<16x128xf32>
    %8 = arith.subf %0, %7 : vector<16x128xf32>
    %9 = arith.mulf %6, %8 : vector<16x128xf32>
    %cst_2 = arith.constant dense<0.000000e+00> : vector<16xf32>
    %10 = vector.multi_reduction <add>, %9, %cst_2 [1] : vector<16x128xf32> to vector<16xf32>
    %11 = vector.shape_cast %10 : vector<16xf32> to vector<16x1xf32>
    %cst_3 = arith.constant 1.280000e+02 : f32
    %12 = vector.broadcast %cst_3 : f32 to vector<16x1xf32>
    %13 = arith.divf %11, %12 : vector<16x1xf32>
    %14 = vector.broadcast %4 : vector<16x1xf32> to vector<16x128xf32>
    %15 = arith.subf %0, %14 : vector<16x128xf32>
    %cst_4 = arith.constant 9.99999974E-6 : f32
    %16 = vector.broadcast %cst_4 : f32 to vector<16x1xf32>
    %17 = arith.addf %13, %16 : vector<16x1xf32>
    %18 = math.rsqrt %17 : vector<16x1xf32>
    %19 = vector.broadcast %18 : vector<16x1xf32> to vector<16x128xf32>
    %20 = arith.mulf %15, %19 : vector<16x128xf32>
    %c0_5 = arith.constant 0 : index
    %c0_6 = arith.constant 0 : index
    %21 = vector.load %arg3[%c0_5, %c0_6] : memref<1x128xf32, #tpu.memory_space<vmem>>, vector<1x128xf32>
    %22 = vector.broadcast %21 : vector<1x128xf32> to vector<16x128xf32>
    %23 = arith.mulf %20, %22 : vector<16x128xf32>
    %c0_7 = arith.constant 0 : index
    %c0_8 = arith.constant 0 : index
    %24 = vector.load %arg4[%c0_7, %c0_8] : memref<1x128xf32, #tpu.memory_space<vmem>>, vector<1x128xf32>
    %25 = vector.broadcast %24 : vector<1x128xf32> to vector<16x128xf32>
    %26 = arith.addf %23, %25 : vector<16x128xf32>
    %c0_9 = arith.constant 0 : index
    %c0_10 = arith.constant 0 : index
    %27 = vector.load %arg2[%c0_9, %c0_10] : memref<2x8xf32, #tpu.memory_space<vmem>>, vector<2x8xf32>
    %28 = arith.truncf %26 : vector<16x128xf32> to vector<16x128xbf16>
    %c0_11 = arith.constant 0 : index
    %c0_12 = arith.constant 0 : index
    %29 = vector.load %arg5[%c0_11, %c0_12] : memref<128x384xbf16, #tpu.memory_space<vmem>>, vector<128x384xbf16>
    %cst_13 = arith.constant dense<0.000000e+00> : vector<16x384xf32>
    %30 = tpu.matmul %28, %29, %cst_13 {dimension_numbers = #tpu.dot_dimension_numbers<[1], [0], [0], [1], [0, 0, 1, 1], [], []>} : vector<16x128xbf16>, vector<128x384xbf16>, vector<16x384xf32> -> vector<16x384xf32>
    %c0_14 = arith.constant 0 : index
    %c0_15 = arith.constant 0 : index
    %31 = vector.load %arg6[%c0_14, %c0_15] : memref<1x384xf32, #tpu.memory_space<vmem>>, vector<1x384xf32>
    %32 = vector.broadcast %31 : vector<1x384xf32> to vector<16x384xf32>
    %33 = arith.addf %30, %32 : vector<16x384xf32>
    %34 = vector.extract_strided_slice %27 {offsets = [0, 0], sizes = [1, 8], strides = [1, 1]} : vector<2x8xf32> to vector<1x8xf32>
    %35 = vector.extract_strided_slice %33 {offsets = [0, 0], sizes = [8, 32], strides = [1, 1]} : vector<16x384xf32> to vector<8x32xf32>
    %36 = vector.extract_strided_slice %33 {offsets = [0, 128], sizes = [8, 32], strides = [1, 1]} : vector<16x384xf32> to vector<8x32xf32>
    %37 = vector.extract_strided_slice %33 {offsets = [0, 256], sizes = [8, 32], strides = [1, 1]} : vector<16x384xf32> to vector<8x32xf32>
    %38 = arith.truncf %35 : vector<8x32xf32> to vector<8x32xbf16>
    %39 = arith.truncf %36 : vector<8x32xf32> to vector<8x32xbf16>
    %cst_16 = arith.constant dense<0.000000e+00> : vector<8x8xf32>
    %40 = tpu.matmul %38, %39, %cst_16 {dimension_numbers = #tpu.dot_dimension_numbers<[1], [1], [0], [0], [0, 0, 1, 0], [], []>} : vector<8x32xbf16>, vector<8x32xbf16>, vector<8x8xf32> -> vector<8x8xf32>
    %41 = vector.broadcast %34 : vector<1x8xf32> to vector<8x8xf32>
    %42 = arith.addf %40, %41 : vector<8x8xf32>
    %cst_17 = arith.constant dense<0xFF800000> : vector<8xf32>
    %43 = vector.multi_reduction <maximumf>, %42, %cst_17 [1] : vector<8x8xf32> to vector<8xf32>
    %44 = vector.shape_cast %43 : vector<8xf32> to vector<8x1xf32>
    %45 = vector.broadcast %44 : vector<8x1xf32> to vector<8x8xf32>
    %46 = arith.subf %42, %45 : vector<8x8xf32>
    %47 = math.exp %46 : vector<8x8xf32>
    %cst_18 = arith.constant dense<0.000000e+00> : vector<8xf32>
    %48 = vector.multi_reduction <add>, %47, %cst_18 [1] : vector<8x8xf32> to vector<8xf32>
    %49 = vector.shape_cast %48 : vector<8xf32> to vector<8x1xf32>
    %50 = arith.truncf %47 : vector<8x8xf32> to vector<8x8xbf16>
    %51 = arith.truncf %37 : vector<8x32xf32> to vector<8x32xbf16>
    %cst_19 = arith.constant dense<0.000000e+00> : vector<8x32xf32>
    %52 = tpu.matmul %50, %51, %cst_19 {dimension_numbers = #tpu.dot_dimension_numbers<[1], [0], [0], [1], [0, 0, 1, 1], [], []>} : vector<8x8xbf16>, vector<8x32xbf16>, vector<8x32xf32> -> vector<8x32xf32>
    %53 = tpu.reciprocal %49 {approx = true} : vector<8x1xf32> -> vector<8x1xf32>
    %54 = vector.broadcast %53 : vector<8x1xf32> to vector<8x32xf32>
    %55 = arith.mulf %52, %54 : vector<8x32xf32>
    %c0_20 = arith.constant 0 : index
    %c0_21 = arith.constant 0 : index
    %56 = vector.load %arg34[%c0_20, %c0_21] : memref<16x128xf32, #tpu.memory_space<vmem>>, vector<8x32xf32>
    tpu.vector_store %arg34[%c0_20, %c0_21], %55 {strides = array<i32>} : memref<16x128xf32, #tpu.memory_space<vmem>>, vector<8x32xf32>,
    %57 = vector.extract_strided_slice %33 {offsets = [0, 32], sizes = [8, 32], strides = [1, 1]} : vector<16x384xf32> to vector<8x32xf32>
    %58 = vector.extract_strided_slice %33 {offsets = [0, 160], sizes = [8, 32], strides = [1, 1]} : vector<16x384xf32> to vector<8x32xf32>
    %59 = vector.extract_strided_slice %33 {offsets = [0, 288], sizes = [8, 32], strides = [1, 1]} : vector<16x384xf32> to vector<8x32xf32>
    %60 = arith.truncf %57 : vector<8x32xf32> to vector<8x32xbf16>
    %61 = arith.truncf %58 : vector<8x32xf32> to vector<8x32xbf16>
    %cst_22 = arith.constant dense<0.000000e+00> : vector<8x8xf32>
    %62 = tpu.matmul %60, %61, %cst_22 {dimension_numbers = #tpu.dot_dimension_numbers<[1], [1], [0], [0], [0, 0, 1, 0], [], []>} : vector<8x32xbf16>, vector<8x32xbf16>, vector<8x8xf32> -> vector<8x8xf32>
    %63 = vector.broadcast %34 : vector<1x8xf32> to vector<8x8xf32>
    %64 = arith.addf %62, %63 : vector<8x8xf32>
    %cst_23 = arith.constant dense<0xFF800000> : vector<8xf32>
    %65 = vector.multi_reduction <maximumf>, %64, %cst_23 [1] : vector<8x8xf32> to vector<8xf32>
    %66 = vector.shape_cast %65 : vector<8xf32> to vector<8x1xf32>
    %67 = vector.broadcast %66 : vector<8x1xf32> to vector<8x8xf32>
    %68 = arith.subf %64, %67 : vector<8x8xf32>
    %69 = math.exp %68 : vector<8x8xf32>
    %cst_24 = arith.constant dense<0.000000e+00> : vector<8xf32>
    %70 = vector.multi_reduction <add>, %69, %cst_24 [1] : vector<8x8xf32> to vector<8xf32>
    %71 = vector.shape_cast %70 : vector<8xf32> to vector<8x1xf32>
    %72 = arith.truncf %69 : vector<8x8xf32> to vector<8x8xbf16>
    %73 = arith.truncf %59 : vector<8x32xf32> to vector<8x32xbf16>
    %cst_25 = arith.constant dense<0.000000e+00> : vector<8x32xf32>
    %74 = tpu.matmul %72, %73, %cst_25 {dimension_numbers = #tpu.dot_dimension_numbers<[1], [0], [0], [1], [0, 0, 1, 1], [], []>} : vector<8x8xbf16>, vector<8x32xbf16>, vector<8x32xf32> -> vector<8x32xf32>
    %75 = tpu.reciprocal %71 {approx = true} : vector<8x1xf32> -> vector<8x1xf32>
    %76 = vector.broadcast %75 : vector<8x1xf32> to vector<8x32xf32>
    %77 = arith.mulf %74, %76 : vector<8x32xf32>
    %c0_26 = arith.constant 0 : index
    %c32 = arith.constant 32 : index
    %78 = vector.load %arg34[%c0_26, %c32] : memref<16x128xf32, #tpu.memory_space<vmem>>, vector<8x32xf32>
    tpu.vector_store %arg34[%c0_26, %c32], %77 {strides = array<i32>} : memref<16x128xf32, #tpu.memory_space<vmem>>, vector<8x32xf32>,
    %79 = vector.extract_strided_slice %33 {offsets = [0, 64], sizes = [8, 32], strides = [1, 1]} : vector<16x384xf32> to vector<8x32xf32>
    %80 = vector.extract_strided_slice %33 {offsets = [0, 192], sizes = [8, 32], strides = [1, 1]} : vector<16x384xf32> to vector<8x32xf32>
    %81 = vector.extract_strided_slice %33 {offsets = [0, 320], sizes = [8, 32], strides = [1, 1]} : vector<16x384xf32> to vector<8x32xf32>
    %82 = arith.truncf %79 : vector<8x32xf32> to vector<8x32xbf16>
    %83 = arith.truncf %80 : vector<8x32xf32> to vector<8x32xbf16>
    %cst_27 = arith.constant dense<0.000000e+00> : vector<8x8xf32>
    %84 = tpu.matmul %82, %83, %cst_27 {dimension_numbers = #tpu.dot_dimension_numbers<[1], [1], [0], [0], [0, 0, 1, 0], [], []>} : vector<8x32xbf16>, vector<8x32xbf16>, vector<8x8xf32> -> vector<8x8xf32>
    %85 = vector.broadcast %34 : vector<1x8xf32> to vector<8x8xf32>
    %86 = arith.addf %84, %85 : vector<8x8xf32>
    %cst_28 = arith.constant dense<0xFF800000> : vector<8xf32>
    %87 = vector.multi_reduction <maximumf>, %86, %cst_28 [1] : vector<8x8xf32> to vector<8xf32>
    %88 = vector.shape_cast %87 : vector<8xf32> to vector<8x1xf32>
    %89 = vector.broadcast %88 : vector<8x1xf32> to vector<8x8xf32>
    %90 = arith.subf %86, %89 : vector<8x8xf32>
    %91 = math.exp %90 : vector<8x8xf32>
    %cst_29 = arith.constant dense<0.000000e+00> : vector<8xf32>
    %92 = vector.multi_reduction <add>, %91, %cst_29 [1] : vector<8x8xf32> to vector<8xf32>
    %93 = vector.shape_cast %92 : vector<8xf32> to vector<8x1xf32>
    %94 = arith.truncf %91 : vector<8x8xf32> to vector<8x8xbf16>
    %95 = arith.truncf %81 : vector<8x32xf32> to vector<8x32xbf16>
    %cst_30 = arith.constant dense<0.000000e+00> : vector<8x32xf32>
    %96 = tpu.matmul %94, %95, %cst_30 {dimension_numbers = #tpu.dot_dimension_numbers<[1], [0], [0], [1], [0, 0, 1, 1], [], []>} : vector<8x8xbf16>, vector<8x32xbf16>, vector<8x32xf32> -> vector<8x32xf32>
    %97 = tpu.reciprocal %93 {approx = true} : vector<8x1xf32> -> vector<8x1xf32>
    %98 = vector.broadcast %97 : vector<8x1xf32> to vector<8x32xf32>
    %99 = arith.mulf %96, %98 : vector<8x32xf32>
    %c0_31 = arith.constant 0 : index
    %c64 = arith.constant 64 : index
    %100 = vector.load %arg34[%c0_31, %c64] : memref<16x128xf32, #tpu.memory_space<vmem>>, vector<8x32xf32>
    tpu.vector_store %arg34[%c0_31, %c64], %99 {strides = array<i32>} : memref<16x128xf32, #tpu.memory_space<vmem>>, vector<8x32xf32>,
    %101 = vector.extract_strided_slice %33 {offsets = [0, 96], sizes = [8, 32], strides = [1, 1]} : vector<16x384xf32> to vector<8x32xf32>
    %102 = vector.extract_strided_slice %33 {offsets = [0, 224], sizes = [8, 32], strides = [1, 1]} : vector<16x384xf32> to vector<8x32xf32>
    %103 = vector.extract_strided_slice %33 {offsets = [0, 352], sizes = [8, 32], strides = [1, 1]} : vector<16x384xf32> to vector<8x32xf32>
    %104 = arith.truncf %101 : vector<8x32xf32> to vector<8x32xbf16>
    %105 = arith.truncf %102 : vector<8x32xf32> to vector<8x32xbf16>
    %cst_32 = arith.constant dense<0.000000e+00> : vector<8x8xf32>
    %106 = tpu.matmul %104, %105, %cst_32 {dimension_numbers = #tpu.dot_dimension_numbers<[1], [1], [0], [0], [0, 0, 1, 0], [], []>} : vector<8x32xbf16>, vector<8x32xbf16>, vector<8x8xf32> -> vector<8x8xf32>
    %107 = vector.broadcast %34 : vector<1x8xf32> to vector<8x8xf32>
    %108 = arith.addf %106, %107 : vector<8x8xf32>
    %cst_33 = arith.constant dense<0xFF800000> : vector<8xf32>
    %109 = vector.multi_reduction <maximumf>, %108, %cst_33 [1] : vector<8x8xf32> to vector<8xf32>
    %110 = vector.shape_cast %109 : vector<8xf32> to vector<8x1xf32>
    %111 = vector.broadcast %110 : vector<8x1xf32> to vector<8x8xf32>
    %112 = arith.subf %108, %111 : vector<8x8xf32>
    %113 = math.exp %112 : vector<8x8xf32>
    %cst_34 = arith.constant dense<0.000000e+00> : vector<8xf32>
    %114 = vector.multi_reduction <add>, %113, %cst_34 [1] : vector<8x8xf32> to vector<8xf32>
    %115 = vector.shape_cast %114 : vector<8xf32> to vector<8x1xf32>
    %116 = arith.truncf %113 : vector<8x8xf32> to vector<8x8xbf16>
    %117 = arith.truncf %103 : vector<8x32xf32> to vector<8x32xbf16>
    %cst_35 = arith.constant dense<0.000000e+00> : vector<8x32xf32>
    %118 = tpu.matmul %116, %117, %cst_35 {dimension_numbers = #tpu.dot_dimension_numbers<[1], [0], [0], [1], [0, 0, 1, 1], [], []>} : vector<8x8xbf16>, vector<8x32xbf16>, vector<8x32xf32> -> vector<8x32xf32>
    %119 = tpu.reciprocal %115 {approx = true} : vector<8x1xf32> -> vector<8x1xf32>
    %120 = vector.broadcast %119 : vector<8x1xf32> to vector<8x32xf32>
    %121 = arith.mulf %118, %120 : vector<8x32xf32>
    %c0_36 = arith.constant 0 : index
    %c96 = arith.constant 96 : index
    %122 = vector.load %arg34[%c0_36, %c96] : memref<16x128xf32, #tpu.memory_space<vmem>>, vector<8x32xf32>
    tpu.vector_store %arg34[%c0_36, %c96], %121 {strides = array<i32>} : memref<16x128xf32, #tpu.memory_space<vmem>>, vector<8x32xf32>,
    %123 = vector.extract_strided_slice %27 {offsets = [1, 0], sizes = [1, 8], strides = [1, 1]} : vector<2x8xf32> to vector<1x8xf32>
    %124 = vector.extract_strided_slice %33 {offsets = [8, 0], sizes = [8, 32], strides = [1, 1]} : vector<16x384xf32> to vector<8x32xf32>
    %125 = vector.extract_strided_slice %33 {offsets = [8, 128], sizes = [8, 32], strides = [1, 1]} : vector<16x384xf32> to vector<8x32xf32>
    %126 = vector.extract_strided_slice %33 {offsets = [8, 256], sizes = [8, 32], strides = [1, 1]} : vector<16x384xf32> to vector<8x32xf32>
    %127 = arith.truncf %124 : vector<8x32xf32> to vector<8x32xbf16>
    %128 = arith.truncf %125 : vector<8x32xf32> to vector<8x32xbf16>
    %cst_37 = arith.constant dense<0.000000e+00> : vector<8x8xf32>
    %129 = tpu.matmul %127, %128, %cst_37 {dimension_numbers = #tpu.dot_dimension_numbers<[1], [1], [0], [0], [0, 0, 1, 0], [], []>} : vector<8x32xbf16>, vector<8x32xbf16>, vector<8x8xf32> -> vector<8x8xf32>
    %130 = vector.broadcast %123 : vector<1x8xf32> to vector<8x8xf32>
    %131 = arith.addf %129, %130 : vector<8x8xf32>
    %cst_38 = arith.constant dense<0xFF800000> : vector<8xf32>
    %132 = vector.multi_reduction <maximumf>, %131, %cst_38 [1] : vector<8x8xf32> to vector<8xf32>
    %133 = vector.shape_cast %132 : vector<8xf32> to vector<8x1xf32>
    %134 = vector.broadcast %133 : vector<8x1xf32> to vector<8x8xf32>
    %135 = arith.subf %131, %134 : vector<8x8xf32>
    %136 = math.exp %135 : vector<8x8xf32>
    %cst_39 = arith.constant dense<0.000000e+00> : vector<8xf32>
    %137 = vector.multi_reduction <add>, %136, %cst_39 [1] : vector<8x8xf32> to vector<8xf32>
    %138 = vector.shape_cast %137 : vector<8xf32> to vector<8x1xf32>
    %139 = arith.truncf %136 : vector<8x8xf32> to vector<8x8xbf16>
    %140 = arith.truncf %126 : vector<8x32xf32> to vector<8x32xbf16>
    %cst_40 = arith.constant dense<0.000000e+00> : vector<8x32xf32>
    %141 = tpu.matmul %139, %140, %cst_40 {dimension_numbers = #tpu.dot_dimension_numbers<[1], [0], [0], [1], [0, 0, 1, 1], [], []>} : vector<8x8xbf16>, vector<8x32xbf16>, vector<8x32xf32> -> vector<8x32xf32>
    %142 = tpu.reciprocal %138 {approx = true} : vector<8x1xf32> -> vector<8x1xf32>
    %143 = vector.broadcast %142 : vector<8x1xf32> to vector<8x32xf32>
    %144 = arith.mulf %141, %143 : vector<8x32xf32>
    %c8 = arith.constant 8 : index
    %c0_41 = arith.constant 0 : index
    %145 = vector.load %arg34[%c8, %c0_41] : memref<16x128xf32, #tpu.memory_space<vmem>>, vector<8x32xf32>
    tpu.vector_store %arg34[%c8, %c0_41], %144 {strides = array<i32>} : memref<16x128xf32, #tpu.memory_space<vmem>>, vector<8x32xf32>,
    %146 = vector.extract_strided_slice %33 {offsets = [8, 32], sizes = [8, 32], strides = [1, 1]} : vector<16x384xf32> to vector<8x32xf32>
    %147 = vector.extract_strided_slice %33 {offsets = [8, 160], sizes = [8, 32], strides = [1, 1]} : vector<16x384xf32> to vector<8x32xf32>
    %148 = vector.extract_strided_slice %33 {offsets = [8, 288], sizes = [8, 32], strides = [1, 1]} : vector<16x384xf32> to vector<8x32xf32>
    %149 = arith.truncf %146 : vector<8x32xf32> to vector<8x32xbf16>
    %150 = arith.truncf %147 : vector<8x32xf32> to vector<8x32xbf16>
    %cst_42 = arith.constant dense<0.000000e+00> : vector<8x8xf32>
    %151 = tpu.matmul %149, %150, %cst_42 {dimension_numbers = #tpu.dot_dimension_numbers<[1], [1], [0], [0], [0, 0, 1, 0], [], []>} : vector<8x32xbf16>, vector<8x32xbf16>, vector<8x8xf32> -> vector<8x8xf32>
    %152 = vector.broadcast %123 : vector<1x8xf32> to vector<8x8xf32>
    %153 = arith.addf %151, %152 : vector<8x8xf32>
    %cst_43 = arith.constant dense<0xFF800000> : vector<8xf32>
    %154 = vector.multi_reduction <maximumf>, %153, %cst_43 [1] : vector<8x8xf32> to vector<8xf32>
    %155 = vector.shape_cast %154 : vector<8xf32> to vector<8x1xf32>
    %156 = vector.broadcast %155 : vector<8x1xf32> to vector<8x8xf32>
    %157 = arith.subf %153, %156 : vector<8x8xf32>
    %158 = math.exp %157 : vector<8x8xf32>
    %cst_44 = arith.constant dense<0.000000e+00> : vector<8xf32>
    %159 = vector.multi_reduction <add>, %158, %cst_44 [1] : vector<8x8xf32> to vector<8xf32>
    %160 = vector.shape_cast %159 : vector<8xf32> to vector<8x1xf32>
    %161 = arith.truncf %158 : vector<8x8xf32> to vector<8x8xbf16>
    %162 = arith.truncf %148 : vector<8x32xf32> to vector<8x32xbf16>
    %cst_45 = arith.constant dense<0.000000e+00> : vector<8x32xf32>
    %163 = tpu.matmul %161, %162, %cst_45 {dimension_numbers = #tpu.dot_dimension_numbers<[1], [0], [0], [1], [0, 0, 1, 1], [], []>} : vector<8x8xbf16>, vector<8x32xbf16>, vector<8x32xf32> -> vector<8x32xf32>
    %164 = tpu.reciprocal %160 {approx = true} : vector<8x1xf32> -> vector<8x1xf32>
    %165 = vector.broadcast %164 : vector<8x1xf32> to vector<8x32xf32>
    %166 = arith.mulf %163, %165 : vector<8x32xf32>
    %c8_46 = arith.constant 8 : index
    %c32_47 = arith.constant 32 : index
    %167 = vector.load %arg34[%c8_46, %c32_47] : memref<16x128xf32, #tpu.memory_space<vmem>>, vector<8x32xf32>
    tpu.vector_store %arg34[%c8_46, %c32_47], %166 {strides = array<i32>} : memref<16x128xf32, #tpu.memory_space<vmem>>, vector<8x32xf32>,
    %168 = vector.extract_strided_slice %33 {offsets = [8, 64], sizes = [8, 32], strides = [1, 1]} : vector<16x384xf32> to vector<8x32xf32>
    %169 = vector.extract_strided_slice %33 {offsets = [8, 192], sizes = [8, 32], strides = [1, 1]} : vector<16x384xf32> to vector<8x32xf32>
    %170 = vector.extract_strided_slice %33 {offsets = [8, 320], sizes = [8, 32], strides = [1, 1]} : vector<16x384xf32> to vector<8x32xf32>
    %171 = arith.truncf %168 : vector<8x32xf32> to vector<8x32xbf16>
    %172 = arith.truncf %169 : vector<8x32xf32> to vector<8x32xbf16>
    %cst_48 = arith.constant dense<0.000000e+00> : vector<8x8xf32>
    %173 = tpu.matmul %171, %172, %cst_48 {dimension_numbers = #tpu.dot_dimension_numbers<[1], [1], [0], [0], [0, 0, 1, 0], [], []>} : vector<8x32xbf16>, vector<8x32xbf16>, vector<8x8xf32> -> vector<8x8xf32>
    %174 = vector.broadcast %123 : vector<1x8xf32> to vector<8x8xf32>
    %175 = arith.addf %173, %174 : vector<8x8xf32>
    %cst_49 = arith.constant dense<0xFF800000> : vector<8xf32>
    %176 = vector.multi_reduction <maximumf>, %175, %cst_49 [1] : vector<8x8xf32> to vector<8xf32>
    %177 = vector.shape_cast %176 : vector<8xf32> to vector<8x1xf32>
    %178 = vector.broadcast %177 : vector<8x1xf32> to vector<8x8xf32>
    %179 = arith.subf %175, %178 : vector<8x8xf32>
    %180 = math.exp %179 : vector<8x8xf32>
    %cst_50 = arith.constant dense<0.000000e+00> : vector<8xf32>
    %181 = vector.multi_reduction <add>, %180, %cst_50 [1] : vector<8x8xf32> to vector<8xf32>
    %182 = vector.shape_cast %181 : vector<8xf32> to vector<8x1xf32>
    %183 = arith.truncf %180 : vector<8x8xf32> to vector<8x8xbf16>
    %184 = arith.truncf %170 : vector<8x32xf32> to vector<8x32xbf16>
    %cst_51 = arith.constant dense<0.000000e+00> : vector<8x32xf32>
    %185 = tpu.matmul %183, %184, %cst_51 {dimension_numbers = #tpu.dot_dimension_numbers<[1], [0], [0], [1], [0, 0, 1, 1], [], []>} : vector<8x8xbf16>, vector<8x32xbf16>, vector<8x32xf32> -> vector<8x32xf32>
    %186 = tpu.reciprocal %182 {approx = true} : vector<8x1xf32> -> vector<8x1xf32>
    %187 = vector.broadcast %186 : vector<8x1xf32> to vector<8x32xf32>
    %188 = arith.mulf %185, %187 : vector<8x32xf32>
    %c8_52 = arith.constant 8 : index
    %c64_53 = arith.constant 64 : index
    %189 = vector.load %arg34[%c8_52, %c64_53] : memref<16x128xf32, #tpu.memory_space<vmem>>, vector<8x32xf32>
    tpu.vector_store %arg34[%c8_52, %c64_53], %188 {strides = array<i32>} : memref<16x128xf32, #tpu.memory_space<vmem>>, vector<8x32xf32>,
    %190 = vector.extract_strided_slice %33 {offsets = [8, 96], sizes = [8, 32], strides = [1, 1]} : vector<16x384xf32> to vector<8x32xf32>
    %191 = vector.extract_strided_slice %33 {offsets = [8, 224], sizes = [8, 32], strides = [1, 1]} : vector<16x384xf32> to vector<8x32xf32>
    %192 = vector.extract_strided_slice %33 {offsets = [8, 352], sizes = [8, 32], strides = [1, 1]} : vector<16x384xf32> to vector<8x32xf32>
    %193 = arith.truncf %190 : vector<8x32xf32> to vector<8x32xbf16>
    %194 = arith.truncf %191 : vector<8x32xf32> to vector<8x32xbf16>
    %cst_54 = arith.constant dense<0.000000e+00> : vector<8x8xf32>
    %195 = tpu.matmul %193, %194, %cst_54 {dimension_numbers = #tpu.dot_dimension_numbers<[1], [1], [0], [0], [0, 0, 1, 0], [], []>} : vector<8x32xbf16>, vector<8x32xbf16>, vector<8x8xf32> -> vector<8x8xf32>
    %196 = vector.broadcast %123 : vector<1x8xf32> to vector<8x8xf32>
    %197 = arith.addf %195, %196 : vector<8x8xf32>
    %cst_55 = arith.constant dense<0xFF800000> : vector<8xf32>
    %198 = vector.multi_reduction <maximumf>, %197, %cst_55 [1] : vector<8x8xf32> to vector<8xf32>
    %199 = vector.shape_cast %198 : vector<8xf32> to vector<8x1xf32>
    %200 = vector.broadcast %199 : vector<8x1xf32> to vector<8x8xf32>
    %201 = arith.subf %197, %200 : vector<8x8xf32>
    %202 = math.exp %201 : vector<8x8xf32>
    %cst_56 = arith.constant dense<0.000000e+00> : vector<8xf32>
    %203 = vector.multi_reduction <add>, %202, %cst_56 [1] : vector<8x8xf32> to vector<8xf32>
    %204 = vector.shape_cast %203 : vector<8xf32> to vector<8x1xf32>
    %205 = arith.truncf %202 : vector<8x8xf32> to vector<8x8xbf16>
    %206 = arith.truncf %192 : vector<8x32xf32> to vector<8x32xbf16>
    %cst_57 = arith.constant dense<0.000000e+00> : vector<8x32xf32>
    %207 = tpu.matmul %205, %206, %cst_57 {dimension_numbers = #tpu.dot_dimension_numbers<[1], [0], [0], [1], [0, 0, 1, 1], [], []>} : vector<8x8xbf16>, vector<8x32xbf16>, vector<8x32xf32> -> vector<8x32xf32>
    %208 = tpu.reciprocal %204 {approx = true} : vector<8x1xf32> -> vector<8x1xf32>
    %209 = vector.broadcast %208 : vector<8x1xf32> to vector<8x32xf32>
    %210 = arith.mulf %207, %209 : vector<8x32xf32>
    %c8_58 = arith.constant 8 : index
    %c96_59 = arith.constant 96 : index
    %211 = vector.load %arg34[%c8_58, %c96_59] : memref<16x128xf32, #tpu.memory_space<vmem>>, vector<8x32xf32>
    tpu.vector_store %arg34[%c8_58, %c96_59], %210 {strides = array<i32>} : memref<16x128xf32, #tpu.memory_space<vmem>>, vector<8x32xf32>,
    %c0_60 = arith.constant 0 : index
    %c0_61 = arith.constant 0 : index
    %212 = vector.load %arg34[%c0_60, %c0_61] : memref<16x128xf32, #tpu.memory_space<vmem>>, vector<16x128xf32>
    %213 = arith.truncf %212 : vector<16x128xf32> to vector<16x128xbf16>
    %c0_62 = arith.constant 0 : index
    %c0_63 = arith.constant 0 : index
    %214 = vector.load %arg7[%c0_62, %c0_63] : memref<128x128xbf16, #tpu.memory_space<vmem>>, vector<128x128xbf16>
    %cst_64 = arith.constant dense<0.000000e+00> : vector<16x128xf32>
    %215 = tpu.matmul %213, %214, %cst_64 {dimension_numbers = #tpu.dot_dimension_numbers<[1], [0], [0], [1], [0, 0, 1, 1], [], []>} : vector<16x128xbf16>, vector<128x128xbf16>, vector<16x128xf32> -> vector<16x128xf32>
    %c0_65 = arith.constant 0 : index
    %c0_66 = arith.constant 0 : index
    %216 = vector.load %arg8[%c0_65, %c0_66] : memref<1x128xf32, #tpu.memory_space<vmem>>, vector<1x128xf32>
    %217 = vector.broadcast %216 : vector<1x128xf32> to vector<16x128xf32>
    %218 = arith.addf %215, %217 : vector<16x128xf32>
    %219 = arith.addf %26, %218 : vector<16x128xf32>
    %cst_67 = arith.constant dense<0.000000e+00> : vector<16xf32>
    %220 = vector.multi_reduction <add>, %219, %cst_67 [1] : vector<16x128xf32> to vector<16xf32>
    %221 = vector.shape_cast %220 : vector<16xf32> to vector<16x1xf32>
    %cst_68 = arith.constant 1.280000e+02 : f32
    %222 = vector.broadcast %cst_68 : f32 to vector<16x1xf32>
    %223 = arith.divf %221, %222 : vector<16x1xf32>
    %224 = vector.broadcast %223 : vector<16x1xf32> to vector<16x128xf32>
    %225 = arith.subf %219, %224 : vector<16x128xf32>
    %226 = vector.broadcast %223 : vector<16x1xf32> to vector<16x128xf32>
    %227 = arith.subf %219, %226 : vector<16x128xf32>
    %228 = arith.mulf %225, %227 : vector<16x128xf32>
    %cst_69 = arith.constant dense<0.000000e+00> : vector<16xf32>
    %229 = vector.multi_reduction <add>, %228, %cst_69 [1] : vector<16x128xf32> to vector<16xf32>
    %230 = vector.shape_cast %229 : vector<16xf32> to vector<16x1xf32>
    %cst_70 = arith.constant 1.280000e+02 : f32
    %231 = vector.broadcast %cst_70 : f32 to vector<16x1xf32>
    %232 = arith.divf %230, %231 : vector<16x1xf32>
    %233 = vector.broadcast %223 : vector<16x1xf32> to vector<16x128xf32>
    %234 = arith.subf %219, %233 : vector<16x128xf32>
    %cst_71 = arith.constant 9.99999974E-6 : f32
    %235 = vector.broadcast %cst_71 : f32 to vector<16x1xf32>
    %236 = arith.addf %232, %235 : vector<16x1xf32>
    %237 = math.rsqrt %236 : vector<16x1xf32>
    %238 = vector.broadcast %237 : vector<16x1xf32> to vector<16x128xf32>
    %239 = arith.mulf %234, %238 : vector<16x128xf32>
    %c0_72 = arith.constant 0 : index
    %c0_73 = arith.constant 0 : index
    %240 = vector.load %arg9[%c0_72, %c0_73] : memref<1x128xf32, #tpu.memory_space<vmem>>, vector<1x128xf32>
    %241 = vector.broadcast %240 : vector<1x128xf32> to vector<16x128xf32>
    %242 = arith.mulf %239, %241 : vector<16x128xf32>
    %c0_74 = arith.constant 0 : index
    %c0_75 = arith.constant 0 : index
    %243 = vector.load %arg10[%c0_74, %c0_75] : memref<1x128xf32, #tpu.memory_space<vmem>>, vector<1x128xf32>
    %244 = vector.broadcast %243 : vector<1x128xf32> to vector<16x128xf32>
    %245 = arith.addf %242, %244 : vector<16x128xf32>
    %246 = arith.truncf %245 : vector<16x128xf32> to vector<16x128xbf16>
    %c0_76 = arith.constant 0 : index
    %c0_77 = arith.constant 0 : index
    %247 = vector.load %arg11[%c0_76, %c0_77] : memref<128x256xbf16, #tpu.memory_space<vmem>>, vector<128x256xbf16>
    %cst_78 = arith.constant dense<0.000000e+00> : vector<16x256xf32>
    %248 = tpu.matmul %246, %247, %cst_78 {dimension_numbers = #tpu.dot_dimension_numbers<[1], [0], [0], [1], [0, 0, 1, 1], [], []>} : vector<16x128xbf16>, vector<128x256xbf16>, vector<16x256xf32> -> vector<16x256xf32>
    %c0_79 = arith.constant 0 : index
    %c0_80 = arith.constant 0 : index
    %249 = vector.load %arg12[%c0_79, %c0_80] : memref<1x256xf32, #tpu.memory_space<vmem>>, vector<1x256xf32>
    %250 = vector.broadcast %249 : vector<1x256xf32> to vector<16x256xf32>
    %251 = arith.addf %248, %250 : vector<16x256xf32>
    %252 = arith.mulf %251, %251 : vector<16x256xf32>
    %253 = arith.mulf %251, %252 : vector<16x256xf32>
    %cst_81 = arith.constant 4.471500e-02 : f32
    %254 = vector.broadcast %cst_81 : f32 to vector<16x256xf32>
    %255 = arith.mulf %254, %253 : vector<16x256xf32>
    %256 = arith.addf %251, %255 : vector<16x256xf32>
    %cst_82 = arith.constant 0.797884583 : f32
    %257 = vector.broadcast %cst_82 : f32 to vector<16x256xf32>
    %258 = arith.mulf %257, %256 : vector<16x256xf32>
    %259 = math.tanh %258 : vector<16x256xf32>
    %cst_83 = arith.constant 1.000000e+00 : f32
    %260 = vector.broadcast %cst_83 : f32 to vector<16x256xf32>
    %261 = arith.addf %260, %259 : vector<16x256xf32>
    %cst_84 = arith.constant 5.000000e-01 : f32
    %262 = vector.broadcast %cst_84 : f32 to vector<16x256xf32>
    %263 = arith.mulf %262, %261 : vector<16x256xf32>
    %264 = arith.mulf %251, %263 : vector<16x256xf32>
    %265 = arith.truncf %264 : vector<16x256xf32> to vector<16x256xbf16>
    %c0_85 = arith.constant 0 : index
    %c0_86 = arith.constant 0 : index
    %266 = vector.load %arg13[%c0_85, %c0_86] : memref<256x128xbf16, #tpu.memory_space<vmem>>, vector<256x128xbf16>
    %cst_87 = arith.constant dense<0.000000e+00> : vector<16x128xf32>
    %267 = tpu.matmul %265, %266, %cst_87 {dimension_numbers = #tpu.dot_dimension_numbers<[1], [0], [0], [1], [0, 0, 1, 1], [], []>} : vector<16x256xbf16>, vector<256x128xbf16>, vector<16x128xf32> -> vector<16x128xf32>
    %c0_88 = arith.constant 0 : index
    %c0_89 = arith.constant 0 : index
    %268 = vector.load %arg14[%c0_88, %c0_89] : memref<1x128xf32, #tpu.memory_space<vmem>>, vector<1x128xf32>
    %269 = vector.broadcast %268 : vector<1x128xf32> to vector<16x128xf32>
    %270 = arith.addf %267, %269 : vector<16x128xf32>
    %271 = arith.addf %245, %270 : vector<16x128xf32>
    %cst_90 = arith.constant dense<0.000000e+00> : vector<16xf32>
    %272 = vector.multi_reduction <add>, %271, %cst_90 [1] : vector<16x128xf32> to vector<16xf32>
    %273 = vector.shape_cast %272 : vector<16xf32> to vector<16x1xf32>
    %cst_91 = arith.constant 1.280000e+02 : f32
    %274 = vector.broadcast %cst_91 : f32 to vector<16x1xf32>
    %275 = arith.divf %273, %274 : vector<16x1xf32>
    %276 = vector.broadcast %275 : vector<16x1xf32> to vector<16x128xf32>
    %277 = arith.subf %271, %276 : vector<16x128xf32>
    %278 = vector.broadcast %275 : vector<16x1xf32> to vector<16x128xf32>
    %279 = arith.subf %271, %278 : vector<16x128xf32>
    %280 = arith.mulf %277, %279 : vector<16x128xf32>
    %cst_92 = arith.constant dense<0.000000e+00> : vector<16xf32>
    %281 = vector.multi_reduction <add>, %280, %cst_92 [1] : vector<16x128xf32> to vector<16xf32>
    %282 = vector.shape_cast %281 : vector<16xf32> to vector<16x1xf32>
    %cst_93 = arith.constant 1.280000e+02 : f32
    %283 = vector.broadcast %cst_93 : f32 to vector<16x1xf32>
    %284 = arith.divf %282, %283 : vector<16x1xf32>
    %285 = vector.broadcast %275 : vector<16x1xf32> to vector<16x128xf32>
    %286 = arith.subf %271, %285 : vector<16x128xf32>
    %cst_94 = arith.constant 9.99999974E-6 : f32
    %287 = vector.broadcast %cst_94 : f32 to vector<16x1xf32>
    %288 = arith.addf %284, %287 : vector<16x1xf32>
    %289 = math.rsqrt %288 : vector<16x1xf32>
    %290 = vector.broadcast %289 : vector<16x1xf32> to vector<16x128xf32>
    %291 = arith.mulf %286, %290 : vector<16x128xf32>
    %c0_95 = arith.constant 0 : index
    %c0_96 = arith.constant 0 : index
    %292 = vector.load %arg15[%c0_95, %c0_96] : memref<1x128xf32, #tpu.memory_space<vmem>>, vector<1x128xf32>
    %293 = vector.broadcast %292 : vector<1x128xf32> to vector<16x128xf32>
    %294 = arith.mulf %291, %293 : vector<16x128xf32>
    %c0_97 = arith.constant 0 : index
    %c0_98 = arith.constant 0 : index
    %295 = vector.load %arg16[%c0_97, %c0_98] : memref<1x128xf32, #tpu.memory_space<vmem>>, vector<1x128xf32>
    %296 = vector.broadcast %295 : vector<1x128xf32> to vector<16x128xf32>
    %297 = arith.addf %294, %296 : vector<16x128xf32>
    %298 = arith.truncf %297 : vector<16x128xf32> to vector<16x128xbf16>
    %c0_99 = arith.constant 0 : index
    %c0_100 = arith.constant 0 : index
    %299 = vector.load %arg17[%c0_99, %c0_100] : memref<128x384xbf16, #tpu.memory_space<vmem>>, vector<128x384xbf16>
    %cst_101 = arith.constant dense<0.000000e+00> : vector<16x384xf32>
    %300 = tpu.matmul %298, %299, %cst_101 {dimension_numbers = #tpu.dot_dimension_numbers<[1], [0], [0], [1], [0, 0, 1, 1], [], []>} : vector<16x128xbf16>, vector<128x384xbf16>, vector<16x384xf32> -> vector<16x384xf32>
    %c0_102 = arith.constant 0 : index
    %c0_103 = arith.constant 0 : index
    %301 = vector.load %arg18[%c0_102, %c0_103] : memref<1x384xf32, #tpu.memory_space<vmem>>, vector<1x384xf32>
    %302 = vector.broadcast %301 : vector<1x384xf32> to vector<16x384xf32>
    %303 = arith.addf %300, %302 : vector<16x384xf32>
    %304 = vector.extract_strided_slice %27 {offsets = [0, 0], sizes = [1, 8], strides = [1, 1]} : vector<2x8xf32> to vector<1x8xf32>
    %305 = vector.extract_strided_slice %303 {offsets = [0, 0], sizes = [8, 32], strides = [1, 1]} : vector<16x384xf32> to vector<8x32xf32>
    %306 = vector.extract_strided_slice %303 {offsets = [0, 128], sizes = [8, 32], strides = [1, 1]} : vector<16x384xf32> to vector<8x32xf32>
    %307 = vector.extract_strided_slice %303 {offsets = [0, 256], sizes = [8, 32], strides = [1, 1]} : vector<16x384xf32> to vector<8x32xf32>
    %308 = arith.truncf %305 : vector<8x32xf32> to vector<8x32xbf16>
    %309 = arith.truncf %306 : vector<8x32xf32> to vector<8x32xbf16>
    %cst_104 = arith.constant dense<0.000000e+00> : vector<8x8xf32>
    %310 = tpu.matmul %308, %309, %cst_104 {dimension_numbers = #tpu.dot_dimension_numbers<[1], [1], [0], [0], [0, 0, 1, 0], [], []>} : vector<8x32xbf16>, vector<8x32xbf16>, vector<8x8xf32> -> vector<8x8xf32>
    %311 = vector.broadcast %304 : vector<1x8xf32> to vector<8x8xf32>
    %312 = arith.addf %310, %311 : vector<8x8xf32>
    %cst_105 = arith.constant dense<0xFF800000> : vector<8xf32>
    %313 = vector.multi_reduction <maximumf>, %312, %cst_105 [1] : vector<8x8xf32> to vector<8xf32>
    %314 = vector.shape_cast %313 : vector<8xf32> to vector<8x1xf32>
    %315 = vector.broadcast %314 : vector<8x1xf32> to vector<8x8xf32>
    %316 = arith.subf %312, %315 : vector<8x8xf32>
    %317 = math.exp %316 : vector<8x8xf32>
    %cst_106 = arith.constant dense<0.000000e+00> : vector<8xf32>
    %318 = vector.multi_reduction <add>, %317, %cst_106 [1] : vector<8x8xf32> to vector<8xf32>
    %319 = vector.shape_cast %318 : vector<8xf32> to vector<8x1xf32>
    %320 = arith.truncf %317 : vector<8x8xf32> to vector<8x8xbf16>
    %321 = arith.truncf %307 : vector<8x32xf32> to vector<8x32xbf16>
    %cst_107 = arith.constant dense<0.000000e+00> : vector<8x32xf32>
    %322 = tpu.matmul %320, %321, %cst_107 {dimension_numbers = #tpu.dot_dimension_numbers<[1], [0], [0], [1], [0, 0, 1, 1], [], []>} : vector<8x8xbf16>, vector<8x32xbf16>, vector<8x32xf32> -> vector<8x32xf32>
    %323 = tpu.reciprocal %319 {approx = true} : vector<8x1xf32> -> vector<8x1xf32>
    %324 = vector.broadcast %323 : vector<8x1xf32> to vector<8x32xf32>
    %325 = arith.mulf %322, %324 : vector<8x32xf32>
    %c0_108 = arith.constant 0 : index
    %c0_109 = arith.constant 0 : index
    %326 = vector.load %arg34[%c0_108, %c0_109] : memref<16x128xf32, #tpu.memory_space<vmem>>, vector<8x32xf32>
    tpu.vector_store %arg34[%c0_108, %c0_109], %325 {strides = array<i32>} : memref<16x128xf32, #tpu.memory_space<vmem>>, vector<8x32xf32>,
    %327 = vector.extract_strided_slice %303 {offsets = [0, 32], sizes = [8, 32], strides = [1, 1]} : vector<16x384xf32> to vector<8x32xf32>
    %328 = vector.extract_strided_slice %303 {offsets = [0, 160], sizes = [8, 32], strides = [1, 1]} : vector<16x384xf32> to vector<8x32xf32>
    %329 = vector.extract_strided_slice %303 {offsets = [0, 288], sizes = [8, 32], strides = [1, 1]} : vector<16x384xf32> to vector<8x32xf32>
    %330 = arith.truncf %327 : vector<8x32xf32> to vector<8x32xbf16>
    %331 = arith.truncf %328 : vector<8x32xf32> to vector<8x32xbf16>
    %cst_110 = arith.constant dense<0.000000e+00> : vector<8x8xf32>
    %332 = tpu.matmul %330, %331, %cst_110 {dimension_numbers = #tpu.dot_dimension_numbers<[1], [1], [0], [0], [0, 0, 1, 0], [], []>} : vector<8x32xbf16>, vector<8x32xbf16>, vector<8x8xf32> -> vector<8x8xf32>
    %333 = vector.broadcast %304 : vector<1x8xf32> to vector<8x8xf32>
    %334 = arith.addf %332, %333 : vector<8x8xf32>
    %cst_111 = arith.constant dense<0xFF800000> : vector<8xf32>
    %335 = vector.multi_reduction <maximumf>, %334, %cst_111 [1] : vector<8x8xf32> to vector<8xf32>
    %336 = vector.shape_cast %335 : vector<8xf32> to vector<8x1xf32>
    %337 = vector.broadcast %336 : vector<8x1xf32> to vector<8x8xf32>
    %338 = arith.subf %334, %337 : vector<8x8xf32>
    %339 = math.exp %338 : vector<8x8xf32>
    %cst_112 = arith.constant dense<0.000000e+00> : vector<8xf32>
    %340 = vector.multi_reduction <add>, %339, %cst_112 [1] : vector<8x8xf32> to vector<8xf32>
    %341 = vector.shape_cast %340 : vector<8xf32> to vector<8x1xf32>
    %342 = arith.truncf %339 : vector<8x8xf32> to vector<8x8xbf16>
    %343 = arith.truncf %329 : vector<8x32xf32> to vector<8x32xbf16>
    %cst_113 = arith.constant dense<0.000000e+00> : vector<8x32xf32>
    %344 = tpu.matmul %342, %343, %cst_113 {dimension_numbers = #tpu.dot_dimension_numbers<[1], [0], [0], [1], [0, 0, 1, 1], [], []>} : vector<8x8xbf16>, vector<8x32xbf16>, vector<8x32xf32> -> vector<8x32xf32>
    %345 = tpu.reciprocal %341 {approx = true} : vector<8x1xf32> -> vector<8x1xf32>
    %346 = vector.broadcast %345 : vector<8x1xf32> to vector<8x32xf32>
    %347 = arith.mulf %344, %346 : vector<8x32xf32>
    %c0_114 = arith.constant 0 : index
    %c32_115 = arith.constant 32 : index
    %348 = vector.load %arg34[%c0_114, %c32_115] : memref<16x128xf32, #tpu.memory_space<vmem>>, vector<8x32xf32>
    tpu.vector_store %arg34[%c0_114, %c32_115], %347 {strides = array<i32>} : memref<16x128xf32, #tpu.memory_space<vmem>>, vector<8x32xf32>,
    %349 = vector.extract_strided_slice %303 {offsets = [0, 64], sizes = [8, 32], strides = [1, 1]} : vector<16x384xf32> to vector<8x32xf32>
    %350 = vector.extract_strided_slice %303 {offsets = [0, 192], sizes = [8, 32], strides = [1, 1]} : vector<16x384xf32> to vector<8x32xf32>
    %351 = vector.extract_strided_slice %303 {offsets = [0, 320], sizes = [8, 32], strides = [1, 1]} : vector<16x384xf32> to vector<8x32xf32>
    %352 = arith.truncf %349 : vector<8x32xf32> to vector<8x32xbf16>
    %353 = arith.truncf %350 : vector<8x32xf32> to vector<8x32xbf16>
    %cst_116 = arith.constant dense<0.000000e+00> : vector<8x8xf32>
    %354 = tpu.matmul %352, %353, %cst_116 {dimension_numbers = #tpu.dot_dimension_numbers<[1], [1], [0], [0], [0, 0, 1, 0], [], []>} : vector<8x32xbf16>, vector<8x32xbf16>, vector<8x8xf32> -> vector<8x8xf32>
    %355 = vector.broadcast %304 : vector<1x8xf32> to vector<8x8xf32>
    %356 = arith.addf %354, %355 : vector<8x8xf32>
    %cst_117 = arith.constant dense<0xFF800000> : vector<8xf32>
    %357 = vector.multi_reduction <maximumf>, %356, %cst_117 [1] : vector<8x8xf32> to vector<8xf32>
    %358 = vector.shape_cast %357 : vector<8xf32> to vector<8x1xf32>
    %359 = vector.broadcast %358 : vector<8x1xf32> to vector<8x8xf32>
    %360 = arith.subf %356, %359 : vector<8x8xf32>
    %361 = math.exp %360 : vector<8x8xf32>
    %cst_118 = arith.constant dense<0.000000e+00> : vector<8xf32>
    %362 = vector.multi_reduction <add>, %361, %cst_118 [1] : vector<8x8xf32> to vector<8xf32>
    %363 = vector.shape_cast %362 : vector<8xf32> to vector<8x1xf32>
    %364 = arith.truncf %361 : vector<8x8xf32> to vector<8x8xbf16>
    %365 = arith.truncf %351 : vector<8x32xf32> to vector<8x32xbf16>
    %cst_119 = arith.constant dense<0.000000e+00> : vector<8x32xf32>
    %366 = tpu.matmul %364, %365, %cst_119 {dimension_numbers = #tpu.dot_dimension_numbers<[1], [0], [0], [1], [0, 0, 1, 1], [], []>} : vector<8x8xbf16>, vector<8x32xbf16>, vector<8x32xf32> -> vector<8x32xf32>
    %367 = tpu.reciprocal %363 {approx = true} : vector<8x1xf32> -> vector<8x1xf32>
    %368 = vector.broadcast %367 : vector<8x1xf32> to vector<8x32xf32>
    %369 = arith.mulf %366, %368 : vector<8x32xf32>
    %c0_120 = arith.constant 0 : index
    %c64_121 = arith.constant 64 : index
    %370 = vector.load %arg34[%c0_120, %c64_121] : memref<16x128xf32, #tpu.memory_space<vmem>>, vector<8x32xf32>
    tpu.vector_store %arg34[%c0_120, %c64_121], %369 {strides = array<i32>} : memref<16x128xf32, #tpu.memory_space<vmem>>, vector<8x32xf32>,
    %371 = vector.extract_strided_slice %303 {offsets = [0, 96], sizes = [8, 32], strides = [1, 1]} : vector<16x384xf32> to vector<8x32xf32>
    %372 = vector.extract_strided_slice %303 {offsets = [0, 224], sizes = [8, 32], strides = [1, 1]} : vector<16x384xf32> to vector<8x32xf32>
    %373 = vector.extract_strided_slice %303 {offsets = [0, 352], sizes = [8, 32], strides = [1, 1]} : vector<16x384xf32> to vector<8x32xf32>
    %374 = arith.truncf %371 : vector<8x32xf32> to vector<8x32xbf16>
    %375 = arith.truncf %372 : vector<8x32xf32> to vector<8x32xbf16>
    %cst_122 = arith.constant dense<0.000000e+00> : vector<8x8xf32>
    %376 = tpu.matmul %374, %375, %cst_122 {dimension_numbers = #tpu.dot_dimension_numbers<[1], [1], [0], [0], [0, 0, 1, 0], [], []>} : vector<8x32xbf16>, vector<8x32xbf16>, vector<8x8xf32> -> vector<8x8xf32>
    %377 = vector.broadcast %304 : vector<1x8xf32> to vector<8x8xf32>
    %378 = arith.addf %376, %377 : vector<8x8xf32>
    %cst_123 = arith.constant dense<0xFF800000> : vector<8xf32>
    %379 = vector.multi_reduction <maximumf>, %378, %cst_123 [1] : vector<8x8xf32> to vector<8xf32>
    %380 = vector.shape_cast %379 : vector<8xf32> to vector<8x1xf32>
    %381 = vector.broadcast %380 : vector<8x1xf32> to vector<8x8xf32>
    %382 = arith.subf %378, %381 : vector<8x8xf32>
    %383 = math.exp %382 : vector<8x8xf32>
    %cst_124 = arith.constant dense<0.000000e+00> : vector<8xf32>
    %384 = vector.multi_reduction <add>, %383, %cst_124 [1] : vector<8x8xf32> to vector<8xf32>
    %385 = vector.shape_cast %384 : vector<8xf32> to vector<8x1xf32>
    %386 = arith.truncf %383 : vector<8x8xf32> to vector<8x8xbf16>
    %387 = arith.truncf %373 : vector<8x32xf32> to vector<8x32xbf16>
    %cst_125 = arith.constant dense<0.000000e+00> : vector<8x32xf32>
    %388 = tpu.matmul %386, %387, %cst_125 {dimension_numbers = #tpu.dot_dimension_numbers<[1], [0], [0], [1], [0, 0, 1, 1], [], []>} : vector<8x8xbf16>, vector<8x32xbf16>, vector<8x32xf32> -> vector<8x32xf32>
    %389 = tpu.reciprocal %385 {approx = true} : vector<8x1xf32> -> vector<8x1xf32>
    %390 = vector.broadcast %389 : vector<8x1xf32> to vector<8x32xf32>
    %391 = arith.mulf %388, %390 : vector<8x32xf32>
    %c0_126 = arith.constant 0 : index
    %c96_127 = arith.constant 96 : index
    %392 = vector.load %arg34[%c0_126, %c96_127] : memref<16x128xf32, #tpu.memory_space<vmem>>, vector<8x32xf32>
    tpu.vector_store %arg34[%c0_126, %c96_127], %391 {strides = array<i32>} : memref<16x128xf32, #tpu.memory_space<vmem>>, vector<8x32xf32>,
    %393 = vector.extract_strided_slice %27 {offsets = [1, 0], sizes = [1, 8], strides = [1, 1]} : vector<2x8xf32> to vector<1x8xf32>
    %394 = vector.extract_strided_slice %303 {offsets = [8, 0], sizes = [8, 32], strides = [1, 1]} : vector<16x384xf32> to vector<8x32xf32>
    %395 = vector.extract_strided_slice %303 {offsets = [8, 128], sizes = [8, 32], strides = [1, 1]} : vector<16x384xf32> to vector<8x32xf32>
    %396 = vector.extract_strided_slice %303 {offsets = [8, 256], sizes = [8, 32], strides = [1, 1]} : vector<16x384xf32> to vector<8x32xf32>
    %397 = arith.truncf %394 : vector<8x32xf32> to vector<8x32xbf16>
    %398 = arith.truncf %395 : vector<8x32xf32> to vector<8x32xbf16>
    %cst_128 = arith.constant dense<0.000000e+00> : vector<8x8xf32>
    %399 = tpu.matmul %397, %398, %cst_128 {dimension_numbers = #tpu.dot_dimension_numbers<[1], [1], [0], [0], [0, 0, 1, 0], [], []>} : vector<8x32xbf16>, vector<8x32xbf16>, vector<8x8xf32> -> vector<8x8xf32>
    %400 = vector.broadcast %393 : vector<1x8xf32> to vector<8x8xf32>
    %401 = arith.addf %399, %400 : vector<8x8xf32>
    %cst_129 = arith.constant dense<0xFF800000> : vector<8xf32>
    %402 = vector.multi_reduction <maximumf>, %401, %cst_129 [1] : vector<8x8xf32> to vector<8xf32>
    %403 = vector.shape_cast %402 : vector<8xf32> to vector<8x1xf32>
    %404 = vector.broadcast %403 : vector<8x1xf32> to vector<8x8xf32>
    %405 = arith.subf %401, %404 : vector<8x8xf32>
    %406 = math.exp %405 : vector<8x8xf32>
    %cst_130 = arith.constant dense<0.000000e+00> : vector<8xf32>
    %407 = vector.multi_reduction <add>, %406, %cst_130 [1] : vector<8x8xf32> to vector<8xf32>
    %408 = vector.shape_cast %407 : vector<8xf32> to vector<8x1xf32>
    %409 = arith.truncf %406 : vector<8x8xf32> to vector<8x8xbf16>
    %410 = arith.truncf %396 : vector<8x32xf32> to vector<8x32xbf16>
    %cst_131 = arith.constant dense<0.000000e+00> : vector<8x32xf32>
    %411 = tpu.matmul %409, %410, %cst_131 {dimension_numbers = #tpu.dot_dimension_numbers<[1], [0], [0], [1], [0, 0, 1, 1], [], []>} : vector<8x8xbf16>, vector<8x32xbf16>, vector<8x32xf32> -> vector<8x32xf32>
    %412 = tpu.reciprocal %408 {approx = true} : vector<8x1xf32> -> vector<8x1xf32>
    %413 = vector.broadcast %412 : vector<8x1xf32> to vector<8x32xf32>
    %414 = arith.mulf %411, %413 : vector<8x32xf32>
    %c8_132 = arith.constant 8 : index
    %c0_133 = arith.constant 0 : index
    %415 = vector.load %arg34[%c8_132, %c0_133] : memref<16x128xf32, #tpu.memory_space<vmem>>, vector<8x32xf32>
    tpu.vector_store %arg34[%c8_132, %c0_133], %414 {strides = array<i32>} : memref<16x128xf32, #tpu.memory_space<vmem>>, vector<8x32xf32>,
    %416 = vector.extract_strided_slice %303 {offsets = [8, 32], sizes = [8, 32], strides = [1, 1]} : vector<16x384xf32> to vector<8x32xf32>
    %417 = vector.extract_strided_slice %303 {offsets = [8, 160], sizes = [8, 32], strides = [1, 1]} : vector<16x384xf32> to vector<8x32xf32>
    %418 = vector.extract_strided_slice %303 {offsets = [8, 288], sizes = [8, 32], strides = [1, 1]} : vector<16x384xf32> to vector<8x32xf32>
    %419 = arith.truncf %416 : vector<8x32xf32> to vector<8x32xbf16>
    %420 = arith.truncf %417 : vector<8x32xf32> to vector<8x32xbf16>
    %cst_134 = arith.constant dense<0.000000e+00> : vector<8x8xf32>
    %421 = tpu.matmul %419, %420, %cst_134 {dimension_numbers = #tpu.dot_dimension_numbers<[1], [1], [0], [0], [0, 0, 1, 0], [], []>} : vector<8x32xbf16>, vector<8x32xbf16>, vector<8x8xf32> -> vector<8x8xf32>
    %422 = vector.broadcast %393 : vector<1x8xf32> to vector<8x8xf32>
    %423 = arith.addf %421, %422 : vector<8x8xf32>
    %cst_135 = arith.constant dense<0xFF800000> : vector<8xf32>
    %424 = vector.multi_reduction <maximumf>, %423, %cst_135 [1] : vector<8x8xf32> to vector<8xf32>
    %425 = vector.shape_cast %424 : vector<8xf32> to vector<8x1xf32>
    %426 = vector.broadcast %425 : vector<8x1xf32> to vector<8x8xf32>
    %427 = arith.subf %423, %426 : vector<8x8xf32>
    %428 = math.exp %427 : vector<8x8xf32>
    %cst_136 = arith.constant dense<0.000000e+00> : vector<8xf32>
    %429 = vector.multi_reduction <add>, %428, %cst_136 [1] : vector<8x8xf32> to vector<8xf32>
    %430 = vector.shape_cast %429 : vector<8xf32> to vector<8x1xf32>
    %431 = arith.truncf %428 : vector<8x8xf32> to vector<8x8xbf16>
    %432 = arith.truncf %418 : vector<8x32xf32> to vector<8x32xbf16>
    %cst_137 = arith.constant dense<0.000000e+00> : vector<8x32xf32>
    %433 = tpu.matmul %431, %432, %cst_137 {dimension_numbers = #tpu.dot_dimension_numbers<[1], [0], [0], [1], [0, 0, 1, 1], [], []>} : vector<8x8xbf16>, vector<8x32xbf16>, vector<8x32xf32> -> vector<8x32xf32>
    %434 = tpu.reciprocal %430 {approx = true} : vector<8x1xf32> -> vector<8x1xf32>
    %435 = vector.broadcast %434 : vector<8x1xf32> to vector<8x32xf32>
    %436 = arith.mulf %433, %435 : vector<8x32xf32>
    %c8_138 = arith.constant 8 : index
    %c32_139 = arith.constant 32 : index
    %437 = vector.load %arg34[%c8_138, %c32_139] : memref<16x128xf32, #tpu.memory_space<vmem>>, vector<8x32xf32>
    tpu.vector_store %arg34[%c8_138, %c32_139], %436 {strides = array<i32>} : memref<16x128xf32, #tpu.memory_space<vmem>>, vector<8x32xf32>,
    %438 = vector.extract_strided_slice %303 {offsets = [8, 64], sizes = [8, 32], strides = [1, 1]} : vector<16x384xf32> to vector<8x32xf32>
    %439 = vector.extract_strided_slice %303 {offsets = [8, 192], sizes = [8, 32], strides = [1, 1]} : vector<16x384xf32> to vector<8x32xf32>
    %440 = vector.extract_strided_slice %303 {offsets = [8, 320], sizes = [8, 32], strides = [1, 1]} : vector<16x384xf32> to vector<8x32xf32>
    %441 = arith.truncf %438 : vector<8x32xf32> to vector<8x32xbf16>
    %442 = arith.truncf %439 : vector<8x32xf32> to vector<8x32xbf16>
    %cst_140 = arith.constant dense<0.000000e+00> : vector<8x8xf32>
    %443 = tpu.matmul %441, %442, %cst_140 {dimension_numbers = #tpu.dot_dimension_numbers<[1], [1], [0], [0], [0, 0, 1, 0], [], []>} : vector<8x32xbf16>, vector<8x32xbf16>, vector<8x8xf32> -> vector<8x8xf32>
    %444 = vector.broadcast %393 : vector<1x8xf32> to vector<8x8xf32>
    %445 = arith.addf %443, %444 : vector<8x8xf32>
    %cst_141 = arith.constant dense<0xFF800000> : vector<8xf32>
    %446 = vector.multi_reduction <maximumf>, %445, %cst_141 [1] : vector<8x8xf32> to vector<8xf32>
    %447 = vector.shape_cast %446 : vector<8xf32> to vector<8x1xf32>
    %448 = vector.broadcast %447 : vector<8x1xf32> to vector<8x8xf32>
    %449 = arith.subf %445, %448 : vector<8x8xf32>
    %450 = math.exp %449 : vector<8x8xf32>
    %cst_142 = arith.constant dense<0.000000e+00> : vector<8xf32>
    %451 = vector.multi_reduction <add>, %450, %cst_142 [1] : vector<8x8xf32> to vector<8xf32>
    %452 = vector.shape_cast %451 : vector<8xf32> to vector<8x1xf32>
    %453 = arith.truncf %450 : vector<8x8xf32> to vector<8x8xbf16>
    %454 = arith.truncf %440 : vector<8x32xf32> to vector<8x32xbf16>
    %cst_143 = arith.constant dense<0.000000e+00> : vector<8x32xf32>
    %455 = tpu.matmul %453, %454, %cst_143 {dimension_numbers = #tpu.dot_dimension_numbers<[1], [0], [0], [1], [0, 0, 1, 1], [], []>} : vector<8x8xbf16>, vector<8x32xbf16>, vector<8x32xf32> -> vector<8x32xf32>
    %456 = tpu.reciprocal %452 {approx = true} : vector<8x1xf32> -> vector<8x1xf32>
    %457 = vector.broadcast %456 : vector<8x1xf32> to vector<8x32xf32>
    %458 = arith.mulf %455, %457 : vector<8x32xf32>
    %c8_144 = arith.constant 8 : index
    %c64_145 = arith.constant 64 : index
    %459 = vector.load %arg34[%c8_144, %c64_145] : memref<16x128xf32, #tpu.memory_space<vmem>>, vector<8x32xf32>
    tpu.vector_store %arg34[%c8_144, %c64_145], %458 {strides = array<i32>} : memref<16x128xf32, #tpu.memory_space<vmem>>, vector<8x32xf32>,
    %460 = vector.extract_strided_slice %303 {offsets = [8, 96], sizes = [8, 32], strides = [1, 1]} : vector<16x384xf32> to vector<8x32xf32>
    %461 = vector.extract_strided_slice %303 {offsets = [8, 224], sizes = [8, 32], strides = [1, 1]} : vector<16x384xf32> to vector<8x32xf32>
    %462 = vector.extract_strided_slice %303 {offsets = [8, 352], sizes = [8, 32], strides = [1, 1]} : vector<16x384xf32> to vector<8x32xf32>
    %463 = arith.truncf %460 : vector<8x32xf32> to vector<8x32xbf16>
    %464 = arith.truncf %461 : vector<8x32xf32> to vector<8x32xbf16>
    %cst_146 = arith.constant dense<0.000000e+00> : vector<8x8xf32>
    %465 = tpu.matmul %463, %464, %cst_146 {dimension_numbers = #tpu.dot_dimension_numbers<[1], [1], [0], [0], [0, 0, 1, 0], [], []>} : vector<8x32xbf16>, vector<8x32xbf16>, vector<8x8xf32> -> vector<8x8xf32>
    %466 = vector.broadcast %393 : vector<1x8xf32> to vector<8x8xf32>
    %467 = arith.addf %465, %466 : vector<8x8xf32>
    %cst_147 = arith.constant dense<0xFF800000> : vector<8xf32>
    %468 = vector.multi_reduction <maximumf>, %467, %cst_147 [1] : vector<8x8xf32> to vector<8xf32>
    %469 = vector.shape_cast %468 : vector<8xf32> to vector<8x1xf32>
    %470 = vector.broadcast %469 : vector<8x1xf32> to vector<8x8xf32>
    %471 = arith.subf %467, %470 : vector<8x8xf32>
    %472 = math.exp %471 : vector<8x8xf32>
    %cst_148 = arith.constant dense<0.000000e+00> : vector<8xf32>
    %473 = vector.multi_reduction <add>, %472, %cst_148 [1] : vector<8x8xf32> to vector<8xf32>
    %474 = vector.shape_cast %473 : vector<8xf32> to vector<8x1xf32>
    %475 = arith.truncf %472 : vector<8x8xf32> to vector<8x8xbf16>
    %476 = arith.truncf %462 : vector<8x32xf32> to vector<8x32xbf16>
    %cst_149 = arith.constant dense<0.000000e+00> : vector<8x32xf32>
    %477 = tpu.matmul %475, %476, %cst_149 {dimension_numbers = #tpu.dot_dimension_numbers<[1], [0], [0], [1], [0, 0, 1, 1], [], []>} : vector<8x8xbf16>, vector<8x32xbf16>, vector<8x32xf32> -> vector<8x32xf32>
    %478 = tpu.reciprocal %474 {approx = true} : vector<8x1xf32> -> vector<8x1xf32>
    %479 = vector.broadcast %478 : vector<8x1xf32> to vector<8x32xf32>
    %480 = arith.mulf %477, %479 : vector<8x32xf32>
    %c8_150 = arith.constant 8 : index
    %c96_151 = arith.constant 96 : index
    %481 = vector.load %arg34[%c8_150, %c96_151] : memref<16x128xf32, #tpu.memory_space<vmem>>, vector<8x32xf32>
    tpu.vector_store %arg34[%c8_150, %c96_151], %480 {strides = array<i32>} : memref<16x128xf32, #tpu.memory_space<vmem>>, vector<8x32xf32>,
    %c0_152 = arith.constant 0 : index
    %c0_153 = arith.constant 0 : index
    %482 = vector.load %arg34[%c0_152, %c0_153] : memref<16x128xf32, #tpu.memory_space<vmem>>, vector<16x128xf32>
    %483 = arith.truncf %482 : vector<16x128xf32> to vector<16x128xbf16>
    %c0_154 = arith.constant 0 : index
    %c0_155 = arith.constant 0 : index
    %484 = vector.load %arg19[%c0_154, %c0_155] : memref<128x128xbf16, #tpu.memory_space<vmem>>, vector<128x128xbf16>
    %cst_156 = arith.constant dense<0.000000e+00> : vector<16x128xf32>
    %485 = tpu.matmul %483, %484, %cst_156 {dimension_numbers = #tpu.dot_dimension_numbers<[1], [0], [0], [1], [0, 0, 1, 1], [], []>} : vector<16x128xbf16>, vector<128x128xbf16>, vector<16x128xf32> -> vector<16x128xf32>
    %c0_157 = arith.constant 0 : index
    %c0_158 = arith.constant 0 : index
    %486 = vector.load %arg20[%c0_157, %c0_158] : memref<1x128xf32, #tpu.memory_space<vmem>>, vector<1x128xf32>
    %487 = vector.broadcast %486 : vector<1x128xf32> to vector<16x128xf32>
    %488 = arith.addf %485, %487 : vector<16x128xf32>
    %489 = arith.addf %297, %488 : vector<16x128xf32>
    %cst_159 = arith.constant dense<0.000000e+00> : vector<16xf32>
    %490 = vector.multi_reduction <add>, %489, %cst_159 [1] : vector<16x128xf32> to vector<16xf32>
    %491 = vector.shape_cast %490 : vector<16xf32> to vector<16x1xf32>
    %cst_160 = arith.constant 1.280000e+02 : f32
    %492 = vector.broadcast %cst_160 : f32 to vector<16x1xf32>
    %493 = arith.divf %491, %492 : vector<16x1xf32>
    %494 = vector.broadcast %493 : vector<16x1xf32> to vector<16x128xf32>
    %495 = arith.subf %489, %494 : vector<16x128xf32>
    %496 = vector.broadcast %493 : vector<16x1xf32> to vector<16x128xf32>
    %497 = arith.subf %489, %496 : vector<16x128xf32>
    %498 = arith.mulf %495, %497 : vector<16x128xf32>
    %cst_161 = arith.constant dense<0.000000e+00> : vector<16xf32>
    %499 = vector.multi_reduction <add>, %498, %cst_161 [1] : vector<16x128xf32> to vector<16xf32>
    %500 = vector.shape_cast %499 : vector<16xf32> to vector<16x1xf32>
    %cst_162 = arith.constant 1.280000e+02 : f32
    %501 = vector.broadcast %cst_162 : f32 to vector<16x1xf32>
    %502 = arith.divf %500, %501 : vector<16x1xf32>
    %503 = vector.broadcast %493 : vector<16x1xf32> to vector<16x128xf32>
    %504 = arith.subf %489, %503 : vector<16x128xf32>
    %cst_163 = arith.constant 9.99999974E-6 : f32
    %505 = vector.broadcast %cst_163 : f32 to vector<16x1xf32>
    %506 = arith.addf %502, %505 : vector<16x1xf32>
    %507 = math.rsqrt %506 : vector<16x1xf32>
    %508 = vector.broadcast %507 : vector<16x1xf32> to vector<16x128xf32>
    %509 = arith.mulf %504, %508 : vector<16x128xf32>
    %c0_164 = arith.constant 0 : index
    %c0_165 = arith.constant 0 : index
    %510 = vector.load %arg21[%c0_164, %c0_165] : memref<1x128xf32, #tpu.memory_space<vmem>>, vector<1x128xf32>
    %511 = vector.broadcast %510 : vector<1x128xf32> to vector<16x128xf32>
    %512 = arith.mulf %509, %511 : vector<16x128xf32>
    %c0_166 = arith.constant 0 : index
    %c0_167 = arith.constant 0 : index
    %513 = vector.load %arg22[%c0_166, %c0_167] : memref<1x128xf32, #tpu.memory_space<vmem>>, vector<1x128xf32>
    %514 = vector.broadcast %513 : vector<1x128xf32> to vector<16x128xf32>
    %515 = arith.addf %512, %514 : vector<16x128xf32>
    %516 = arith.truncf %515 : vector<16x128xf32> to vector<16x128xbf16>
    %c0_168 = arith.constant 0 : index
    %c0_169 = arith.constant 0 : index
    %517 = vector.load %arg23[%c0_168, %c0_169] : memref<128x256xbf16, #tpu.memory_space<vmem>>, vector<128x256xbf16>
    %cst_170 = arith.constant dense<0.000000e+00> : vector<16x256xf32>
    %518 = tpu.matmul %516, %517, %cst_170 {dimension_numbers = #tpu.dot_dimension_numbers<[1], [0], [0], [1], [0, 0, 1, 1], [], []>} : vector<16x128xbf16>, vector<128x256xbf16>, vector<16x256xf32> -> vector<16x256xf32>
    %c0_171 = arith.constant 0 : index
    %c0_172 = arith.constant 0 : index
    %519 = vector.load %arg24[%c0_171, %c0_172] : memref<1x256xf32, #tpu.memory_space<vmem>>, vector<1x256xf32>
    %520 = vector.broadcast %519 : vector<1x256xf32> to vector<16x256xf32>
    %521 = arith.addf %518, %520 : vector<16x256xf32>
    %522 = arith.mulf %521, %521 : vector<16x256xf32>
    %523 = arith.mulf %521, %522 : vector<16x256xf32>
    %cst_173 = arith.constant 4.471500e-02 : f32
    %524 = vector.broadcast %cst_173 : f32 to vector<16x256xf32>
    %525 = arith.mulf %524, %523 : vector<16x256xf32>
    %526 = arith.addf %521, %525 : vector<16x256xf32>
    %cst_174 = arith.constant 0.797884583 : f32
    %527 = vector.broadcast %cst_174 : f32 to vector<16x256xf32>
    %528 = arith.mulf %527, %526 : vector<16x256xf32>
    %529 = math.tanh %528 : vector<16x256xf32>
    %cst_175 = arith.constant 1.000000e+00 : f32
    %530 = vector.broadcast %cst_175 : f32 to vector<16x256xf32>
    %531 = arith.addf %530, %529 : vector<16x256xf32>
    %cst_176 = arith.constant 5.000000e-01 : f32
    %532 = vector.broadcast %cst_176 : f32 to vector<16x256xf32>
    %533 = arith.mulf %532, %531 : vector<16x256xf32>
    %534 = arith.mulf %521, %533 : vector<16x256xf32>
    %535 = arith.truncf %534 : vector<16x256xf32> to vector<16x256xbf16>
    %c0_177 = arith.constant 0 : index
    %c0_178 = arith.constant 0 : index
    %536 = vector.load %arg25[%c0_177, %c0_178] : memref<256x128xbf16, #tpu.memory_space<vmem>>, vector<256x128xbf16>
    %cst_179 = arith.constant dense<0.000000e+00> : vector<16x128xf32>
    %537 = tpu.matmul %535, %536, %cst_179 {dimension_numbers = #tpu.dot_dimension_numbers<[1], [0], [0], [1], [0, 0, 1, 1], [], []>} : vector<16x256xbf16>, vector<256x128xbf16>, vector<16x128xf32> -> vector<16x128xf32>
    %c0_180 = arith.constant 0 : index
    %c0_181 = arith.constant 0 : index
    %538 = vector.load %arg26[%c0_180, %c0_181] : memref<1x128xf32, #tpu.memory_space<vmem>>, vector<1x128xf32>
    %539 = vector.broadcast %538 : vector<1x128xf32> to vector<16x128xf32>
    %540 = arith.addf %537, %539 : vector<16x128xf32>
    %541 = arith.addf %515, %540 : vector<16x128xf32>
    %cst_182 = arith.constant dense<0.000000e+00> : vector<16xf32>
    %542 = vector.multi_reduction <add>, %541, %cst_182 [1] : vector<16x128xf32> to vector<16xf32>
    %543 = vector.shape_cast %542 : vector<16xf32> to vector<16x1xf32>
    %cst_183 = arith.constant 1.280000e+02 : f32
    %544 = vector.broadcast %cst_183 : f32 to vector<16x1xf32>
    %545 = arith.divf %543, %544 : vector<16x1xf32>
    %546 = vector.broadcast %545 : vector<16x1xf32> to vector<16x128xf32>
    %547 = arith.subf %541, %546 : vector<16x128xf32>
    %548 = vector.broadcast %545 : vector<16x1xf32> to vector<16x128xf32>
    %549 = arith.subf %541, %548 : vector<16x128xf32>
    %550 = arith.mulf %547, %549 : vector<16x128xf32>
    %cst_184 = arith.constant dense<0.000000e+00> : vector<16xf32>
    %551 = vector.multi_reduction <add>, %550, %cst_184 [1] : vector<16x128xf32> to vector<16xf32>
    %552 = vector.shape_cast %551 : vector<16xf32> to vector<16x1xf32>
    %cst_185 = arith.constant 1.280000e+02 : f32
    %553 = vector.broadcast %cst_185 : f32 to vector<16x1xf32>
    %554 = arith.divf %552, %553 : vector<16x1xf32>
    %555 = vector.broadcast %545 : vector<16x1xf32> to vector<16x128xf32>
    %556 = arith.subf %541, %555 : vector<16x128xf32>
    %cst_186 = arith.constant 9.99999974E-6 : f32
    %557 = vector.broadcast %cst_186 : f32 to vector<16x1xf32>
    %558 = arith.addf %554, %557 : vector<16x1xf32>
    %559 = math.rsqrt %558 : vector<16x1xf32>
    %560 = vector.broadcast %559 : vector<16x1xf32> to vector<16x128xf32>
    %561 = arith.mulf %556, %560 : vector<16x128xf32>
    %c0_187 = arith.constant 0 : index
    %c0_188 = arith.constant 0 : index
    %562 = vector.load %arg27[%c0_187, %c0_188] : memref<1x128xf32, #tpu.memory_space<vmem>>, vector<1x128xf32>
    %563 = vector.broadcast %562 : vector<1x128xf32> to vector<16x128xf32>
    %564 = arith.mulf %561, %563 : vector<16x128xf32>
    %c0_189 = arith.constant 0 : index
    %c0_190 = arith.constant 0 : index
    %565 = vector.load %arg28[%c0_189, %c0_190] : memref<1x128xf32, #tpu.memory_space<vmem>>, vector<1x128xf32>
    %566 = vector.broadcast %565 : vector<1x128xf32> to vector<16x128xf32>
    %567 = arith.addf %564, %566 : vector<16x128xf32>
    %568 = arith.truncf %567 : vector<16x128xf32> to vector<16x128xbf16>
    %c0_191 = arith.constant 0 : index
    %c0_192 = arith.constant 0 : index
    %569 = vector.load %arg29[%c0_191, %c0_192] : memref<128x128xbf16, #tpu.memory_space<vmem>>, vector<128x128xbf16>
    %cst_193 = arith.constant dense<0.000000e+00> : vector<16x128xf32>
    %570 = tpu.matmul %568, %569, %cst_193 {dimension_numbers = #tpu.dot_dimension_numbers<[1], [0], [0], [1], [0, 0, 1, 1], [], []>} : vector<16x128xbf16>, vector<128x128xbf16>, vector<16x128xf32> -> vector<16x128xf32>
    %c0_194 = arith.constant 0 : index
    %c0_195 = arith.constant 0 : index
    %571 = vector.load %arg30[%c0_194, %c0_195] : memref<1x128xf32, #tpu.memory_space<vmem>>, vector<1x128xf32>
    %572 = vector.broadcast %571 : vector<1x128xf32> to vector<16x128xf32>
    %573 = arith.addf %570, %572 : vector<16x128xf32>
    %cst_196 = arith.constant 0.000000e+00 : f32
    %574 = vector.broadcast %cst_196 : f32 to vector<16x128xf32>
    %575 = arith.maximumf %573, %574 : vector<16x128xf32>
    %576 = arith.truncf %575 : vector<16x128xf32> to vector<16x128xbf16>
    %c0_197 = arith.constant 0 : index
    %c0_198 = arith.constant 0 : index
    %577 = vector.load %arg31[%c0_197, %c0_198] : memref<128x128xbf16, #tpu.memory_space<vmem>>, vector<128x128xbf16>
    %cst_199 = arith.constant dense<0.000000e+00> : vector<16x128xf32>
    %578 = tpu.matmul %576, %577, %cst_199 {dimension_numbers = #tpu.dot_dimension_numbers<[1], [0], [0], [1], [0, 0, 1, 1], [], []>} : vector<16x128xbf16>, vector<128x128xbf16>, vector<16x128xf32> -> vector<16x128xf32>
    %c0_200 = arith.constant 0 : index
    %c0_201 = arith.constant 0 : index
    %579 = vector.load %arg32[%c0_200, %c0_201] : memref<1x128xf32, #tpu.memory_space<vmem>>, vector<1x128xf32>
    %580 = vector.broadcast %579 : vector<1x128xf32> to vector<16x128xf32>
    %581 = arith.addf %578, %580 : vector<16x128xf32>
    %c0_202 = arith.constant 0 : index
    %c0_203 = arith.constant 0 : index
    %582 = vector.load %arg33[%c0_202, %c0_203] : memref<16x128xf32, #tpu.memory_space<vmem>>, vector<16x128xf32>
    tpu.vector_store %arg33[%c0_202, %c0_203], %581 {strides = array<i32>} : memref<16x128xf32, #tpu.memory_space<vmem>>, vector<16x128xf32>,
    return
  }
  func.func @transform_0(%arg0: i32) -> (i32, i32) {
    %c0_i32 = arith.constant 0 : i32
    %c0_i32_0 = arith.constant 0 : i32
    %c0_i32_1 = arith.constant 0 : i32
    return %c0_i32, %c0_i32_0 : i32, i32
  }
  func.func @transform_1(%arg0: i32) -> (i32, i32) {
    %c0_i32 = arith.constant 0 : i32
    %c0_i32_0 = arith.constant 0 : i32
    %c0_i32_1 = arith.constant 0 : i32
    return %c0_i32, %c0_i32_0 : i32, i32
  }
  func.func @transform_2(%arg0: i32) -> (i32, i32) {
    %c0_i32 = arith.constant 0 : i32
    %c0_i32_0 = arith.constant 0 : i32
    %c0_i32_1 = arith.constant 0 : i32
    return %c0_i32, %c0_i32_0 : i32, i32
  }
  func.func @transform_3(%arg0: i32) -> (i32, i32) {
    %c0_i32 = arith.constant 0 : i32
    %c0_i32_0 = arith.constant 0 : i32
    %c0_i32_1 = arith.constant 0 : i32
    return %c0_i32, %c0_i32_0 : i32, i32
  }
  func.func @transform_4(%arg0: i32) -> (i32, i32) {
    %c0_i32 = arith.constant 0 : i32
    %c0_i32_0 = arith.constant 0 : i32
    %c0_i32_1 = arith.constant 0 : i32
    return %c0_i32, %c0_i32_0 : i32, i32
  }
  func.func @transform_5(%arg0: i32) -> (i32, i32) {
    %c0_i32 = arith.constant 0 : i32
    %c0_i32_0 = arith.constant 0 : i32
    %c0_i32_1 = arith.constant 0 : i32
    return %c0_i32, %c0_i32_0 : i32, i32
  }
  func.func @transform_6(%arg0: i32) -> (i32, i32) {
    %c0_i32 = arith.constant 0 : i32
    %c0_i32_0 = arith.constant 0 : i32
    %c0_i32_1 = arith.constant 0 : i32
    return %c0_i32, %c0_i32_0 : i32, i32
  }
  func.func @transform_7(%arg0: i32) -> (i32, i32) {
    %c0_i32 = arith.constant 0 : i32
    %c0_i32_0 = arith.constant 0 : i32
    %c0_i32_1 = arith.constant 0 : i32
    return %c0_i32, %c0_i32_0 : i32, i32
  }
  func.func @transform_8(%arg0: i32) -> (i32, i32) {
    %c0_i32 = arith.constant 0 : i32
    %c0_i32_0 = arith.constant 0 : i32
    %c0_i32_1 = arith.constant 0 : i32
    return %c0_i32, %c0_i32_0 : i32, i32
  }
  func.func @transform_9(%arg0: i32) -> (i32, i32) {
    %c0_i32 = arith.constant 0 : i32
    %c0_i32_0 = arith.constant 0 : i32
    %c0_i32_1 = arith.constant 0 : i32
    return %c0_i32, %c0_i32_0 : i32, i32
  }
  func.func @transform_10(%arg0: i32) -> (i32, i32) {
    %c0_i32 = arith.constant 0 : i32
    %c0_i32_0 = arith.constant 0 : i32
    %c0_i32_1 = arith.constant 0 : i32
    return %c0_i32, %c0_i32_0 : i32, i32
  }
  func.func @transform_11(%arg0: i32) -> (i32, i32) {
    %c0_i32 = arith.constant 0 : i32
    %c0_i32_0 = arith.constant 0 : i32
    %c0_i32_1 = arith.constant 0 : i32
    return %c0_i32, %c0_i32_0 : i32, i32
  }
  func.func @transform_12(%arg0: i32) -> (i32, i32) {
    %c0_i32 = arith.constant 0 : i32
    %c0_i32_0 = arith.constant 0 : i32
    %c0_i32_1 = arith.constant 0 : i32
    return %c0_i32, %c0_i32_0 : i32, i32
  }
  func.func @transform_13(%arg0: i32) -> (i32, i32) {
    %c0_i32 = arith.constant 0 : i32
    %c0_i32_0 = arith.constant 0 : i32
    %c0_i32_1 = arith.constant 0 : i32
    return %c0_i32, %c0_i32_0 : i32, i32
  }
  func.func @transform_14(%arg0: i32) -> (i32, i32) {
    %c0_i32 = arith.constant 0 : i32
    %c0_i32_0 = arith.constant 0 : i32
    %c0_i32_1 = arith.constant 0 : i32
    return %c0_i32, %c0_i32_0 : i32, i32
  }
  func.func @transform_15(%arg0: i32) -> (i32, i32) {
    %c0_i32 = arith.constant 0 : i32
    %c0_i32_0 = arith.constant 0 : i32
    %c0_i32_1 = arith.constant 0 : i32
    return %c0_i32, %c0_i32_0 : i32, i32
  }
  func.func @transform_16(%arg0: i32) -> (i32, i32) {
    %c0_i32 = arith.constant 0 : i32
    %c0_i32_0 = arith.constant 0 : i32
    %c0_i32_1 = arith.constant 0 : i32
    return %c0_i32, %c0_i32_0 : i32, i32
  }
  func.func @transform_17(%arg0: i32) -> (i32, i32) {
    %c0_i32 = arith.constant 0 : i32
    %c0_i32_0 = arith.constant 0 : i32
    %c0_i32_1 = arith.constant 0 : i32
    return %c0_i32, %c0_i32_0 : i32, i32
  }
  func.func @transform_18(%arg0: i32) -> (i32, i32) {
    %c0_i32 = arith.constant 0 : i32
    %c0_i32_0 = arith.constant 0 : i32
    %c0_i32_1 = arith.constant 0 : i32
    return %c0_i32, %c0_i32_0 : i32, i32
  }
  func.func @transform_19(%arg0: i32) -> (i32, i32) {
    %c0_i32 = arith.constant 0 : i32
    %c0_i32_0 = arith.constant 0 : i32
    %c0_i32_1 = arith.constant 0 : i32
    return %c0_i32, %c0_i32_0 : i32, i32
  }
  func.func @transform_20(%arg0: i32) -> (i32, i32) {
    %c0_i32 = arith.constant 0 : i32
    %c0_i32_0 = arith.constant 0 : i32
    %c0_i32_1 = arith.constant 0 : i32
    return %c0_i32, %c0_i32_0 : i32, i32
  }
  func.func @transform_21(%arg0: i32) -> (i32, i32) {
    %c0_i32 = arith.constant 0 : i32
    %c0_i32_0 = arith.constant 0 : i32
    %c0_i32_1 = arith.constant 0 : i32
    return %c0_i32, %c0_i32_0 : i32, i32
  }
  func.func @transform_22(%arg0: i32) -> (i32, i32) {
    %c0_i32 = arith.constant 0 : i32
    %c0_i32_0 = arith.constant 0 : i32
    %c0_i32_1 = arith.constant 0 : i32
    return %c0_i32, %c0_i32_0 : i32, i32
  }
  func.func @transform_23(%arg0: i32) -> (i32, i32) {
    %c0_i32 = arith.constant 0 : i32
    %c0_i32_0 = arith.constant 0 : i32
    %c0_i32_1 = arith.constant 0 : i32
    return %c0_i32, %c0_i32_0 : i32, i32
  }
  func.func @transform_24(%arg0: i32) -> (i32, i32) {
    %c0_i32 = arith.constant 0 : i32
    %c0_i32_0 = arith.constant 0 : i32
    %c0_i32_1 = arith.constant 0 : i32
    return %c0_i32, %c0_i32_0 : i32, i32
  }
  func.func @transform_25(%arg0: i32) -> (i32, i32) {
    %c0_i32 = arith.constant 0 : i32
    %c0_i32_0 = arith.constant 0 : i32
    %c0_i32_1 = arith.constant 0 : i32
    return %c0_i32, %c0_i32_0 : i32, i32
  }
  func.func @transform_26(%arg0: i32) -> (i32, i32) {
    %c0_i32 = arith.constant 0 : i32
    %c0_i32_0 = arith.constant 0 : i32
    %c0_i32_1 = arith.constant 0 : i32
    return %c0_i32, %c0_i32_0 : i32, i32
  }
  func.func @transform_27(%arg0: i32) -> (i32, i32) {
    %c0_i32 = arith.constant 0 : i32
    %c0_i32_0 = arith.constant 0 : i32
    %c0_i32_1 = arith.constant 0 : i32
    return %c0_i32, %c0_i32_0 : i32, i32
  }
  func.func @transform_28(%arg0: i32) -> (i32, i32) {
    %c0_i32 = arith.constant 0 : i32
    %c0_i32_0 = arith.constant 0 : i32
    %c0_i32_1 = arith.constant 0 : i32
    return %c0_i32, %c0_i32_0 : i32, i32
  }
  func.func @transform_29(%arg0: i32) -> (i32, i32) {
    %c0_i32 = arith.constant 0 : i32
    %c0_i32_0 = arith.constant 0 : i32
    %c0_i32_1 = arith.constant 0 : i32
    return %c0_i32, %c0_i32_0 : i32, i32
  }
  func.func @transform_30(%arg0: i32) -> (i32, i32) {
    %c0_i32 = arith.constant 0 : i32
    %c0_i32_0 = arith.constant 0 : i32
    %c0_i32_1 = arith.constant 0 : i32
    return %c0_i32, %c0_i32_0 : i32, i32
  }
  func.func @transform_31(%arg0: i32) -> (i32, i32) {
    %c0_i32 = arith.constant 0 : i32
    %c0_i32_0 = arith.constant 0 : i32
    %c0_i32_1 = arith.constant 0 : i32
    return %c0_i32, %c0_i32_0 : i32, i32
  }
  func.func @transform_32(%arg0: i32) -> (i32, i32) {
    %c0_i32 = arith.constant 0 : i32
    %c0_i32_0 = arith.constant 0 : i32
    %c0_i32_1 = arith.constant 0 : i32
    return %c0_i32, %c0_i32_0 : i32, i32
  }
}

</mosaic_0001>

<llo_original>
// kernel: forward.1
$region0: #{forward.1}
  #allocation0 [shape = 'u32[]', space=smem, size = 0x4, offset = 0x4, fixed_abs, tag = 'smem constant byte address 0x4 - core index']
  #allocation1 [shape = 'u32[144,128]{1,0:T(1,128)}', space=vmem, size = 0x12000, scoped, tag = 'internal scratch']
  #allocation2 [shape = 'f32[16,128]{1,0:T(8,128)}', space=vmem, size = 0x2000, scoped, tag = 'scratch operand']
  %s0 = inlined_call_operand.smem [shape: u32[33], index: -1, kind: input, shape index: {}]
  %s1 = sld [smem:[%s0]]
  %s2 = scalar_lea.smem %s0, 1
  %s3 = sld [smem:[%s2]]
  %s4 = scalar_lea.smem %s0, 2
  %s5 = sld [smem:[%s4]]
  %s6 = scalar_lea.smem %s0, 3
  %s7 = sld [smem:[%s6]]
  %s8 = scalar_lea.smem %s0, 4
  %s9 = sld [smem:[%s8]]
  %s10 = scalar_lea.smem %s0, 5
  %s11 = sld [smem:[%s10]]
  %s12 = scalar_lea.smem %s0, 6
  %s13 = sld [smem:[%s12]]
  %s14 = scalar_lea.smem %s0, 7
  %s15 = sld [smem:[%s14]]
  %s16 = scalar_lea.smem %s0, 8
  %s17 = sld [smem:[%s16]]
  %s18 = scalar_lea.smem %s0, 9
  %s19 = sld [smem:[%s18]]
  %s20 = scalar_lea.smem %s0, 10
  %s21 = sld [smem:[%s20]]
  %s22 = scalar_lea.smem %s0, 11
  %s23 = sld [smem:[%s22]]
  %s24 = scalar_lea.smem %s0, 12
  %s25 = sld [smem:[%s24]]
  %s26 = scalar_lea.smem %s0, 13
  %s27 = sld [smem:[%s26]]
  %s28 = scalar_lea.smem %s0, 14
  %s29 = sld [smem:[%s28]]
  %s30 = scalar_lea.smem %s0, 15
  %s31 = sld [smem:[%s30]]
  %s32 = scalar_lea.smem %s0, 16
  %s33 = sld [smem:[%s32]]
  %s34 = scalar_lea.smem %s0, 17
  %s35 = sld [smem:[%s34]]
  %s36 = scalar_lea.smem %s0, 18
  %s37 = sld [smem:[%s36]]
  %s38 = scalar_lea.smem %s0, 19
  %s39 = sld [smem:[%s38]]
  %s40 = scalar_lea.smem %s0, 20
  %s41 = sld [smem:[%s40]]
  %s42 = scalar_lea.smem %s0, 21
  %s43 = sld [smem:[%s42]]
  %s44 = scalar_lea.smem %s0, 22
  %s45 = sld [smem:[%s44]]
  %s46 = scalar_lea.smem %s0, 23
  %s47 = sld [smem:[%s46]]
  %s48 = scalar_lea.smem %s0, 24
  %s49 = sld [smem:[%s48]]
  %s50 = scalar_lea.smem %s0, 25
  %s51 = sld [smem:[%s50]]
  %s52 = scalar_lea.smem %s0, 26
  %s53 = sld [smem:[%s52]]
  %s54 = scalar_lea.smem %s0, 27
  %s55 = sld [smem:[%s54]]
  %s56 = scalar_lea.smem %s0, 28
  %s57 = sld [smem:[%s56]]
  %s58 = scalar_lea.smem %s0, 29
  %s59 = sld [smem:[%s58]]
  %s60 = scalar_lea.smem %s0, 30
  %s61 = sld [smem:[%s60]]
  %s62 = scalar_lea.smem %s0, 31
  %s63 = sld [smem:[%s62]]
  %s64 = scalar_lea.smem %s0, 32
  %s65 = sld [smem:[%s64]]
  %s66 = sld [smem:[#allocation0]]
  $region174: #{forward.1} parent=0
    _
  %s68 = ssub.s32 1, %s66
  %s69 = scalar_select 0, %s68, %s66
  $region1: #{forward.1} parent=0
    #allocation3 [shape = 'u8[98304]{0}', space=vmem, size = 0x18000, scoped, tag = 'input window, operand 4, single buffered']
    #allocation4 [shape = 's32[1]{0}', space=sflag, size = 0x4, scoped, tag = 'scoped memory for forward.1']
    #allocation5 [shape = 'u8[32768]{0}', space=vmem, size = 0x8000, scoped, tag = 'input window, operand 6, single buffered']
    #allocation6 [shape = 's32[1]{0}', space=sflag, size = 0x4, scoped, tag = 'scoped memory for forward.1']
    #allocation7 [shape = 'u8[65536]{0}', space=vmem, size = 0x10000, scoped, tag = 'input window, operand 10, single buffered']
    #allocation8 [shape = 'u8[65536]{0}', space=vmem, size = 0x10000, scoped, tag = 'input window, operand 12, single buffered']
    #allocation9 [shape = 's32[1]{0}', space=sflag, size = 0x4, scoped, tag = 'scoped memory for forward.1']
    #allocation10 [shape = 'u8[32768]{0}', space=vmem, size = 0x8000, scoped, tag = 'input window, operand 18, single buffered']
    #allocation11 [shape = 'u8[65536]{0}', space=vmem, size = 0x10000, scoped, tag = 'input window, operand 22, single buffered']
    #allocation12 [shape = 's32[1]{0}', space=sflag, size = 0x4, scoped, tag = 'scoped memory for forward.1']
    #allocation13 [shape = 'u8[65536]{0}', space=vmem, size = 0x10000, scoped, tag = 'input window, operand 24, single buffered']
    #allocation14 [shape = 'u8[32768]{0}', space=vmem, size = 0x8000, scoped, tag = 'input window, operand 28, single buffered']
    #allocation15 [shape = 's32[1]{0}', space=sflag, size = 0x4, scoped, tag = 'scoped memory for forward.1']
    #allocation16 [shape = 'u8[32768]{0}', space=vmem, size = 0x8000, scoped, tag = 'input window, operand 30, single buffered']
    %70 = vsyncpa [#allocation4], 0
    %71 = vsyncpa [#allocation6], 0
    %72 = vsyncpa [#allocation9], 0
    %73 = vsyncpa [#allocation12], 0
    %74 = vsyncpa [#allocation15], 0
    // Predicated region
    $region2: #{forward.1} parent=1 // pred_check
      _
    $region3: #{forward.1} parent=1 // pred_check_branch
      %76 = sbr.rel (0) target = $region5
    $region4: #{forward.1} parent=1 // pred_region
      _
    $region5: #{forward.1} parent=1 // pred_fallthru
      _
    // Predicated region
    $region6: #{forward.1} parent=1 // pred_check
      _
    $region7: #{forward.1} parent=1 // pred_check_branch
      %78 = sbr.rel (0) target = $region9
    $region8: #{forward.1} parent=1 // pred_region
      _
    $region9: #{forward.1} parent=1 // pred_fallthru
      _
    // Predicated region
    $region10: #{forward.1} parent=1 // pred_check
      _
    $region11: #{forward.1} parent=1 // pred_check_branch
      %80 = sbr.rel (0) target = $region13
    $region12: #{forward.1} parent=1 // pred_region
      _
    $region13: #{forward.1} parent=1 // pred_fallthru
      _
    // Predicated region
    $region14: #{forward.1} parent=1 // pred_check
      _
    $region15: #{forward.1} parent=1 // pred_check_branch
      %82 = sbr.rel (0) target = $region17
    $region16: #{forward.1} parent=1 // pred_region
      _
    $region17: #{forward.1} parent=1 // pred_fallthru
      _
    // Predicated region
    $region18: #{forward.1} parent=1 // pred_check
      _
    $region19: #{forward.1} parent=1 // pred_check_branch
      %84 = sbr.rel (0) target = $region21
    $region20: #{forward.1} parent=1 // pred_region
      %s86 = ssub.s32 3072, 3072
      %87 = vsyncadd [#allocation4], %s86
      %s88 = sshll.u32 [#allocation3], 4
      %s89 = int_to_ptr.vmem [resolvable:$true] %s88
      %94 = dma.hbm_to_vmem [thread:$0]  %s9, 3072, %s89, [#allocation4], 192, 192, 12
    $region21: #{forward.1} parent=1 // pred_fallthru
      _
    // Predicated region
    $region22: #{forward.1} parent=1 // pred_check
      _
    $region23: #{forward.1} parent=1 // pred_check_branch
      %96 = sbr.rel (0) target = $region25
    $region24: #{forward.1} parent=1 // pred_region
      _
    $region25: #{forward.1} parent=1 // pred_fallthru
      _
    // Predicated region
    $region26: #{forward.1} parent=1 // pred_check
      _
    $region27: #{forward.1} parent=1 // pred_check_branch
      %98 = sbr.rel (0) target = $region29
    $region28: #{forward.1} parent=1 // pred_region
      %s100 = ssub.s32 1024, 1024
      %101 = vsyncadd [#allocation6], %s100
      %s102 = sshll.u32 [#allocation5], 4
      %s103 = int_to_ptr.vmem [resolvable:$true] %s102
      %108 = dma.hbm_to_vmem [thread:$0]  %s13, 1024, %s103, [#allocation6], 64, 64, 4
    $region29: #{forward.1} parent=1 // pred_fallthru
      _
    // Predicated region
    $region30: #{forward.1} parent=1 // pred_check
      _
    $region31: #{forward.1} parent=1 // pred_check_branch
      %110 = sbr.rel (0) target = $region33
    $region32: #{forward.1} parent=1 // pred_region
      _
    $region33: #{forward.1} parent=1 // pred_fallthru
      _
    // Predicated region
    $region34: #{forward.1} parent=1 // pred_check
      _
    $region35: #{forward.1} parent=1 // pred_check_branch
      %112 = sbr.rel (0) target = $region37
    $region36: #{forward.1} parent=1 // pred_region
      _
    $region37: #{forward.1} parent=1 // pred_fallthru
      _
    // Predicated region
    $region38: #{forward.1} parent=1 // pred_check
      _
    $region39: #{forward.1} parent=1 // pred_check_branch
      %114 = sbr.rel (0) target = $region41
    $region40: #{forward.1} parent=1 // pred_region
      _
    $region41: #{forward.1} parent=1 // pred_fallthru
      _
    // Predicated region
    $region42: #{forward.1} parent=1 // pred_check
      _
    $region43: #{forward.1} parent=1 // pred_check_branch
      %116 = sbr.rel (0) target = $region45
    $region44: #{forward.1} parent=1 // pred_region
      %s118 = ssub.s32 2048, 2048
      %119 = vsyncadd [#allocation6], %s118
      %s120 = sshll.u32 [#allocation7], 4
      %s121 = int_to_ptr.vmem [resolvable:$true] %s120
      %126 = dma.hbm_to_vmem [thread:$0]  %s21, 2048, %s121, [#allocation6], 128, 128, 8
    $region45: #{forward.1} parent=1 // pred_fallthru
      _
    // Predicated region
    $region46: #{forward.1} parent=1 // pred_check
      _
    $region47: #{forward.1} parent=1 // pred_check_branch
      %128 = sbr.rel (0) target = $region49
    $region48: #{forward.1} parent=1 // pred_region
      _
    $region49: #{forward.1} parent=1 // pred_fallthru
      _
    // Predicated region
    $region50: #{forward.1} parent=1 // pred_check
      _
    $region51: #{forward.1} parent=1 // pred_check_branch
      %130 = sbr.rel (0) target = $region53
    $region52: #{forward.1} parent=1 // pred_region
      %s132 = ssub.s32 2048, 2048
      %133 = vsyncadd [#allocation9], %s132
      %s134 = sshll.u32 [#allocation8], 4
      %s135 = int_to_ptr.vmem [resolvable:$true] %s134
      %140 = dma.hbm_to_vmem [thread:$0]  %s25, 2048, %s135, [#allocation9], 64, 64, 4
    $region53: #{forward.1} parent=1 // pred_fallthru
      _
    // Predicated region
    $region54: #{forward.1} parent=1 // pred_check
      _
    $region55: #{forward.1} parent=1 // pred_check_branch
      %142 = sbr.rel (0) target = $region57
    $region56: #{forward.1} parent=1 // pred_region
      _
    $region57: #{forward.1} parent=1 // pred_fallthru
      _
    // Predicated region
    $region58: #{forward.1} parent=1 // pred_check
      _
    $region59: #{forward.1} parent=1 // pred_check_branch
      %144 = sbr.rel (0) target = $region61
    $region60: #{forward.1} parent=1 // pred_region
      _
    $region61: #{forward.1} parent=1 // pred_fallthru
      _
    // Predicated region
    $region62: #{forward.1} parent=1 // pred_check
      _
    $region63: #{forward.1} parent=1 // pred_check_branch
      %146 = sbr.rel (0) target = $region65
    $region64: #{forward.1} parent=1 // pred_region
      _
    $region65: #{forward.1} parent=1 // pred_fallthru
      _
    // Predicated region
    $region66: #{forward.1} parent=1 // pred_check
      _
    $region67: #{forward.1} parent=1 // pred_check_branch
      %148 = sbr.rel (0) target = $region69
    $region68: #{forward.1} parent=1 // pred_region
      _
    $region69: #{forward.1} parent=1 // pred_fallthru
      _
    // Predicated region
    $region70: #{forward.1} parent=1 // pred_check
      _
    $region71: #{forward.1} parent=1 // pred_check_branch
      %150 = sbr.rel (0) target = $region73
    $region72: #{forward.1} parent=1 // pred_region
      _
    $region73: #{forward.1} parent=1 // pred_fallthru
      _
    // Predicated region
    $region74: #{forward.1} parent=1 // pred_check
      _
    $region75: #{forward.1} parent=1 // pred_check_branch
      %152 = sbr.rel (0) target = $region77
    $region76: #{forward.1} parent=1 // pred_region
      %s154 = ssub.s32 1024, 1024
      %155 = vsyncadd [#allocation9], %s154
      %s156 = sshll.u32 [#allocation10], 4
      %s157 = int_to_ptr.vmem [resolvable:$true] %s156
      %162 = dma.hbm_to_vmem [thread:$0]  %s37, 1024, %s157, [#allocation9], 64, 64, 4
    $region77: #{forward.1} parent=1 // pred_fallthru
      _
    // Predicated region
    $region78: #{forward.1} parent=1 // pred_check
      _
    $region79: #{forward.1} parent=1 // pred_check_branch
      %164 = sbr.rel (0) target = $region81
    $region80: #{forward.1} parent=1 // pred_region
      _
    $region81: #{forward.1} parent=1 // pred_fallthru
      _
    // Predicated region
    $region82: #{forward.1} parent=1 // pred_check
      _
    $region83: #{forward.1} parent=1 // pred_check_branch
      %166 = sbr.rel (0) target = $region85
    $region84: #{forward.1} parent=1 // pred_region
      _
    $region85: #{forward.1} parent=1 // pred_fallthru
      _
    // Predicated region
    $region86: #{forward.1} parent=1 // pred_check
      _
    $region87: #{forward.1} parent=1 // pred_check_branch
      %168 = sbr.rel (0) target = $region89
    $region88: #{forward.1} parent=1 // pred_region
      _
    $region89: #{forward.1} parent=1 // pred_fallthru
      _
    // Predicated region
    $region90: #{forward.1} parent=1 // pred_check
      _
    $region91: #{forward.1} parent=1 // pred_check_branch
      %170 = sbr.rel (0) target = $region93
    $region92: #{forward.1} parent=1 // pred_region
      %s172 = ssub.s32 2048, 2048
      %173 = vsyncadd [#allocation12], %s172
      %s174 = sshll.u32 [#allocation11], 4
      %s175 = int_to_ptr.vmem [resolvable:$true] %s174
      %180 = dma.hbm_to_vmem [thread:$0]  %s45, 2048, %s175, [#allocation12], 128, 128, 8
    $region93: #{forward.1} parent=1 // pred_fallthru
      _
    // Predicated region
    $region94: #{forward.1} parent=1 // pred_check
      _
    $region95: #{forward.1} parent=1 // pred_check_branch
      %182 = sbr.rel (0) target = $region97
    $region96: #{forward.1} parent=1 // pred_region
      _
    $region97: #{forward.1} parent=1 // pred_fallthru
      _
    // Predicated region
    $region98: #{forward.1} parent=1 // pred_check
      _
    $region99: #{forward.1} parent=1 // pred_check_branch
      %184 = sbr.rel (0) target = $region101
    $region100: #{forward.1} parent=1 // pred_region
      %s186 = ssub.s32 2048, 2048
      %187 = vsyncadd [#allocation12], %s186
      %s188 = sshll.u32 [#allocation13], 4
      %s189 = int_to_ptr.vmem [resolvable:$true] %s188
      %194 = dma.hbm_to_vmem [thread:$0]  %s49, 2048, %s189, [#allocation12], 64, 64, 4
    $region101: #{forward.1} parent=1 // pred_fallthru
      _
    // Predicated region
    $region102: #{forward.1} parent=1 // pred_check
      _
    $region103: #{forward.1} parent=1 // pred_check_branch
      %196 = sbr.rel (0) target = $region105
    $region104: #{forward.1} parent=1 // pred_region
      _
    $region105: #{forward.1} parent=1 // pred_fallthru
      _
    // Predicated region
    $region106: #{forward.1} parent=1 // pred_check
      _
    $region107: #{forward.1} parent=1 // pred_check_branch
      %198 = sbr.rel (0) target = $region109
    $region108: #{forward.1} parent=1 // pred_region
      _
    $region109: #{forward.1} parent=1 // pred_fallthru
      _
    // Predicated region
    $region110: #{forward.1} parent=1 // pred_check
      _
    $region111: #{forward.1} parent=1 // pred_check_branch
      %200 = sbr.rel (0) target = $region113
    $region112: #{forward.1} parent=1 // pred_region
      _
    $region113: #{forward.1} parent=1 // pred_fallthru
      _
    // Predicated region
    $region114: #{forward.1} parent=1 // pred_check
      _
    $region115: #{forward.1} parent=1 // pred_check_branch
      %202 = sbr.rel (0) target = $region117
    $region116: #{forward.1} parent=1 // pred_region
      %s204 = ssub.s32 1024, 1024
      %205 = vsyncadd [#allocation15], %s204
      %s206 = sshll.u32 [#allocation14], 4
      %s207 = int_to_ptr.vmem [resolvable:$true] %s206
      %212 = dma.hbm_to_vmem [thread:$0]  %s57, 1024, %s207, [#allocation15], 64, 64, 4
    $region117: #{forward.1} parent=1 // pred_fallthru
      _
    // Predicated region
    $region118: #{forward.1} parent=1 // pred_check
      _
    $region119: #{forward.1} parent=1 // pred_check_branch
      %214 = sbr.rel (0) target = $region121
    $region120: #{forward.1} parent=1 // pred_region
      _
    $region121: #{forward.1} parent=1 // pred_fallthru
      _
    // Predicated region
    $region122: #{forward.1} parent=1 // pred_check
      _
    $region123: #{forward.1} parent=1 // pred_check_branch
      %216 = sbr.rel (0) target = $region125
    $region124: #{forward.1} parent=1 // pred_region
      %s218 = ssub.s32 1024, 1024
      %219 = vsyncadd [#allocation15], %s218
      %s220 = sshll.u32 [#allocation16], 4
      %s221 = int_to_ptr.vmem [resolvable:$true] %s220
      %226 = dma.hbm_to_vmem [thread:$0]  %s61, 1024, %s221, [#allocation15], 64, 64, 4
    $region125: #{forward.1} parent=1 // pred_fallthru
      _
    // Predicated region
    $region126: #{forward.1} parent=1 // pred_check
      _
    $region127: #{forward.1} parent=1 // pred_check_branch
      %228 = sbr.rel (0) target = $region129
    $region128: #{forward.1} parent=1 // pred_region
      _
    $region129: #{forward.1} parent=1 // pred_fallthru
      _
    // Predicated region
    $region130: #{forward.1} parent=1 // pred_check
      _
    $region131: #{forward.1} parent=1 // pred_check_branch
      %230 = sbr.rel (0) target = $region133
    $region132: #{forward.1} parent=1 // pred_region
      %231 = dma.done [#allocation4], 3072
    $region133: #{forward.1} parent=1 // pred_fallthru
      _
    // Predicated region
    $region134: #{forward.1} parent=1 // pred_check
      _
    $region135: #{forward.1} parent=1 // pred_check_branch
      %233 = sbr.rel (0) target = $region137
    $region136: #{forward.1} parent=1 // pred_region
      %234 = dma.done [#allocation6], 1024
    $region137: #{forward.1} parent=1 // pred_fallthru
      _
    // Predicated region
    $region138: #{forward.1} parent=1 // pred_check
      _
    $region139: #{forward.1} parent=1 // pred_check_branch
      %236 = sbr.rel (0) target = $region141
    $region140: #{forward.1} parent=1 // pred_region
      %237 = dma.done [#allocation6], 2048
    $region141: #{forward.1} parent=1 // pred_fallthru
      _
    // Predicated region
    $region142: #{forward.1} parent=1 // pred_check
      _
    $region143: #{forward.1} parent=1 // pred_check_branch
      %239 = sbr.rel (0) target = $region145
    $region144: #{forward.1} parent=1 // pred_region
      %240 = dma.done [#allocation9], 2048
    $region145: #{forward.1} parent=1 // pred_fallthru
      _
    // Predicated region
    $region146: #{forward.1} parent=1 // pred_check
      _
    $region147: #{forward.1} parent=1 // pred_check_branch
      %242 = sbr.rel (0) target = $region149
    $region148: #{forward.1} parent=1 // pred_region
      %243 = dma.done [#allocation9], 1024
    $region149: #{forward.1} parent=1 // pred_fallthru
      _
    // Predicated region
    $region150: #{forward.1} parent=1 // pred_check
      _
    $region151: #{forward.1} parent=1 // pred_check_branch
      %245 = sbr.rel (0) target = $region153
    $region152: #{forward.1} parent=1 // pred_region
      %246 = dma.done [#allocation12], 2048
    $region153: #{forward.1} parent=1 // pred_fallthru
      _
    // Predicated region
    $region154: #{forward.1} parent=1 // pred_check
      _
    $region155: #{forward.1} parent=1 // pred_check_branch
      %248 = sbr.rel (0) target = $region157
    $region156: #{forward.1} parent=1 // pred_region
      %249 = dma.done [#allocation12], 2048
    $region157: #{forward.1} parent=1 // pred_fallthru
      _
    // Predicated region
    $region158: #{forward.1} parent=1 // pred_check
      _
    $region159: #{forward.1} parent=1 // pred_check_branch
      %251 = sbr.rel (0) target = $region161
    $region160: #{forward.1} parent=1 // pred_region
      %252 = dma.done [#allocation15], 1024
    $region161: #{forward.1} parent=1 // pred_fallthru
      _
    // Predicated region
    $region162: #{forward.1} parent=1 // pred_check
      _
    $region163: #{forward.1} parent=1 // pred_check_branch
      %254 = sbr.rel (0) target = $region165
    $region164: #{forward.1} parent=1 // pred_region
      %255 = dma.done [#allocation15], 1024
    $region165: #{forward.1} parent=1 // pred_fallthru
      _
    %v257 = vld [vmem:[%s1] sm:$0xff]
    %v258 = vld [vmem:[%s1 + $0x8] sm:$0xff]
    %259 = vadd.xlane.f32.xlu0 %v257
    %v260 = vpop.xlane.xlu0 %259
    %261 = vadd.xlane.f32.xlu0 %v258
    %v262 = vpop.xlane.xlu0 %261
    %v263 = vrcp.pop 128.0
    %v264 = vmul.f32 %v260, %v263
    %v265 = vmul.f32 %v262, %v263
    %v266 = vsub.f32 %v257, %v264
    %v267 = vsub.f32 %v258, %v265
    %v268 = vmul.f32 %v266, %v266
    %v269 = vmul.f32 %v267, %v267
    %270 = vadd.xlane.f32.xlu0 %v268
    %v271 = vpop.xlane.xlu0 %270
    %272 = vadd.xlane.f32.xlu0 %v269
    %v273 = vpop.xlane.xlu0 %272
    %v274 = vmul.f32 %v271, %v263
    %v275 = vmul.f32 %v273, %v263
    %v276 = vadd.f32 %v274, 1e-05
    %v277 = vadd.f32 %v275, 1e-05
    %v278 = vrsqrt.pop %v276
    %v279 = vrsqrt.pop %v277
    %v280 = vmul.f32 %v266, %v278
    %v281 = vmul.f32 %v267, %v279
    %v282 = vld [vmem:[%s5] sm:$0x1]
    %v284 = vlaneseq
    %v285 = vshrl.u32 %v284, 7
    %v286 = vsub.s32 0, %v285
    %v287 = vrot.slane %v282, %v286
    %v289 = vmul.f32 %v280, %v287
    %v290 = vmul.f32 %v281, %v287
    %v291 = vld [vmem:[%s7] sm:$0x1]
    %v293 = vlaneseq
    %v294 = vshrl.u32 %v293, 7
    %v295 = vsub.s32 0, %v294
    %v296 = vrot.slane %v291, %v295
    %v298 = vadd.f32 %v289, %v296
    %v299 = vadd.f32 %v290, %v296
    %v300 = vld [vmem:[%s3] sm:$0x3]
    %v301 = vpack.c.bf16 %v299, %v298
    %v302 = vld [vmem:[#allocation3] sm:$0xff]
    %v303 = vld [vmem:[#allocation3 + $0x8] sm:$0xf]
    %v304 = vld [vmem:[#allocation3 + $0xc] sm:$0xff]
    %v305 = vld [vmem:[#allocation3 + $0x14] sm:$0xf]
    %v306 = vld [vmem:[#allocation3 + $0x18] sm:$0xff]
    %v307 = vld [vmem:[#allocation3 + $0x20] sm:$0xf]
    %v308 = vld [vmem:[#allocation3 + $0x24] sm:$0xff]
    %v309 = vld [vmem:[#allocation3 + $0x2c] sm:$0xf]
    %v310 = vld [vmem:[#allocation3 + $0x30] sm:$0xff]
    %v311 = vld [vmem:[#allocation3 + $0x38] sm:$0xf]
    %v312 = vld [vmem:[#allocation3 + $0x3c] sm:$0xff]
    %v313 = vld [vmem:[#allocation3 + $0x44] sm:$0xf]
    %v314 = vld [vmem:[#allocation3 + $0x48] sm:$0xff]
    %v315 = vld [vmem:[#allocation3 + $0x50] sm:$0xf]
    %v316 = vld [vmem:[#allocation3 + $0x54] sm:$0xff]
    %v317 = vld [vmem:[#allocation3 + $0x5c] sm:$0xf]
    %v318 = vld [vmem:[#allocation3 + $0x60] sm:$0xff]
    %v319 = vld [vmem:[#allocation3 + $0x68] sm:$0xf]
    %v320 = vld [vmem:[#allocation3 + $0x6c] sm:$0xff]
    %v321 = vld [vmem:[#allocation3 + $0x74] sm:$0xf]
    %v322 = vld [vmem:[#allocation3 + $0x78] sm:$0xff]
    %v323 = vld [vmem:[#allocation3 + $0x80] sm:$0xf]
    %v324 = vld [vmem:[#allocation3 + $0x84] sm:$0xff]
    %v325 = vld [vmem:[#allocation3 + $0x8c] sm:$0xf]
    %v326 = vld [vmem:[#allocation3 + $0x90] sm:$0xff]
    %v327 = vld [vmem:[#allocation3 + $0x98] sm:$0xf]
    %v328 = vld [vmem:[#allocation3 + $0x9c] sm:$0xff]
    %v329 = vld [vmem:[#allocation3 + $0xa4] sm:$0xf]
    %v330 = vld [vmem:[#allocation3 + $0xa8] sm:$0xff]
    %v331 = vld [vmem:[#allocation3 + $0xb0] sm:$0xf]
    %v332 = vld [vmem:[#allocation3 + $0xb4] sm:$0xff]
    %v333 = vld [vmem:[#allocation3 + $0xbc] sm:$0xf]
    %v334 = vld [vmem:[%s11] sm:$0x7]
    %v336 = vlaneseq
    %v337 = vshrl.u32 %v336, 7
    %v338 = vsub.s32 0, %v337
    %v339 = vrot.slane %v334, %v338
    %v340 = vlaneseq
    %v341 = vshrl.u32 %v340, 7
    %v342 = vsub.s32 1, %v341
    %v343 = vrot.slane %v334, %v342
    %v344 = vlaneseq
    %v345 = vshrl.u32 %v344, 7
    %v346 = vsub.s32 2, %v345
    %v347 = vrot.slane %v334, %v346
    %v383 = vunpack.c.l.b16 %v302
    %v384 = vunpack.c.h.b16 %v302
    %v385 = vunpack.c.l.b16 %v303
    %v386 = vunpack.c.l.b16 %v304
    %v387 = vunpack.c.h.b16 %v304
    %v388 = vunpack.c.l.b16 %v305
    %v389 = vunpack.c.l.b16 %v306
    %v390 = vunpack.c.h.b16 %v306
    %v391 = vunpack.c.l.b16 %v307
    %v392 = vunpack.c.l.b16 %v308
    %v393 = vunpack.c.h.b16 %v308
    %v394 = vunpack.c.l.b16 %v309
    %v395 = vunpack.c.l.b16 %v310
    %v396 = vunpack.c.h.b16 %v310
    %v397 = vunpack.c.l.b16 %v311
    %v398 = vunpack.c.l.b16 %v312
    %v399 = vunpack.c.h.b16 %v312
    %v400 = vunpack.c.l.b16 %v313
    %v401 = vunpack.c.l.b16 %v314
    %v402 = vunpack.c.h.b16 %v314
    %v403 = vunpack.c.l.b16 %v315
    %v404 = vunpack.c.l.b16 %v316
    %v405 = vunpack.c.h.b16 %v316
    %v406 = vunpack.c.l.b16 %v317
    %v407 = vunpack.c.l.b16 %v318
    %v408 = vunpack.c.h.b16 %v318
    %v409 = vunpack.c.l.b16 %v319
    %v410 = vunpack.c.l.b16 %v320
    %v411 = vunpack.c.h.b16 %v320
    %v412 = vunpack.c.l.b16 %v321
    %v413 = vunpack.c.l.b16 %v322
    %v414 = vunpack.c.h.b16 %v322
    %v415 = vunpack.c.l.b16 %v323
    %v416 = vunpack.c.l.b16 %v324
    %v417 = vunpack.c.h.b16 %v324
    %v418 = vunpack.c.l.b16 %v325
    %v419 = vunpack.c.l.b16 %v326
    %v420 = vunpack.c.h.b16 %v326
    %v421 = vunpack.c.l.b16 %v327
    %v422 = vunpack.c.l.b16 %v328
    %v423 = vunpack.c.h.b16 %v328
    %v424 = vunpack.c.l.b16 %v329
    %v425 = vunpack.c.l.b16 %v330
    %v426 = vunpack.c.h.b16 %v330
    %v427 = vunpack.c.l.b16 %v331
    %v428 = vunpack.c.l.b16 %v332
    %v429 = vunpack.c.h.b16 %v332
    %v430 = vunpack.c.l.b16 %v333
    %v431 = vpack.c.b16 %v386, %v383
    %v432 = vpack.c.b16 %v387, %v384
    %v433 = vpack.c.b16 %v388, %v385
    %v434 = vpack.c.b16 %v392, %v389
    %v435 = vpack.c.b16 %v393, %v390
    %v436 = vpack.c.b16 %v394, %v391
    %v437 = vpack.c.b16 %v398, %v395
    %v438 = vpack.c.b16 %v399, %v396
    %v439 = vpack.c.b16 %v400, %v397
    %v440 = vpack.c.b16 %v404, %v401
    %v441 = vpack.c.b16 %v405, %v402
    %v442 = vpack.c.b16 %v406, %v403
    %v443 = vpack.c.b16 %v410, %v407
    %v444 = vpack.c.b16 %v411, %v408
    %v445 = vpack.c.b16 %v412, %v409
    %v446 = vpack.c.b16 %v416, %v413
    %v447 = vpack.c.b16 %v417, %v414
    %v448 = vpack.c.b16 %v418, %v415
    %v449 = vpack.c.b16 %v422, %v419
    %v450 = vpack.c.b16 %v423, %v420
    %v451 = vpack.c.b16 %v424, %v421
    %v452 = vpack.c.b16 %v428, %v425
    %v453 = vpack.c.b16 %v429, %v426
    %v454 = vpack.c.b16 %v430, %v427
    %479 = vmatprep.subr.bf16.mxu0 %v453
    %480 = vmatpush1.bf16.msra.mxu0 %v452
    %481 = vmatprep.subr.bf16.mxu0 %v450
    %482 = vmatpush1.bf16.msra.mxu0 %v449
    %483 = vmatprep.subr.bf16.mxu0 %v447
    %484 = vmatpush1.bf16.msra.mxu0 %v446
    %485 = vmatprep.subr.bf16.mxu0 %v444
    %486 = vmatpush1.bf16.msra.mxu0 %v443
    %487 = vmatprep.subr.bf16.mxu0 %v441
    %488 = vmatpush1.bf16.msra.mxu0 %v440
    %489 = vmatprep.subr.bf16.mxu0 %v438
    %490 = vmatpush1.bf16.msra.mxu0 %v437
    %491 = vmatprep.subr.bf16.mxu0 %v435
    %492 = vmatpush1.bf16.msra.mxu0 %v434
    %493 = vmatprep.subr.bf16.mxu0 %v432
    %494 = vmatpush1.bf16.msra.mxu0 %v431
    %495 = vmatprep.subr.bf16.mxu0 0
    %496 = vmatpush2.bf16.msra.mxu0 0
    %497 = vmatprep.subr.bf16.mxu0 0
    %498 = vmatpush2.bf16.msra.mxu0 0
    %499 = vmatprep.subr.bf16.mxu0 0
    %500 = vmatpush2.bf16.msra.mxu0 0
    %501 = vmatprep.subr.bf16.mxu0 0
    %502 = vmatpush2.bf16.msra.mxu0 0
    %503 = vmatprep.subr.bf16.mxu0 0
    %504 = vmatpush2.bf16.msra.mxu0 0
    %505 = vmatprep.subr.bf16.mxu0 0
    %506 = vmatpush2.bf16.msra.mxu0 0
    %507 = vmatprep.subr.bf16.mxu0 0
    %508 = vmatpush2.bf16.msra.mxu0 0
    %509 = vmatprep.subr.bf16.mxu0 0
    %510 = vmatpush2.bf16.msra.mxu0 0
    %511 = vmatprep.mubr.bf16.mxu0 0
    %512 = vmatmul.mubr.bf16.gmra.mxu0 %v301
    %v513 = vpop.f32.mrf.mxu0
    %v514 = vadd.f32 %v339, %v513
    %v515 = vpop.f32.mrf.mxu0
    %v516 = vadd.f32 %v343, %v515
    %v517 = vpop.f32.mrf.mxu0
    %v518 = vadd.f32 %v339, %v517
    %v519 = vpop.f32.mrf.mxu0
    %v520 = vadd.f32 %v343, %v519
    %521 = vdwg.mxu0
    %522 = vmatprep.subr.bf16.mxu0 0
    %523 = vmatpush1.bf16.msra.mxu0 %v454
    %524 = vmatprep.subr.bf16.mxu0 0
    %525 = vmatpush1.bf16.msra.mxu0 %v451
    %526 = vmatprep.subr.bf16.mxu0 0
    %527 = vmatpush1.bf16.msra.mxu0 %v448
    %528 = vmatprep.subr.bf16.mxu0 0
    %529 = vmatpush1.bf16.msra.mxu0 %v445
    %530 = vmatprep.subr.bf16.mxu0 0
    %531 = vmatpush1.bf16.msra.mxu0 %v442
    %532 = vmatprep.subr.bf16.mxu0 0
    %533 = vmatpush1.bf16.msra.mxu0 %v439
    %534 = vmatprep.subr.bf16.mxu0 0
    %535 = vmatpush1.bf16.msra.mxu0 %v436
    %536 = vmatprep.subr.bf16.mxu0 0
    %537 = vmatpush1.bf16.msra.mxu0 %v433
    %538 = vmatprep.subr.bf16.mxu0 0
    %539 = vmatpush2.bf16.msra.mxu0 0
    %540 = vmatprep.subr.bf16.mxu0 0
    %541 = vmatpush2.bf16.msra.mxu0 0
    %542 = vmatprep.subr.bf16.mxu0 0
    %543 = vmatpush2.bf16.msra.mxu0 0
    %544 = vmatprep.subr.bf16.mxu0 0
    %545 = vmatpush2.bf16.msra.mxu0 0
    %546 = vmatprep.subr.bf16.mxu0 0
    %547 = vmatpush2.bf16.msra.mxu0 0
    %548 = vmatprep.subr.bf16.mxu0 0
    %549 = vmatpush2.bf16.msra.mxu0 0
    %550 = vmatprep.subr.bf16.mxu0 0
    %551 = vmatpush2.bf16.msra.mxu0 0
    %552 = vmatprep.subr.bf16.mxu0 0
    %553 = vmatpush2.bf16.msra.mxu0 0
    %554 = vmatprep.mubr.bf16.mxu0 0
    %555 = vmatmul.mubr.bf16.gmra.mxu0 %v301
    %v556 = vpop.f32.mrf.mxu0
    %v557 = vadd.f32 %v347, %v556
    %v558 = vpop.f32.mrf.mxu0
    %v559 = vpop.f32.mrf.mxu0
    %v560 = vadd.f32 %v347, %v559
    %v561 = vpop.f32.mrf.mxu0
    %562 = vdwg.mxu0
    %v563 = vpack.c.bf16 %v514, %v514
    %v564 = vpack.c.bf16 %v516, %v516
    %v565 = vlaneseq
    %v566 = vshrl.u32 %v565, 7
    %v567 = vsub.s32 0, %v566
    %v568 = vrot.slane %v300, %v567
    %vm569 = vcmask 261120
    %v571 = vsel %vm569, %v563, 0
    %v574 = vsel %vm569, %v564, 0
    %576 = vmatprep.subr.bf16.mxu0 0
    %577 = vmatpush1.bf16.xpose.msra.mxu0 0
    %578 = vmatprep.subr.bf16.mxu0 0
    %579 = vmatpush1.bf16.xpose.msra.mxu0 0
    %580 = vmatprep.subr.bf16.mxu0 0
    %581 = vmatpush1.bf16.xpose.msra.mxu0 0
    %582 = vmatprep.subr.bf16.mxu0 0
    %583 = vmatpush1.bf16.xpose.msra.mxu0 0
    %584 = vmatprep.subr.bf16.mxu0 0
    %585 = vmatpush1.bf16.xpose.msra.mxu0 0
    %586 = vmatprep.subr.bf16.mxu0 0
    %587 = vmatpush1.bf16.xpose.msra.mxu0 0
    %588 = vmatprep.subr.bf16.mxu0 0
    %589 = vmatpush1.bf16.xpose.msra.mxu0 0
    %590 = vmatprep.subr.bf16.mxu0 0
    %591 = vmatpush1.bf16.xpose.msra.mxu0 %v574
    %592 = vmatprep.subr.bf16.mxu0 0
    %593 = vmatpush2.bf16.xpose.msra.mxu0 0
    %594 = vmatprep.subr.bf16.mxu0 0
    %595 = vmatpush2.bf16.xpose.msra.mxu0 0
    %596 = vmatprep.subr.bf16.mxu0 0
    %597 = vmatpush2.bf16.xpose.msra.mxu0 0
    %598 = vmatprep.subr.bf16.mxu0 0
    %599 = vmatpush2.bf16.xpose.msra.mxu0 0
    %600 = vmatprep.subr.bf16.mxu0 0
    %601 = vmatpush2.bf16.xpose.msra.mxu0 0
    %602 = vmatprep.subr.bf16.mxu0 0
    %603 = vmatpush2.bf16.xpose.msra.mxu0 0
    %604 = vmatprep.subr.bf16.mxu0 0
    %605 = vmatpush2.bf16.xpose.msra.mxu0 0
    %606 = vmatprep.subr.bf16.mxu0 0
    %607 = vmatpush2.bf16.xpose.msra.mxu0 0
    %608 = vmatprep.mubr.bf16.mxu0 0
    %609 = vmatmul.mubr.bf16.gmra.mxu0 %v571
    %v610 = vpop.f32.mrf.mxu0
    %v611 = vadd.f32 %v568, %v610
    %v612 = vpop.f32.mrf.mxu0
    %v613 = vpop.f32.mrf.mxu0
    %v614 = vpop.f32.mrf.mxu0
    %615 = vdwg.mxu0
    %vm616 = vcmask 64512
    %v617 = vsel %vm616, %v611, -inf
    %618 = vmax.xlane.f32.xlu0 %v617
    %v619 = vpop.xlane.xlu0 %618
    %v620 = vsub.f32 %v611, %v619
    %v621 = vmul.f32 %v620, 1.442695
    %v622 = vpow.pop %v621
    %v623 = vsel %vm616, %v622, 0.0
    %624 = vadd.xlane.f32.xlu0 %v623
    %v625 = vpop.xlane.xlu0 %624
    %v626 = vpack.c.bf16 %v622, %v622
    %v627 = vpack.c.bf16 %v557, %v557
    %v629 = vsel %vm616, %v626, 0
    %vm631 = vcmask 1043456
    %v633 = vsel %vm631, %v627, 0
    %635 = vmatprep.subr.bf16.mxu0 0
    %636 = vmatpush1.bf16.msra.mxu0 0
    %637 = vmatprep.subr.bf16.mxu0 0
    %638 = vmatpush1.bf16.msra.mxu0 0
    %639 = vmatprep.subr.bf16.mxu0 0
    %640 = vmatpush1.bf16.msra.mxu0 0
    %641 = vmatprep.subr.bf16.mxu0 0
    %642 = vmatpush1.bf16.msra.mxu0 0
    %643 = vmatprep.subr.bf16.mxu0 0
    %644 = vmatpush1.bf16.msra.mxu0 0
    %645 = vmatprep.subr.bf16.mxu0 0
    %646 = vmatpush1.bf16.msra.mxu0 0
    %647 = vmatprep.subr.bf16.mxu0 0
    %648 = vmatpush1.bf16.msra.mxu0 0
    %649 = vmatprep.subr.bf16.mxu0 0
    %650 = vmatpush1.bf16.msra.mxu0 %v633
    %651 = vmatprep.subr.bf16.mxu0 0
    %652 = vmatpush2.bf16.msra.mxu0 0
    %653 = vmatprep.subr.bf16.mxu0 0
    %654 = vmatpush2.bf16.msra.mxu0 0
    %655 = vmatprep.subr.bf16.mxu0 0
    %656 = vmatpush2.bf16.msra.mxu0 0
    %657 = vmatprep.subr.bf16.mxu0 0
    %658 = vmatpush2.bf16.msra.mxu0 0
    %659 = vmatprep.subr.bf16.mxu0 0
    %660 = vmatpush2.bf16.msra.mxu0 0
    %661 = vmatprep.subr.bf16.mxu0 0
    %662 = vmatpush2.bf16.msra.mxu0 0
    %663 = vmatprep.subr.bf16.mxu0 0
    %664 = vmatpush2.bf16.msra.mxu0 0
    %665 = vmatprep.subr.bf16.mxu0 0
    %666 = vmatpush2.bf16.msra.mxu0 0
    %667 = vmatprep.mubr.bf16.mxu0 0
    %668 = vmatmul.mubr.bf16.gmra.mxu0 %v629
    %v669 = vpop.f32.mrf.mxu0
    %v670 = vadd.f32 0.0, %v669
    %v671 = vpop.f32.mrf.mxu0
    %v672 = vpop.f32.mrf.mxu0
    %v673 = vpop.f32.mrf.mxu0
    %674 = vdwg.mxu0
    %v675 = vrcp.pop %v625
    %v676 = vmul.f32 %v670, %v675
    %677 = vst.msk [vmem:[#allocation2] sm:$0xff] %vm569, %v676
    %679 = vrot.lane.b32.xlu0 %v563, 96
    %v680 = vpop.permute.xlu0 %679
    %682 = vrot.lane.b32.xlu0 %v564, 96
    %v683 = vpop.permute.xlu0 %682
    %v685 = vsel %vm569, %v680, 0
    %v688 = vsel %vm569, %v683, 0
    %690 = vmatprep.subr.bf16.mxu0 0
    %691 = vmatpush1.bf16.xpose.msra.mxu0 0
    %692 = vmatprep.subr.bf16.mxu0 0
    %693 = vmatpush1.bf16.xpose.msra.mxu0 0
    %694 = vmatprep.subr.bf16.mxu0 0
    %695 = vmatpush1.bf16.xpose.msra.mxu0 0
    %696 = vmatprep.subr.bf16.mxu0 0
    %697 = vmatpush1.bf16.xpose.msra.mxu0 0
    %698 = vmatprep.subr.bf16.mxu0 0
    %699 = vmatpush1.bf16.xpose.msra.mxu0 0
    %700 = vmatprep.subr.bf16.mxu0 0
    %701 = vmatpush1.bf16.xpose.msra.mxu0 0
    %702 = vmatprep.subr.bf16.mxu0 0
    %703 = vmatpush1.bf16.xpose.msra.mxu0 0
    %704 = vmatprep.subr.bf16.mxu0 0
    %705 = vmatpush1.bf16.xpose.msra.mxu0 %v688
    %706 = vmatprep.subr.bf16.mxu0 0
    %707 = vmatpush2.bf16.xpose.msra.mxu0 0
    %708 = vmatprep.subr.bf16.mxu0 0
    %709 = vmatpush2.bf16.xpose.msra.mxu0 0
    %710 = vmatprep.subr.bf16.mxu0 0
    %711 = vmatpush2.bf16.xpose.msra.mxu0 0
    %712 = vmatprep.subr.bf16.mxu0 0
    %713 = vmatpush2.bf16.xpose.msra.mxu0 0
    %714 = vmatprep.subr.bf16.mxu0 0
    %715 = vmatpush2.bf16.xpose.msra.mxu0 0
    %716 = vmatprep.subr.bf16.mxu0 0
    %717 = vmatpush2.bf16.xpose.msra.mxu0 0
    %718 = vmatprep.subr.bf16.mxu0 0
    %719 = vmatpush2.bf16.xpose.msra.mxu0 0
    %720 = vmatprep.subr.bf16.mxu0 0
    %721 = vmatpush2.bf16.xpose.msra.mxu0 0
    %722 = vmatprep.mubr.bf16.mxu0 0
    %723 = vmatmul.mubr.bf16.gmra.mxu0 %v685
    %v724 = vpop.f32.mrf.mxu0
    %v725 = vadd.f32 %v568, %v724
    %v726 = vpop.f32.mrf.mxu0
    %v727 = vpop.f32.mrf.mxu0
    %v728 = vpop.f32.mrf.mxu0
    %729 = vdwg.mxu0
    %v730 = vsel %vm616, %v725, -inf
    %731 = vmax.xlane.f32.xlu0 %v730
    %v732 = vpop.xlane.xlu0 %731
    %v733 = vsub.f32 %v725, %v732
    %v734 = vmul.f32 %v733, 1.442695
    %v735 = vpow.pop %v734
    %v736 = vsel %vm616, %v735, 0.0
    %737 = vadd.xlane.f32.xlu0 %v736
    %v738 = vpop.xlane.xlu0 %737
    %v739 = vpack.c.bf16 %v735, %v735
    %741 = vrot.lane.b32.xlu0 %v627, 96
    %v742 = vpop.permute.xlu0 %741
    %v744 = vsel %vm616, %v739, 0
    %v747 = vsel %vm631, %v742, 0
    %749 = vmatprep.subr.bf16.mxu0 0
    %750 = vmatpush1.bf16.msra.mxu0 0
    %751 = vmatprep.subr.bf16.mxu0 0
    %752 = vmatpush1.bf16.msra.mxu0 0
    %753 = vmatprep.subr.bf16.mxu0 0
    %754 = vmatpush1.bf16.msra.mxu0 0
    %755 = vmatprep.subr.bf16.mxu0 0
    %756 = vmatpush1.bf16.msra.mxu0 0
    %757 = vmatprep.subr.bf16.mxu0 0
    %758 = vmatpush1.bf16.msra.mxu0 0
    %759 = vmatprep.subr.bf16.mxu0 0
    %760 = vmatpush1.bf16.msra.mxu0 0
    %761 = vmatprep.subr.bf16.mxu0 0
    %762 = vmatpush1.bf16.msra.mxu0 0
    %763 = vmatprep.subr.bf16.mxu0 0
    %764 = vmatpush1.bf16.msra.mxu0 %v747
    %765 = vmatprep.subr.bf16.mxu0 0
    %766 = vmatpush2.bf16.msra.mxu0 0
    %767 = vmatprep.subr.bf16.mxu0 0
    %768 = vmatpush2.bf16.msra.mxu0 0
    %769 = vmatprep.subr.bf16.mxu0 0
    %770 = vmatpush2.bf16.msra.mxu0 0
    %771 = vmatprep.subr.bf16.mxu0 0
    %772 = vmatpush2.bf16.msra.mxu0 0
    %773 = vmatprep.subr.bf16.mxu0 0
    %774 = vmatpush2.bf16.msra.mxu0 0
    %775 = vmatprep.subr.bf16.mxu0 0
    %776 = vmatpush2.bf16.msra.mxu0 0
    %777 = vmatprep.subr.bf16.mxu0 0
    %778 = vmatpush2.bf16.msra.mxu0 0
    %779 = vmatprep.subr.bf16.mxu0 0
    %780 = vmatpush2.bf16.msra.mxu0 0
    %781 = vmatprep.mubr.bf16.mxu0 0
    %782 = vmatmul.mubr.bf16.gmra.mxu0 %v744
    %v783 = vpop.f32.mrf.mxu0
    %v784 = vadd.f32 0.0, %v783
    %v785 = vpop.f32.mrf.mxu0
    %v786 = vpop.f32.mrf.mxu0
    %v787 = vpop.f32.mrf.mxu0
    %788 = vdwg.mxu0
    %v789 = vrcp.pop %v738
    %v790 = vmul.f32 %v784, %v789
    %792 = vrot.lane.b32.xlu0 %v790, 32
    %v793 = vpop.permute.xlu0 %792
    %vm795 = vcmask 523520
    %796 = vst.msk [vmem:[#allocation2] sm:$0xff] %vm795, %v793
    %797 = vrot.lane.b32.xlu0 %v563, 64
    %v798 = vpop.permute.xlu0 %797
    %799 = vrot.lane.b32.xlu0 %v564, 64
    %v800 = vpop.permute.xlu0 %799
    %v802 = vsel %vm569, %v798, 0
    %v805 = vsel %vm569, %v800, 0
    %807 = vmatprep.subr.bf16.mxu0 0
    %808 = vmatpush1.bf16.xpose.msra.mxu0 0
    %809 = vmatprep.subr.bf16.mxu0 0
    %810 = vmatpush1.bf16.xpose.msra.mxu0 0
    %811 = vmatprep.subr.bf16.mxu0 0
    %812 = vmatpush1.bf16.xpose.msra.mxu0 0
    %813 = vmatprep.subr.bf16.mxu0 0
    %814 = vmatpush1.bf16.xpose.msra.mxu0 0
    %815 = vmatprep.subr.bf16.mxu0 0
    %816 = vmatpush1.bf16.xpose.msra.mxu0 0
    %817 = vmatprep.subr.bf16.mxu0 0
    %818 = vmatpush1.bf16.xpose.msra.mxu0 0
    %819 = vmatprep.subr.bf16.mxu0 0
    %820 = vmatpush1.bf16.xpose.msra.mxu0 0
    %821 = vmatprep.subr.bf16.mxu0 0
    %822 = vmatpush1.bf16.xpose.msra.mxu0 %v805
    %823 = vmatprep.subr.bf16.mxu0 0
    %824 = vmatpush2.bf16.xpose.msra.mxu0 0
    %825 = vmatprep.subr.bf16.mxu0 0
    %826 = vmatpush2.bf16.xpose.msra.mxu0 0
    %827 = vmatprep.subr.bf16.mxu0 0
    %828 = vmatpush2.bf16.xpose.msra.mxu0 0
    %829 = vmatprep.subr.bf16.mxu0 0
    %830 = vmatpush2.bf16.xpose.msra.mxu0 0
    %831 = vmatprep.subr.bf16.mxu0 0
    %832 = vmatpush2.bf16.xpose.msra.mxu0 0
    %833 = vmatprep.subr.bf16.mxu0 0
    %834 = vmatpush2.bf16.xpose.msra.mxu0 0
    %835 = vmatprep.subr.bf16.mxu0 0
    %836 = vmatpush2.bf16.xpose.msra.mxu0 0
    %837 = vmatprep.subr.bf16.mxu0 0
    %838 = vmatpush2.bf16.xpose.msra.mxu0 0
    %839 = vmatprep.mubr.bf16.mxu0 0
    %840 = vmatmul.mubr.bf16.gmra.mxu0 %v802
    %v841 = vpop.f32.mrf.mxu0
    %v842 = vadd.f32 %v568, %v841
    %v843 = vpop.f32.mrf.mxu0
    %v844 = vpop.f32.mrf.mxu0
    %v845 = vpop.f32.mrf.mxu0
    %846 = vdwg.mxu0
    %v847 = vsel %vm616, %v842, -inf
    %848 = vmax.xlane.f32.xlu0 %v847
    %v849 = vpop.xlane.xlu0 %848
    %v850 = vsub.f32 %v842, %v849
    %v851 = vmul.f32 %v850, 1.442695
    %v852 = vpow.pop %v851
    %v853 = vsel %vm616, %v852, 0.0
    %854 = vadd.xlane.f32.xlu0 %v853
    %v855 = vpop.xlane.xlu0 %854
    %v856 = vpack.c.bf16 %v852, %v852
    %857 = vrot.lane.b32.xlu0 %v627, 64
    %v858 = vpop.permute.xlu0 %857
    %v860 = vsel %vm616, %v856, 0
    %v863 = vsel %vm631, %v858, 0
    %865 = vmatprep.subr.bf16.mxu0 0
    %866 = vmatpush1.bf16.msra.mxu0 0
    %867 = vmatprep.subr.bf16.mxu0 0
    %868 = vmatpush1.bf16.msra.mxu0 0
    %869 = vmatprep.subr.bf16.mxu0 0
    %870 = vmatpush1.bf16.msra.mxu0 0
    %871 = vmatprep.subr.bf16.mxu0 0
    %872 = vmatpush1.bf16.msra.mxu0 0
    %873 = vmatprep.subr.bf16.mxu0 0
    %874 = vmatpush1.bf16.msra.mxu0 0
    %875 = vmatprep.subr.bf16.mxu0 0
    %876 = vmatpush1.bf16.msra.mxu0 0
    %877 = vmatprep.subr.bf16.mxu0 0
    %878 = vmatpush1.bf16.msra.mxu0 0
    %879 = vmatprep.subr.bf16.mxu0 0
    %880 = vmatpush1.bf16.msra.mxu0 %v863
    %881 = vmatprep.subr.bf16.mxu0 0
    %882 = vmatpush2.bf16.msra.mxu0 0
    %883 = vmatprep.subr.bf16.mxu0 0
    %884 = vmatpush2.bf16.msra.mxu0 0
    %885 = vmatprep.subr.bf16.mxu0 0
    %886 = vmatpush2.bf16.msra.mxu0 0
    %887 = vmatprep.subr.bf16.mxu0 0
    %888 = vmatpush2.bf16.msra.mxu0 0
    %889 = vmatprep.subr.bf16.mxu0 0
    %890 = vmatpush2.bf16.msra.mxu0 0
    %891 = vmatprep.subr.bf16.mxu0 0
    %892 = vmatpush2.bf16.msra.mxu0 0
    %893 = vmatprep.subr.bf16.mxu0 0
    %894 = vmatpush2.bf16.msra.mxu0 0
    %895 = vmatprep.subr.bf16.mxu0 0
    %896 = vmatpush2.bf16.msra.mxu0 0
    %897 = vmatprep.mubr.bf16.mxu0 0
    %898 = vmatmul.mubr.bf16.gmra.mxu0 %v860
    %v899 = vpop.f32.mrf.mxu0
    %v900 = vadd.f32 0.0, %v899
    %v901 = vpop.f32.mrf.mxu0
    %v902 = vpop.f32.mrf.mxu0
    %v903 = vpop.f32.mrf.mxu0
    %904 = vdwg.mxu0
    %v905 = vrcp.pop %v855
    %v906 = vmul.f32 %v900, %v905
    %908 = vrot.lane.b32.xlu0 %v906, 64
    %v909 = vpop.permute.xlu0 %908
    %vm911 = vcmask 785920
    %912 = vst.msk [vmem:[#allocation2] sm:$0xff] %vm911, %v909
    %913 = vrot.lane.b32.xlu0 %v563, 32
    %v914 = vpop.permute.xlu0 %913
    %915 = vrot.lane.b32.xlu0 %v564, 32
    %v916 = vpop.permute.xlu0 %915
    %v918 = vsel %vm569, %v914, 0
    %v921 = vsel %vm569, %v916, 0
    %923 = vmatprep.subr.bf16.mxu0 0
    %924 = vmatpush1.bf16.xpose.msra.mxu0 0
    %925 = vmatprep.subr.bf16.mxu0 0
    %926 = vmatpush1.bf16.xpose.msra.mxu0 0
    %927 = vmatprep.subr.bf16.mxu0 0
    %928 = vmatpush1.bf16.xpose.msra.mxu0 0
    %929 = vmatprep.subr.bf16.mxu0 0
    %930 = vmatpush1.bf16.xpose.msra.mxu0 0
    %931 = vmatprep.subr.bf16.mxu0 0
    %932 = vmatpush1.bf16.xpose.msra.mxu0 0
    %933 = vmatprep.subr.bf16.mxu0 0
    %934 = vmatpush1.bf16.xpose.msra.mxu0 0
    %935 = vmatprep.subr.bf16.mxu0 0
    %936 = vmatpush1.bf16.xpose.msra.mxu0 0
    %937 = vmatprep.subr.bf16.mxu0 0
    %938 = vmatpush1.bf16.xpose.msra.mxu0 %v921
    %939 = vmatprep.subr.bf16.mxu0 0
    %940 = vmatpush2.bf16.xpose.msra.mxu0 0
    %941 = vmatprep.subr.bf16.mxu0 0
    %942 = vmatpush2.bf16.xpose.msra.mxu0 0
    %943 = vmatprep.subr.bf16.mxu0 0
    %944 = vmatpush2.bf16.xpose.msra.mxu0 0
    %945 = vmatprep.subr.bf16.mxu0 0
    %946 = vmatpush2.bf16.xpose.msra.mxu0 0
    %947 = vmatprep.subr.bf16.mxu0 0
    %948 = vmatpush2.bf16.xpose.msra.mxu0 0
    %949 = vmatprep.subr.bf16.mxu0 0
    %950 = vmatpush2.bf16.xpose.msra.mxu0 0
    %951 = vmatprep.subr.bf16.mxu0 0
    %952 = vmatpush2.bf16.xpose.msra.mxu0 0
    %953 = vmatprep.subr.bf16.mxu0 0
    %954 = vmatpush2.bf16.xpose.msra.mxu0 0
    %955 = vmatprep.mubr.bf16.mxu0 0
    %956 = vmatmul.mubr.bf16.gmra.mxu0 %v918
    %v957 = vpop.f32.mrf.mxu0
    %v958 = vadd.f32 %v568, %v957
    %v959 = vpop.f32.mrf.mxu0
    %v960 = vpop.f32.mrf.mxu0
    %v961 = vpop.f32.mrf.mxu0
    %962 = vdwg.mxu0
    %v963 = vsel %vm616, %v958, -inf
    %964 = vmax.xlane.f32.xlu0 %v963
    %v965 = vpop.xlane.xlu0 %964
    %v966 = vsub.f32 %v958, %v965
    %v967 = vmul.f32 %v966, 1.442695
    %v968 = vpow.pop %v967
    %v969 = vsel %vm616, %v968, 0.0
    %970 = vadd.xlane.f32.xlu0 %v969
    %v971 = vpop.xlane.xlu0 %970
    %v972 = vpack.c.bf16 %v968, %v968
    %973 = vrot.lane.b32.xlu0 %v627, 32
    %v974 = vpop.permute.xlu0 %973
    %v976 = vsel %vm616, %v972, 0
    %v979 = vsel %vm631, %v974, 0
    %981 = vmatprep.subr.bf16.mxu0 0
    %982 = vmatpush1.bf16.msra.mxu0 0
    %983 = vmatprep.subr.bf16.mxu0 0
    %984 = vmatpush1.bf16.msra.mxu0 0
    %985 = vmatprep.subr.bf16.mxu0 0
    %986 = vmatpush1.bf16.msra.mxu0 0
    %987 = vmatprep.subr.bf16.mxu0 0
    %988 = vmatpush1.bf16.msra.mxu0 0
    %989 = vmatprep.subr.bf16.mxu0 0
    %990 = vmatpush1.bf16.msra.mxu0 0
    %991 = vmatprep.subr.bf16.mxu0 0
    %992 = vmatpush1.bf16.msra.mxu0 0
    %993 = vmatprep.subr.bf16.mxu0 0
    %994 = vmatpush1.bf16.msra.mxu0 0
    %995 = vmatprep.subr.bf16.mxu0 0
    %996 = vmatpush1.bf16.msra.mxu0 %v979
    %997 = vmatprep.subr.bf16.mxu0 0
    %998 = vmatpush2.bf16.msra.mxu0 0
    %999 = vmatprep.subr.bf16.mxu0 0
    %1000 = vmatpush2.bf16.msra.mxu0 0
    %1001 = vmatprep.subr.bf16.mxu0 0
    %1002 = vmatpush2.bf16.msra.mxu0 0
    %1003 = vmatprep.subr.bf16.mxu0 0
    %1004 = vmatpush2.bf16.msra.mxu0 0
    %1005 = vmatprep.subr.bf16.mxu0 0
    %1006 = vmatpush2.bf16.msra.mxu0 0
    %1007 = vmatprep.subr.bf16.mxu0 0
    %1008 = vmatpush2.bf16.msra.mxu0 0
    %1009 = vmatprep.subr.bf16.mxu0 0
    %1010 = vmatpush2.bf16.msra.mxu0 0
    %1011 = vmatprep.subr.bf16.mxu0 0
    %1012 = vmatpush2.bf16.msra.mxu0 0
    %1013 = vmatprep.mubr.bf16.mxu0 0
    %1014 = vmatmul.mubr.bf16.gmra.mxu0 %v976
    %v1015 = vpop.f32.mrf.mxu0
    %v1016 = vadd.f32 0.0, %v1015
    %v1017 = vpop.f32.mrf.mxu0
    %v1018 = vpop.f32.mrf.mxu0
    %v1019 = vpop.f32.mrf.mxu0
    %1020 = vdwg.mxu0
    %v1021 = vrcp.pop %v971
    %v1022 = vmul.f32 %v1016, %v1021
    %1024 = vrot.lane.b32.xlu0 %v1022, 96
    %v1025 = vpop.permute.xlu0 %1024
    %vm1027 = vcmask 1048320
    %1028 = vst.msk [vmem:[#allocation2] sm:$0xff] %vm1027, %v1025
    %v1029 = vpack.c.bf16 %v518, %v518
    %v1030 = vpack.c.bf16 %v520, %v520
    %v1031 = vlaneseq
    %v1032 = vshrl.u32 %v1031, 7
    %v1033 = vsub.s32 1, %v1032
    %v1034 = vrot.slane %v300, %v1033
    %v1036 = vsel %vm569, %v1029, 0
    %v1039 = vsel %vm569, %v1030, 0
    %1041 = vmatprep.subr.bf16.mxu0 0
    %1042 = vmatpush1.bf16.xpose.msra.mxu0 0
    %1043 = vmatprep.subr.bf16.mxu0 0
    %1044 = vmatpush1.bf16.xpose.msra.mxu0 0
    %1045 = vmatprep.subr.bf16.mxu0 0
    %1046 = vmatpush1.bf16.xpose.msra.mxu0 0
    %1047 = vmatprep.subr.bf16.mxu0 0
    %1048 = vmatpush1.bf16.xpose.msra.mxu0 0
    %1049 = vmatprep.subr.bf16.mxu0 0
    %1050 = vmatpush1.bf16.xpose.msra.mxu0 0
    %1051 = vmatprep.subr.bf16.mxu0 0
    %1052 = vmatpush1.bf16.xpose.msra.mxu0 0
    %1053 = vmatprep.subr.bf16.mxu0 0
    %1054 = vmatpush1.bf16.xpose.msra.mxu0 0
    %1055 = vmatprep.subr.bf16.mxu0 0
    %1056 = vmatpush1.bf16.xpose.msra.mxu0 %v1039
    %1057 = vmatprep.subr.bf16.mxu0 0
    %1058 = vmatpush2.bf16.xpose.msra.mxu0 0
    %1059 = vmatprep.subr.bf16.mxu0 0
    %1060 = vmatpush2.bf16.xpose.msra.mxu0 0
    %1061 = vmatprep.subr.bf16.mxu0 0
    %1062 = vmatpush2.bf16.xpose.msra.mxu0 0
    %1063 = vmatprep.subr.bf16.mxu0 0
    %1064 = vmatpush2.bf16.xpose.msra.mxu0 0
    %1065 = vmatprep.subr.bf16.mxu0 0
    %1066 = vmatpush2.bf16.xpose.msra.mxu0 0
    %1067 = vmatprep.subr.bf16.mxu0 0
    %1068 = vmatpush2.bf16.xpose.msra.mxu0 0
    %1069 = vmatprep.subr.bf16.mxu0 0
    %1070 = vmatpush2.bf16.xpose.msra.mxu0 0
    %1071 = vmatprep.subr.bf16.mxu0 0
    %1072 = vmatpush2.bf16.xpose.msra.mxu0 0
    %1073 = vmatprep.mubr.bf16.mxu0 0
    %1074 = vmatmul.mubr.bf16.gmra.mxu0 %v1036
    %v1075 = vpop.f32.mrf.mxu0
    %v1076 = vadd.f32 %v1034, %v1075
    %v1077 = vpop.f32.mrf.mxu0
    %v1078 = vpop.f32.mrf.mxu0
    %v1079 = vpop.f32.mrf.mxu0
    %1080 = vdwg.mxu0
    %v1081 = vsel %vm616, %v1076, -inf
    %1082 = vmax.xlane.f32.xlu0 %v1081
    %v1083 = vpop.xlane.xlu0 %1082
    %v1084 = vsub.f32 %v1076, %v1083
    %v1085 = vmul.f32 %v1084, 1.442695
    %v1086 = vpow.pop %v1085
    %v1087 = vsel %vm616, %v1086, 0.0
    %1088 = vadd.xlane.f32.xlu0 %v1087
    %v1089 = vpop.xlane.xlu0 %1088
    %v1090 = vpack.c.bf16 %v1086, %v1086
    %v1091 = vpack.c.bf16 %v560, %v560
    %v1093 = vsel %vm616, %v1090, 0
    %v1096 = vsel %vm631, %v1091, 0
    %1098 = vmatprep.subr.bf16.mxu0 0
    %1099 = vmatpush1.bf16.msra.mxu0 0
    %1100 = vmatprep.subr.bf16.mxu0 0
    %1101 = vmatpush1.bf16.msra.mxu0 0
    %1102 = vmatprep.subr.bf16.mxu0 0
    %1103 = vmatpush1.bf16.msra.mxu0 0
    %1104 = vmatprep.subr.bf16.mxu0 0
    %1105 = vmatpush1.bf16.msra.mxu0 0
    %1106 = vmatprep.subr.bf16.mxu0 0
    %1107 = vmatpush1.bf16.msra.mxu0 0
    %1108 = vmatprep.subr.bf16.mxu0 0
    %1109 = vmatpush1.bf16.msra.mxu0 0
    %1110 = vmatprep.subr.bf16.mxu0 0
    %1111 = vmatpush1.bf16.msra.mxu0 0
    %1112 = vmatprep.subr.bf16.mxu0 0
    %1113 = vmatpush1.bf16.msra.mxu0 %v1096
    %1114 = vmatprep.subr.bf16.mxu0 0
    %1115 = vmatpush2.bf16.msra.mxu0 0
    %1116 = vmatprep.subr.bf16.mxu0 0
    %1117 = vmatpush2.bf16.msra.mxu0 0
    %1118 = vmatprep.subr.bf16.mxu0 0
    %1119 = vmatpush2.bf16.msra.mxu0 0
    %1120 = vmatprep.subr.bf16.mxu0 0
    %1121 = vmatpush2.bf16.msra.mxu0 0
    %1122 = vmatprep.subr.bf16.mxu0 0
    %1123 = vmatpush2.bf16.msra.mxu0 0
    %1124 = vmatprep.subr.bf16.mxu0 0
    %1125 = vmatpush2.bf16.msra.mxu0 0
    %1126 = vmatprep.subr.bf16.mxu0 0
    %1127 = vmatpush2.bf16.msra.mxu0 0
    %1128 = vmatprep.subr.bf16.mxu0 0
    %1129 = vmatpush2.bf16.msra.mxu0 0
    %1130 = vmatprep.mubr.bf16.mxu0 0
    %1131 = vmatmul.mubr.bf16.gmra.mxu0 %v1093
    %v1132 = vpop.f32.mrf.mxu0
    %v1133 = vadd.f32 0.0, %v1132
    %v1134 = vpop.f32.mrf.mxu0
    %v1135 = vpop.f32.mrf.mxu0
    %v1136 = vpop.f32.mrf.mxu0
    %1137 = vdwg.mxu0
    %v1138 = vrcp.pop %v1089
    %v1139 = vmul.f32 %v1133, %v1138
    %1140 = vst.msk [vmem:[#allocation2 + $0x8] sm:$0xff] %vm569, %v1139
    %1142 = vrot.lane.b32.xlu0 %v1029, 96
    %v1143 = vpop.permute.xlu0 %1142
    %1145 = vrot.lane.b32.xlu0 %v1030, 96
    %v1146 = vpop.permute.xlu0 %1145
    %v1148 = vsel %vm569, %v1143, 0
    %v1151 = vsel %vm569, %v1146, 0
    %1153 = vmatprep.subr.bf16.mxu0 0
    %1154 = vmatpush1.bf16.xpose.msra.mxu0 0
    %1155 = vmatprep.subr.bf16.mxu0 0
    %1156 = vmatpush1.bf16.xpose.msra.mxu0 0
    %1157 = vmatprep.subr.bf16.mxu0 0
    %1158 = vmatpush1.bf16.xpose.msra.mxu0 0
    %1159 = vmatprep.subr.bf16.mxu0 0
    %1160 = vmatpush1.bf16.xpose.msra.mxu0 0
    %1161 = vmatprep.subr.bf16.mxu0 0
    %1162 = vmatpush1.bf16.xpose.msra.mxu0 0
    %1163 = vmatprep.subr.bf16.mxu0 0
    %1164 = vmatpush1.bf16.xpose.msra.mxu0 0
    %1165 = vmatprep.subr.bf16.mxu0 0
    %1166 = vmatpush1.bf16.xpose.msra.mxu0 0
    %1167 = vmatprep.subr.bf16.mxu0 0
    %1168 = vmatpush1.bf16.xpose.msra.mxu0 %v1151
    %1169 = vmatprep.subr.bf16.mxu0 0
    %1170 = vmatpush2.bf16.xpose.msra.mxu0 0
    %1171 = vmatprep.subr.bf16.mxu0 0
    %1172 = vmatpush2.bf16.xpose.msra.mxu0 0
    %1173 = vmatprep.subr.bf16.mxu0 0
    %1174 = vmatpush2.bf16.xpose.msra.mxu0 0
    %1175 = vmatprep.subr.bf16.mxu0 0
    %1176 = vmatpush2.bf16.xpose.msra.mxu0 0
    %1177 = vmatprep.subr.bf16.mxu0 0
    %1178 = vmatpush2.bf16.xpose.msra.mxu0 0
    %1179 = vmatprep.subr.bf16.mxu0 0
    %1180 = vmatpush2.bf16.xpose.msra.mxu0 0
    %1181 = vmatprep.subr.bf16.mxu0 0
    %1182 = vmatpush2.bf16.xpose.msra.mxu0 0
    %1183 = vmatprep.subr.bf16.mxu0 0
    %1184 = vmatpush2.bf16.xpose.msra.mxu0 0
    %1185 = vmatprep.mubr.bf16.mxu0 0
    %1186 = vmatmul.mubr.bf16.gmra.mxu0 %v1148
    %v1187 = vpop.f32.mrf.mxu0
    %v1188 = vadd.f32 %v1034, %v1187
    %v1189 = vpop.f32.mrf.mxu0
    %v1190 = vpop.f32.mrf.mxu0
    %v1191 = vpop.f32.mrf.mxu0
    %1192 = vdwg.mxu0
    %v1193 = vsel %vm616, %v1188, -inf
    %1194 = vmax.xlane.f32.xlu0 %v1193
    %v1195 = vpop.xlane.xlu0 %1194
    %v1196 = vsub.f32 %v1188, %v1195
    %v1197 = vmul.f32 %v1196, 1.442695
    %v1198 = vpow.pop %v1197
    %v1199 = vsel %vm616, %v1198, 0.0
    %1200 = vadd.xlane.f32.xlu0 %v1199
    %v1201 = vpop.xlane.xlu0 %1200
    %v1202 = vpack.c.bf16 %v1198, %v1198
    %1204 = vrot.lane.b32.xlu0 %v1091, 96
    %v1205 = vpop.permute.xlu0 %1204
    %v1207 = vsel %vm616, %v1202, 0
    %v1210 = vsel %vm631, %v1205, 0
    %1212 = vmatprep.subr.bf16.mxu0 0
    %1213 = vmatpush1.bf16.msra.mxu0 0
    %1214 = vmatprep.subr.bf16.mxu0 0
    %1215 = vmatpush1.bf16.msra.mxu0 0
    %1216 = vmatprep.subr.bf16.mxu0 0
    %1217 = vmatpush1.bf16.msra.mxu0 0
    %1218 = vmatprep.subr.bf16.mxu0 0
    %1219 = vmatpush1.bf16.msra.mxu0 0
    %1220 = vmatprep.subr.bf16.mxu0 0
    %1221 = vmatpush1.bf16.msra.mxu0 0
    %1222 = vmatprep.subr.bf16.mxu0 0
    %1223 = vmatpush1.bf16.msra.mxu0 0
    %1224 = vmatprep.subr.bf16.mxu0 0
    %1225 = vmatpush1.bf16.msra.mxu0 0
    %1226 = vmatprep.subr.bf16.mxu0 0
    %1227 = vmatpush1.bf16.msra.mxu0 %v1210
    %1228 = vmatprep.subr.bf16.mxu0 0
    %1229 = vmatpush2.bf16.msra.mxu0 0
    %1230 = vmatprep.subr.bf16.mxu0 0
    %1231 = vmatpush2.bf16.msra.mxu0 0
    %1232 = vmatprep.subr.bf16.mxu0 0
    %1233 = vmatpush2.bf16.msra.mxu0 0
    %1234 = vmatprep.subr.bf16.mxu0 0
    %1235 = vmatpush2.bf16.msra.mxu0 0
    %1236 = vmatprep.subr.bf16.mxu0 0
    %1237 = vmatpush2.bf16.msra.mxu0 0
    %1238 = vmatprep.subr.bf16.mxu0 0
    %1239 = vmatpush2.bf16.msra.mxu0 0
    %1240 = vmatprep.subr.bf16.mxu0 0
    %1241 = vmatpush2.bf16.msra.mxu0 0
    %1242 = vmatprep.subr.bf16.mxu0 0
    %1243 = vmatpush2.bf16.msra.mxu0 0
    %1244 = vmatprep.mubr.bf16.mxu0 0
    %1245 = vmatmul.mubr.bf16.gmra.mxu0 %v1207
    %v1246 = vpop.f32.mrf.mxu0
    %v1247 = vadd.f32 0.0, %v1246
    %v1248 = vpop.f32.mrf.mxu0
    %v1249 = vpop.f32.mrf.mxu0
    %v1250 = vpop.f32.mrf.mxu0
    %1251 = vdwg.mxu0
    %v1252 = vrcp.pop %v1201
    %v1253 = vmul.f32 %v1247, %v1252
    %1255 = vrot.lane.b32.xlu0 %v1253, 32
    %v1256 = vpop.permute.xlu0 %1255
    %1258 = vst.msk [vmem:[#allocation2 + $0x8] sm:$0xff] %vm795, %v1256
    %1259 = vrot.lane.b32.xlu0 %v1029, 64
    %v1260 = vpop.permute.xlu0 %1259
    %1261 = vrot.lane.b32.xlu0 %v1030, 64
    %v1262 = vpop.permute.xlu0 %1261
    %v1264 = vsel %vm569, %v1260, 0
    %v1267 = vsel %vm569, %v1262, 0
    %1269 = vmatprep.subr.bf16.mxu0 0
    %1270 = vmatpush1.bf16.xpose.msra.mxu0 0
    %1271 = vmatprep.subr.bf16.mxu0 0
    %1272 = vmatpush1.bf16.xpose.msra.mxu0 0
    %1273 = vmatprep.subr.bf16.mxu0 0
    %1274 = vmatpush1.bf16.xpose.msra.mxu0 0
    %1275 = vmatprep.subr.bf16.mxu0 0
    %1276 = vmatpush1.bf16.xpose.msra.mxu0 0
    %1277 = vmatprep.subr.bf16.mxu0 0
    %1278 = vmatpush1.bf16.xpose.msra.mxu0 0
    %1279 = vmatprep.subr.bf16.mxu0 0
    %1280 = vmatpush1.bf16.xpose.msra.mxu0 0
    %1281 = vmatprep.subr.bf16.mxu0 0
    %1282 = vmatpush1.bf16.xpose.msra.mxu0 0
    %1283 = vmatprep.subr.bf16.mxu0 0
    %1284 = vmatpush1.bf16.xpose.msra.mxu0 %v1267
    %1285 = vmatprep.subr.bf16.mxu0 0
    %1286 = vmatpush2.bf16.xpose.msra.mxu0 0
    %1287 = vmatprep.subr.bf16.mxu0 0
    %1288 = vmatpush2.bf16.xpose.msra.mxu0 0
    %1289 = vmatprep.subr.bf16.mxu0 0
    %1290 = vmatpush2.bf16.xpose.msra.mxu0 0
    %1291 = vmatprep.subr.bf16.mxu0 0
    %1292 = vmatpush2.bf16.xpose.msra.mxu0 0
    %1293 = vmatprep.subr.bf16.mxu0 0
    %1294 = vmatpush2.bf16.xpose.msra.mxu0 0
    %1295 = vmatprep.subr.bf16.mxu0 0
    %1296 = vmatpush2.bf16.xpose.msra.mxu0 0
    %1297 = vmatprep.subr.bf16.mxu0 0
    %1298 = vmatpush2.bf16.xpose.msra.mxu0 0
    %1299 = vmatprep.subr.bf16.mxu0 0
    %1300 = vmatpush2.bf16.xpose.msra.mxu0 0
    %1301 = vmatprep.mubr.bf16.mxu0 0
    %1302 = vmatmul.mubr.bf16.gmra.mxu0 %v1264
    %v1303 = vpop.f32.mrf.mxu0
    %v1304 = vadd.f32 %v1034, %v1303
    %v1305 = vpop.f32.mrf.mxu0
    %v1306 = vpop.f32.mrf.mxu0
    %v1307 = vpop.f32.mrf.mxu0
    %1308 = vdwg.mxu0
    %v1309 = vsel %vm616, %v1304, -inf
    %1310 = vmax.xlane.f32.xlu0 %v1309
    %v1311 = vpop.xlane.xlu0 %1310
    %v1312 = vsub.f32 %v1304, %v1311
    %v1313 = vmul.f32 %v1312, 1.442695
    %v1314 = vpow.pop %v1313
    %v1315 = vsel %vm616, %v1314, 0.0
    %1316 = vadd.xlane.f32.xlu0 %v1315
    %v1317 = vpop.xlane.xlu0 %1316
    %v1318 = vpack.c.bf16 %v1314, %v1314
    %1319 = vrot.lane.b32.xlu0 %v1091, 64
    %v1320 = vpop.permute.xlu0 %1319
    %v1322 = vsel %vm616, %v1318, 0
    %v1325 = vsel %vm631, %v1320, 0
    %1327 = vmatprep.subr.bf16.mxu0 0
    %1328 = vmatpush1.bf16.msra.mxu0 0
    %1329 = vmatprep.subr.bf16.mxu0 0
    %1330 = vmatpush1.bf16.msra.mxu0 0
    %1331 = vmatprep.subr.bf16.mxu0 0
    %1332 = vmatpush1.bf16.msra.mxu0 0
    %1333 = vmatprep.subr.bf16.mxu0 0
    %1334 = vmatpush1.bf16.msra.mxu0 0
    %1335 = vmatprep.subr.bf16.mxu0 0
    %1336 = vmatpush1.bf16.msra.mxu0 0
    %1337 = vmatprep.subr.bf16.mxu0 0
    %1338 = vmatpush1.bf16.msra.mxu0 0
    %1339 = vmatprep.subr.bf16.mxu0 0
    %1340 = vmatpush1.bf16.msra.mxu0 0
    %1341 = vmatprep.subr.bf16.mxu0 0
    %1342 = vmatpush1.bf16.msra.mxu0 %v1325
    %1343 = vmatprep.subr.bf16.mxu0 0
    %1344 = vmatpush2.bf16.msra.mxu0 0
    %1345 = vmatprep.subr.bf16.mxu0 0
    %1346 = vmatpush2.bf16.msra.mxu0 0
    %1347 = vmatprep.subr.bf16.mxu0 0
    %1348 = vmatpush2.bf16.msra.mxu0 0
    %1349 = vmatprep.subr.bf16.mxu0 0
    %1350 = vmatpush2.bf16.msra.mxu0 0
    %1351 = vmatprep.subr.bf16.mxu0 0
    %1352 = vmatpush2.bf16.msra.mxu0 0
    %1353 = vmatprep.subr.bf16.mxu0 0
    %1354 = vmatpush2.bf16.msra.mxu0 0
    %1355 = vmatprep.subr.bf16.mxu0 0
    %1356 = vmatpush2.bf16.msra.mxu0 0
    %1357 = vmatprep.subr.bf16.mxu0 0
    %1358 = vmatpush2.bf16.msra.mxu0 0
    %1359 = vmatprep.mubr.bf16.mxu0 0
    %1360 = vmatmul.mubr.bf16.gmra.mxu0 %v1322
    %v1361 = vpop.f32.mrf.mxu0
    %v1362 = vadd.f32 0.0, %v1361
    %v1363 = vpop.f32.mrf.mxu0
    %v1364 = vpop.f32.mrf.mxu0
    %v1365 = vpop.f32.mrf.mxu0
    %1366 = vdwg.mxu0
    %v1367 = vrcp.pop %v1317
    %v1368 = vmul.f32 %v1362, %v1367
    %1370 = vrot.lane.b32.xlu0 %v1368, 64
    %v1371 = vpop.permute.xlu0 %1370
    %1373 = vst.msk [vmem:[#allocation2 + $0x8] sm:$0xff] %vm911, %v1371
    %1374 = vrot.lane.b32.xlu0 %v1029, 32
    %v1375 = vpop.permute.xlu0 %1374
    %1376 = vrot.lane.b32.xlu0 %v1030, 32
    %v1377 = vpop.permute.xlu0 %1376
    %v1379 = vsel %vm569, %v1375, 0
    %v1382 = vsel %vm569, %v1377, 0
    %1384 = vmatprep.subr.bf16.mxu0 0
    %1385 = vmatpush1.bf16.xpose.msra.mxu0 0
    %1386 = vmatprep.subr.bf16.mxu0 0
    %1387 = vmatpush1.bf16.xpose.msra.mxu0 0
    %1388 = vmatprep.subr.bf16.mxu0 0
    %1389 = vmatpush1.bf16.xpose.msra.mxu0 0
    %1390 = vmatprep.subr.bf16.mxu0 0
    %1391 = vmatpush1.bf16.xpose.msra.mxu0 0
    %1392 = vmatprep.subr.bf16.mxu0 0
    %1393 = vmatpush1.bf16.xpose.msra.mxu0 0
    %1394 = vmatprep.subr.bf16.mxu0 0
    %1395 = vmatpush1.bf16.xpose.msra.mxu0 0
    %1396 = vmatprep.subr.bf16.mxu0 0
    %1397 = vmatpush1.bf16.xpose.msra.mxu0 0
    %1398 = vmatprep.subr.bf16.mxu0 0
    %1399 = vmatpush1.bf16.xpose.msra.mxu0 %v1382
    %1400 = vmatprep.subr.bf16.mxu0 0
    %1401 = vmatpush2.bf16.xpose.msra.mxu0 0
    %1402 = vmatprep.subr.bf16.mxu0 0
    %1403 = vmatpush2.bf16.xpose.msra.mxu0 0
    %1404 = vmatprep.subr.bf16.mxu0 0
    %1405 = vmatpush2.bf16.xpose.msra.mxu0 0
    %1406 = vmatprep.subr.bf16.mxu0 0
    %1407 = vmatpush2.bf16.xpose.msra.mxu0 0
    %1408 = vmatprep.subr.bf16.mxu0 0
    %1409 = vmatpush2.bf16.xpose.msra.mxu0 0
    %1410 = vmatprep.subr.bf16.mxu0 0
    %1411 = vmatpush2.bf16.xpose.msra.mxu0 0
    %1412 = vmatprep.subr.bf16.mxu0 0
    %1413 = vmatpush2.bf16.xpose.msra.mxu0 0
    %1414 = vmatprep.subr.bf16.mxu0 0
    %1415 = vmatpush2.bf16.xpose.msra.mxu0 0
    %1416 = vmatprep.mubr.bf16.mxu0 0
    %1417 = vmatmul.mubr.bf16.gmra.mxu0 %v1379
    %v1418 = vpop.f32.mrf.mxu0
    %v1419 = vadd.f32 %v1034, %v1418
    %v1420 = vpop.f32.mrf.mxu0
    %v1421 = vpop.f32.mrf.mxu0
    %v1422 = vpop.f32.mrf.mxu0
    %1423 = vdwg.mxu0
    %v1424 = vsel %vm616, %v1419, -inf
    %1425 = vmax.xlane.f32.xlu0 %v1424
    %v1426 = vpop.xlane.xlu0 %1425
    %v1427 = vsub.f32 %v1419, %v1426
    %v1428 = vmul.f32 %v1427, 1.442695
    %v1429 = vpow.pop %v1428
    %v1430 = vsel %vm616, %v1429, 0.0
    %1431 = vadd.xlane.f32.xlu0 %v1430
    %v1432 = vpop.xlane.xlu0 %1431
    %v1433 = vpack.c.bf16 %v1429, %v1429
    %1434 = vrot.lane.b32.xlu0 %v1091, 32
    %v1435 = vpop.permute.xlu0 %1434
    %v1437 = vsel %vm616, %v1433, 0
    %v1440 = vsel %vm631, %v1435, 0
    %1442 = vmatprep.subr.bf16.mxu0 0
    %1443 = vmatpush1.bf16.msra.mxu0 0
    %1444 = vmatprep.subr.bf16.mxu0 0
    %1445 = vmatpush1.bf16.msra.mxu0 0
    %1446 = vmatprep.subr.bf16.mxu0 0
    %1447 = vmatpush1.bf16.msra.mxu0 0
    %1448 = vmatprep.subr.bf16.mxu0 0
    %1449 = vmatpush1.bf16.msra.mxu0 0
    %1450 = vmatprep.subr.bf16.mxu0 0
    %1451 = vmatpush1.bf16.msra.mxu0 0
    %1452 = vmatprep.subr.bf16.mxu0 0
    %1453 = vmatpush1.bf16.msra.mxu0 0
    %1454 = vmatprep.subr.bf16.mxu0 0
    %1455 = vmatpush1.bf16.msra.mxu0 0
    %1456 = vmatprep.subr.bf16.mxu0 0
    %1457 = vmatpush1.bf16.msra.mxu0 %v1440
    %1458 = vmatprep.subr.bf16.mxu0 0
    %1459 = vmatpush2.bf16.msra.mxu0 0
    %1460 = vmatprep.subr.bf16.mxu0 0
    %1461 = vmatpush2.bf16.msra.mxu0 0
    %1462 = vmatprep.subr.bf16.mxu0 0
    %1463 = vmatpush2.bf16.msra.mxu0 0
    %1464 = vmatprep.subr.bf16.mxu0 0
    %1465 = vmatpush2.bf16.msra.mxu0 0
    %1466 = vmatprep.subr.bf16.mxu0 0
    %1467 = vmatpush2.bf16.msra.mxu0 0
    %1468 = vmatprep.subr.bf16.mxu0 0
    %1469 = vmatpush2.bf16.msra.mxu0 0
    %1470 = vmatprep.subr.bf16.mxu0 0
    %1471 = vmatpush2.bf16.msra.mxu0 0
    %1472 = vmatprep.subr.bf16.mxu0 0
    %1473 = vmatpush2.bf16.msra.mxu0 0
    %1474 = vmatprep.mubr.bf16.mxu0 0
    %1475 = vmatmul.mubr.bf16.gmra.mxu0 %v1437
    %v1476 = vpop.f32.mrf.mxu0
    %v1477 = vadd.f32 0.0, %v1476
    %v1478 = vpop.f32.mrf.mxu0
    %v1479 = vpop.f32.mrf.mxu0
    %v1480 = vpop.f32.mrf.mxu0
    %1481 = vdwg.mxu0
    %v1482 = vrcp.pop %v1432
    %v1483 = vmul.f32 %v1477, %v1482
    %1485 = vrot.lane.b32.xlu0 %v1483, 96
    %v1486 = vpop.permute.xlu0 %1485
    %1488 = vst.msk [vmem:[#allocation2 + $0x8] sm:$0xff] %vm1027, %v1486
    %v1489 = vld [vmem:[#allocation2] sm:$0xff]
    %v1490 = vld [vmem:[#allocation2 + $0x8] sm:$0xff]
    %v1491 = vpack.c.bf16 %v1490, %v1489
    %v1492 = vld [vmem:[#allocation5] sm:$0xf]
    %v1493 = vld [vmem:[#allocation5 + $0x4] sm:$0xf]
    %v1494 = vld [vmem:[#allocation5 + $0x8] sm:$0xf]
    %v1495 = vld [vmem:[#allocation5 + $0xc] sm:$0xf]
    %v1496 = vld [vmem:[#allocation5 + $0x10] sm:$0xf]
    %v1497 = vld [vmem:[#allocation5 + $0x14] sm:$0xf]
    %v1498 = vld [vmem:[#allocation5 + $0x18] sm:$0xf]
    %v1499 = vld [vmem:[#allocation5 + $0x1c] sm:$0xf]
    %v1500 = vld [vmem:[#allocation5 + $0x20] sm:$0xf]
    %v1501 = vld [vmem:[#allocation5 + $0x24] sm:$0xf]
    %v1502 = vld [vmem:[#allocation5 + $0x28] sm:$0xf]
    %v1503 = vld [vmem:[#allocation5 + $0x2c] sm:$0xf]
    %v1504 = vld [vmem:[#allocation5 + $0x30] sm:$0xf]
    %v1505 = vld [vmem:[#allocation5 + $0x34] sm:$0xf]
    %v1506 = vld [vmem:[#allocation5 + $0x38] sm:$0xf]
    %v1507 = vld [vmem:[#allocation5 + $0x3c] sm:$0xf]
    %v1508 = vld [vmem:[%s15] sm:$0x1]
    %v1510 = vlaneseq
    %v1511 = vshrl.u32 %v1510, 7
    %v1512 = vsub.s32 0, %v1511
    %v1513 = vrot.slane %v1508, %v1512
    %v1531 = vunpack.c.l.b16 %v1492
    %v1532 = vunpack.c.l.b16 %v1493
    %v1533 = vunpack.c.l.b16 %v1494
    %v1534 = vunpack.c.l.b16 %v1495
    %v1535 = vunpack.c.l.b16 %v1496
    %v1536 = vunpack.c.l.b16 %v1497
    %v1537 = vunpack.c.l.b16 %v1498
    %v1538 = vunpack.c.l.b16 %v1499
    %v1539 = vunpack.c.l.b16 %v1500
    %v1540 = vunpack.c.l.b16 %v1501
    %v1541 = vunpack.c.l.b16 %v1502
    %v1542 = vunpack.c.l.b16 %v1503
    %v1543 = vunpack.c.l.b16 %v1504
    %v1544 = vunpack.c.l.b16 %v1505
    %v1545 = vunpack.c.l.b16 %v1506
    %v1546 = vunpack.c.l.b16 %v1507
    %v1547 = vpack.c.b16 %v1532, %v1531
    %v1548 = vpack.c.b16 %v1534, %v1533
    %v1549 = vpack.c.b16 %v1536, %v1535
    %v1550 = vpack.c.b16 %v1538, %v1537
    %v1551 = vpack.c.b16 %v1540, %v1539
    %v1552 = vpack.c.b16 %v1542, %v1541
    %v1553 = vpack.c.b16 %v1544, %v1543
    %v1554 = vpack.c.b16 %v1546, %v1545
    %1563 = vmatprep.subr.bf16.mxu0 0
    %1564 = vmatpush1.bf16.msra.mxu0 %v1554
    %1565 = vmatprep.subr.bf16.mxu0 0
    %1566 = vmatpush1.bf16.msra.mxu0 %v1553
    %1567 = vmatprep.subr.bf16.mxu0 0
    %1568 = vmatpush1.bf16.msra.mxu0 %v1552
    %1569 = vmatprep.subr.bf16.mxu0 0
    %1570 = vmatpush1.bf16.msra.mxu0 %v1551
    %1571 = vmatprep.subr.bf16.mxu0 0
    %1572 = vmatpush1.bf16.msra.mxu0 %v1550
    %1573 = vmatprep.subr.bf16.mxu0 0
    %1574 = vmatpush1.bf16.msra.mxu0 %v1549
    %1575 = vmatprep.subr.bf16.mxu0 0
    %1576 = vmatpush1.bf16.msra.mxu0 %v1548
    %1577 = vmatprep.subr.bf16.mxu0 0
    %1578 = vmatpush1.bf16.msra.mxu0 %v1547
    %1579 = vmatprep.subr.bf16.mxu0 0
    %1580 = vmatpush2.bf16.msra.mxu0 0
    %1581 = vmatprep.subr.bf16.mxu0 0
    %1582 = vmatpush2.bf16.msra.mxu0 0
    %1583 = vmatprep.subr.bf16.mxu0 0
    %1584 = vmatpush2.bf16.msra.mxu0 0
    %1585 = vmatprep.subr.bf16.mxu0 0
    %1586 = vmatpush2.bf16.msra.mxu0 0
    %1587 = vmatprep.subr.bf16.mxu0 0
    %1588 = vmatpush2.bf16.msra.mxu0 0
    %1589 = vmatprep.subr.bf16.mxu0 0
    %1590 = vmatpush2.bf16.msra.mxu0 0
    %1591 = vmatprep.subr.bf16.mxu0 0
    %1592 = vmatpush2.bf16.msra.mxu0 0
    %1593 = vmatprep.subr.bf16.mxu0 0
    %1594 = vmatpush2.bf16.msra.mxu0 0
    %1595 = vmatprep.mubr.bf16.mxu0 0
    %1596 = vmatmul.mubr.bf16.gmra.mxu0 %v1491
    %v1597 = vpop.f32.mrf.mxu0
    %v1598 = vadd.f32 %v1513, %v1597
    %v1599 = vpop.f32.mrf.mxu0
    %v1600 = vpop.f32.mrf.mxu0
    %v1601 = vadd.f32 %v1513, %v1600
    %v1602 = vpop.f32.mrf.mxu0
    %1603 = vdwg.mxu0
    %v1604 = vadd.f32 %v298, %v1598
    %v1605 = vadd.f32 %v299, %v1601
    %1606 = vadd.xlane.f32.xlu0 %v1604
    %v1607 = vpop.xlane.xlu0 %1606
    %1608 = vadd.xlane.f32.xlu0 %v1605
    %v1609 = vpop.xlane.xlu0 %1608
    %v1610 = vmul.f32 %v1607, %v263
    %v1611 = vmul.f32 %v1609, %v263
    %v1612 = vsub.f32 %v1604, %v1610
    %v1613 = vsub.f32 %v1605, %v1611
    %v1614 = vmul.f32 %v1612, %v1612
    %v1615 = vmul.f32 %v1613, %v1613
    %1616 = vadd.xlane.f32.xlu0 %v1614
    %v1617 = vpop.xlane.xlu0 %1616
    %1618 = vadd.xlane.f32.xlu0 %v1615
    %v1619 = vpop.xlane.xlu0 %1618
    %v1620 = vmul.f32 %v1617, %v263
    %v1621 = vmul.f32 %v1619, %v263
    %v1622 = vadd.f32 %v1620, 1e-05
    %v1623 = vadd.f32 %v1621, 1e-05
    %v1624 = vrsqrt.pop %v1622
    %v1625 = vrsqrt.pop %v1623
    %v1626 = vmul.f32 %v1612, %v1624
    %v1627 = vmul.f32 %v1613, %v1625
    %v1628 = vld [vmem:[%s17] sm:$0x1]
    %v1630 = vlaneseq
    %v1631 = vshrl.u32 %v1630, 7
    %v1632 = vsub.s32 0, %v1631
    %v1633 = vrot.slane %v1628, %v1632
    %v1635 = vmul.f32 %v1626, %v1633
    %v1636 = vmul.f32 %v1627, %v1633
    %v1637 = vld [vmem:[%s19] sm:$0x1]
    %v1639 = vlaneseq
    %v1640 = vshrl.u32 %v1639, 7
    %v1641 = vsub.s32 0, %v1640
    %v1642 = vrot.slane %v1637, %v1641
    %v1644 = vadd.f32 %v1635, %v1642
    %v1645 = vadd.f32 %v1636, %v1642
    %v1646 = vpack.c.bf16 %v1645, %v1644
    %v1647 = vld [vmem:[#allocation7] sm:$0xff]
    %v1648 = vld [vmem:[#allocation7 + $0x8] sm:$0xff]
    %v1649 = vld [vmem:[#allocation7 + $0x10] sm:$0xff]
    %v1650 = vld [vmem:[#allocation7 + $0x18] sm:$0xff]
    %v1651 = vld [vmem:[#allocation7 + $0x20] sm:$0xff]
    %v1652 = vld [vmem:[#allocation7 + $0x28] sm:$0xff]
    %v1653 = vld [vmem:[#allocation7 + $0x30] sm:$0xff]
    %v1654 = vld [vmem:[#allocation7 + $0x38] sm:$0xff]
    %v1655 = vld [vmem:[#allocation7 + $0x40] sm:$0xff]
    %v1656 = vld [vmem:[#allocation7 + $0x48] sm:$0xff]
    %v1657 = vld [vmem:[#allocation7 + $0x50] sm:$0xff]
    %v1658 = vld [vmem:[#allocation7 + $0x58] sm:$0xff]
    %v1659 = vld [vmem:[#allocation7 + $0x60] sm:$0xff]
    %v1660 = vld [vmem:[#allocation7 + $0x68] sm:$0xff]
    %v1661 = vld [vmem:[#allocation7 + $0x70] sm:$0xff]
    %v1662 = vld [vmem:[#allocation7 + $0x78] sm:$0xff]
    %v1663 = vld [vmem:[%s23] sm:$0x3]
    %v1665 = vlaneseq
    %v1666 = vshrl.u32 %v1665, 7
    %v1667 = vsub.s32 0, %v1666
    %v1668 = vrot.slane %v1663, %v1667
    %v1669 = vlaneseq
    %v1670 = vshrl.u32 %v1669, 7
    %v1671 = vsub.s32 1, %v1670
    %v1672 = vrot.slane %v1663, %v1671
    %v1691 = vunpack.c.l.b16 %v1647
    %v1692 = vunpack.c.h.b16 %v1647
    %v1693 = vunpack.c.l.b16 %v1648
    %v1694 = vunpack.c.h.b16 %v1648
    %v1695 = vunpack.c.l.b16 %v1649
    %v1696 = vunpack.c.h.b16 %v1649
    %v1697 = vunpack.c.l.b16 %v1650
    %v1698 = vunpack.c.h.b16 %v1650
    %v1699 = vunpack.c.l.b16 %v1651
    %v1700 = vunpack.c.h.b16 %v1651
    %v1701 = vunpack.c.l.b16 %v1652
    %v1702 = vunpack.c.h.b16 %v1652
    %v1703 = vunpack.c.l.b16 %v1653
    %v1704 = vunpack.c.h.b16 %v1653
    %v1705 = vunpack.c.l.b16 %v1654
    %v1706 = vunpack.c.h.b16 %v1654
    %v1707 = vunpack.c.l.b16 %v1655
    %v1708 = vunpack.c.h.b16 %v1655
    %v1709 = vunpack.c.l.b16 %v1656
    %v1710 = vunpack.c.h.b16 %v1656
    %v1711 = vunpack.c.l.b16 %v1657
    %v1712 = vunpack.c.h.b16 %v1657
    %v1713 = vunpack.c.l.b16 %v1658
    %v1714 = vunpack.c.h.b16 %v1658
    %v1715 = vunpack.c.l.b16 %v1659
    %v1716 = vunpack.c.h.b16 %v1659
    %v1717 = vunpack.c.l.b16 %v1660
    %v1718 = vunpack.c.h.b16 %v1660
    %v1719 = vunpack.c.l.b16 %v1661
    %v1720 = vunpack.c.h.b16 %v1661
    %v1721 = vunpack.c.l.b16 %v1662
    %v1722 = vunpack.c.h.b16 %v1662
    %v1723 = vpack.c.b16 %v1693, %v1691
    %v1724 = vpack.c.b16 %v1694, %v1692
    %v1725 = vpack.c.b16 %v1697, %v1695
    %v1726 = vpack.c.b16 %v1698, %v1696
    %v1727 = vpack.c.b16 %v1701, %v1699
    %v1728 = vpack.c.b16 %v1702, %v1700
    %v1729 = vpack.c.b16 %v1705, %v1703
    %v1730 = vpack.c.b16 %v1706, %v1704
    %v1731 = vpack.c.b16 %v1709, %v1707
    %v1732 = vpack.c.b16 %v1710, %v1708
    %v1733 = vpack.c.b16 %v1713, %v1711
    %v1734 = vpack.c.b16 %v1714, %v1712
    %v1735 = vpack.c.b16 %v1717, %v1715
    %v1736 = vpack.c.b16 %v1718, %v1716
    %v1737 = vpack.c.b16 %v1721, %v1719
    %v1738 = vpack.c.b16 %v1722, %v1720
    %1755 = vmatprep.subr.bf16.mxu0 %v1738
    %1756 = vmatpush1.bf16.msra.mxu0 %v1737
    %1757 = vmatprep.subr.bf16.mxu0 %v1736
    %1758 = vmatpush1.bf16.msra.mxu0 %v1735
    %1759 = vmatprep.subr.bf16.mxu0 %v1734
    %1760 = vmatpush1.bf16.msra.mxu0 %v1733
    %1761 = vmatprep.subr.bf16.mxu0 %v1732
    %1762 = vmatpush1.bf16.msra.mxu0 %v1731
    %1763 = vmatprep.subr.bf16.mxu0 %v1730
    %1764 = vmatpush1.bf16.msra.mxu0 %v1729
    %1765 = vmatprep.subr.bf16.mxu0 %v1728
    %1766 = vmatpush1.bf16.msra.mxu0 %v1727
    %1767 = vmatprep.subr.bf16.mxu0 %v1726
    %1768 = vmatpush1.bf16.msra.mxu0 %v1725
    %1769 = vmatprep.subr.bf16.mxu0 %v1724
    %1770 = vmatpush1.bf16.msra.mxu0 %v1723
    %1771 = vmatprep.subr.bf16.mxu0 0
    %1772 = vmatpush2.bf16.msra.mxu0 0
    %1773 = vmatprep.subr.bf16.mxu0 0
    %1774 = vmatpush2.bf16.msra.mxu0 0
    %1775 = vmatprep.subr.bf16.mxu0 0
    %1776 = vmatpush2.bf16.msra.mxu0 0
    %1777 = vmatprep.subr.bf16.mxu0 0
    %1778 = vmatpush2.bf16.msra.mxu0 0
    %1779 = vmatprep.subr.bf16.mxu0 0
    %1780 = vmatpush2.bf16.msra.mxu0 0
    %1781 = vmatprep.subr.bf16.mxu0 0
    %1782 = vmatpush2.bf16.msra.mxu0 0
    %1783 = vmatprep.subr.bf16.mxu0 0
    %1784 = vmatpush2.bf16.msra.mxu0 0
    %1785 = vmatprep.subr.bf16.mxu0 0
    %1786 = vmatpush2.bf16.msra.mxu0 0
    %1787 = vmatprep.mubr.bf16.mxu0 0
    %1788 = vmatmul.mubr.bf16.gmra.mxu0 %v1646
    %v1789 = vpop.f32.mrf.mxu0
    %v1790 = vadd.f32 %v1668, %v1789
    %v1791 = vpop.f32.mrf.mxu0
    %v1792 = vadd.f32 %v1672, %v1791
    %v1793 = vpop.f32.mrf.mxu0
    %v1794 = vadd.f32 %v1668, %v1793
    %v1795 = vpop.f32.mrf.mxu0
    %v1796 = vadd.f32 %v1672, %v1795
    %1797 = vdwg.mxu0
    %v1798 = vmul.f32 %v1790, %v1790
    %v1799 = vmul.f32 %v1792, %v1792
    %v1800 = vmul.f32 %v1794, %v1794
    %v1801 = vmul.f32 %v1796, %v1796
    %v1802 = vmul.f32 %v1790, %v1798
    %v1803 = vmul.f32 %v1792, %v1799
    %v1804 = vmul.f32 %v1794, %v1800
    %v1805 = vmul.f32 %v1796, %v1801
    %v1806 = vmul.f32 %v1802, 0.044715
    %v1807 = vmul.f32 %v1803, 0.044715
    %v1808 = vmul.f32 %v1804, 0.044715
    %v1809 = vmul.f32 %v1805, 0.044715
    %v1810 = vadd.f32 %v1790, %v1806
    %v1811 = vadd.f32 %v1792, %v1807
    %v1812 = vadd.f32 %v1794, %v1808
    %v1813 = vadd.f32 %v1796, %v1809
    %v1814 = vmul.f32 %v1810, 0.7978846
    %v1815 = vmul.f32 %v1811, 0.7978846
    %v1816 = vmul.f32 %v1812, 0.7978846
    %v1817 = vmul.f32 %v1813, 0.7978846
    %v1818 = vtanh.pop %v1814
    %v1819 = vtanh.pop %v1815
    %v1820 = vtanh.pop %v1816
    %v1821 = vtanh.pop %v1817
    %v1822 = vadd.f32 %v1818, 1.0
    %v1823 = vadd.f32 %v1819, 1.0
    %v1824 = vadd.f32 %v1820, 1.0
    %v1825 = vadd.f32 %v1821, 1.0
    %v1826 = vmul.f32 %v1822, 0.5
    %v1827 = vmul.f32 %v1823, 0.5
    %v1828 = vmul.f32 %v1824, 0.5
    %v1829 = vmul.f32 %v1825, 0.5
    %v1830 = vmul.f32 %v1790, %v1826
    %v1831 = vmul.f32 %v1792, %v1827
    %v1832 = vmul.f32 %v1794, %v1828
    %v1833 = vmul.f32 %v1796, %v1829
    %v1834 = vpack.c.bf16 %v1832, %v1830
    %v1835 = vpack.c.bf16 %v1833, %v1831
    %v1836 = vld [vmem:[#allocation8] sm:$0xf]
    %v1837 = vld [vmem:[#allocation8 + $0x4] sm:$0xf]
    %v1838 = vld [vmem:[#allocation8 + $0x8] sm:$0xf]
    %v1839 = vld [vmem:[#allocation8 + $0xc] sm:$0xf]
    %v1840 = vld [vmem:[#allocation8 + $0x10] sm:$0xf]
    %v1841 = vld [vmem:[#allocation8 + $0x14] sm:$0xf]
    %v1842 = vld [vmem:[#allocation8 + $0x18] sm:$0xf]
    %v1843 = vld [vmem:[#allocation8 + $0x1c] sm:$0xf]
    %v1844 = vld [vmem:[#allocation8 + $0x20] sm:$0xf]
    %v1845 = vld [vmem:[#allocation8 + $0x24] sm:$0xf]
    %v1846 = vld [vmem:[#allocation8 + $0x28] sm:$0xf]
    %v1847 = vld [vmem:[#allocation8 + $0x2c] sm:$0xf]
    %v1848 = vld [vmem:[#allocation8 + $0x30] sm:$0xf]
    %v1849 = vld [vmem:[#allocation8 + $0x34] sm:$0xf]
    %v1850 = vld [vmem:[#allocation8 + $0x38] sm:$0xf]
    %v1851 = vld [vmem:[#allocation8 + $0x3c] sm:$0xf]
    %v1852 = vld [vmem:[#allocation8 + $0x40] sm:$0xf]
    %v1853 = vld [vmem:[#allocation8 + $0x44] sm:$0xf]
    %v1854 = vld [vmem:[#allocation8 + $0x48] sm:$0xf]
    %v1855 = vld [vmem:[#allocation8 + $0x4c] sm:$0xf]
    %v1856 = vld [vmem:[#allocation8 + $0x50] sm:$0xf]
    %v1857 = vld [vmem:[#allocation8 + $0x54] sm:$0xf]
    %v1858 = vld [vmem:[#allocation8 + $0x58] sm:$0xf]
    %v1859 = vld [vmem:[#allocation8 + $0x5c] sm:$0xf]
    %v1860 = vld [vmem:[#allocation8 + $0x60] sm:$0xf]
    %v1861 = vld [vmem:[#allocation8 + $0x64] sm:$0xf]
    %v1862 = vld [vmem:[#allocation8 + $0x68] sm:$0xf]
    %v1863 = vld [vmem:[#allocation8 + $0x6c] sm:$0xf]
    %v1864 = vld [vmem:[#allocation8 + $0x70] sm:$0xf]
    %v1865 = vld [vmem:[#allocation8 + $0x74] sm:$0xf]
    %v1866 = vld [vmem:[#allocation8 + $0x78] sm:$0xf]
    %v1867 = vld [vmem:[#allocation8 + $0x7c] sm:$0xf]
    %v1868 = vld [vmem:[%s27] sm:$0x1]
    %v1870 = vlaneseq
    %v1871 = vshrl.u32 %v1870, 7
    %v1872 = vsub.s32 0, %v1871
    %v1873 = vrot.slane %v1868, %v1872
    %v1907 = vunpack.c.l.b16 %v1836
    %v1908 = vunpack.c.l.b16 %v1837
    %v1909 = vunpack.c.l.b16 %v1838
    %v1910 = vunpack.c.l.b16 %v1839
    %v1911 = vunpack.c.l.b16 %v1840
    %v1912 = vunpack.c.l.b16 %v1841
    %v1913 = vunpack.c.l.b16 %v1842
    %v1914 = vunpack.c.l.b16 %v1843
    %v1915 = vunpack.c.l.b16 %v1844
    %v1916 = vunpack.c.l.b16 %v1845
    %v1917 = vunpack.c.l.b16 %v1846
    %v1918 = vunpack.c.l.b16 %v1847
    %v1919 = vunpack.c.l.b16 %v1848
    %v1920 = vunpack.c.l.b16 %v1849
    %v1921 = vunpack.c.l.b16 %v1850
    %v1922 = vunpack.c.l.b16 %v1851
    %v1923 = vunpack.c.l.b16 %v1852
    %v1924 = vunpack.c.l.b16 %v1853
    %v1925 = vunpack.c.l.b16 %v1854
    %v1926 = vunpack.c.l.b16 %v1855
    %v1927 = vunpack.c.l.b16 %v1856
    %v1928 = vunpack.c.l.b16 %v1857
    %v1929 = vunpack.c.l.b16 %v1858
    %v1930 = vunpack.c.l.b16 %v1859
    %v1931 = vunpack.c.l.b16 %v1860
    %v1932 = vunpack.c.l.b16 %v1861
    %v1933 = vunpack.c.l.b16 %v1862
    %v1934 = vunpack.c.l.b16 %v1863
    %v1935 = vunpack.c.l.b16 %v1864
    %v1936 = vunpack.c.l.b16 %v1865
    %v1937 = vunpack.c.l.b16 %v1866
    %v1938 = vunpack.c.l.b16 %v1867
    %v1939 = vpack.c.b16 %v1908, %v1907
    %v1940 = vpack.c.b16 %v1910, %v1909
    %v1941 = vpack.c.b16 %v1912, %v1911
    %v1942 = vpack.c.b16 %v1914, %v1913
    %v1943 = vpack.c.b16 %v1916, %v1915
    %v1944 = vpack.c.b16 %v1918, %v1917
    %v1945 = vpack.c.b16 %v1920, %v1919
    %v1946 = vpack.c.b16 %v1922, %v1921
    %v1947 = vpack.c.b16 %v1924, %v1923
    %v1948 = vpack.c.b16 %v1926, %v1925
    %v1949 = vpack.c.b16 %v1928, %v1927
    %v1950 = vpack.c.b16 %v1930, %v1929
    %v1951 = vpack.c.b16 %v1932, %v1931
    %v1952 = vpack.c.b16 %v1934, %v1933
    %v1953 = vpack.c.b16 %v1936, %v1935
    %v1954 = vpack.c.b16 %v1938, %v1937
    %1971 = vmatprep.subr.bf16.mxu0 0
    %1972 = vmatpush1.bf16.msra.mxu0 %v1946
    %1973 = vmatprep.subr.bf16.mxu0 0
    %1974 = vmatpush1.bf16.msra.mxu0 %v1945
    %1975 = vmatprep.subr.bf16.mxu0 0
    %1976 = vmatpush1.bf16.msra.mxu0 %v1944
    %1977 = vmatprep.subr.bf16.mxu0 0
    %1978 = vmatpush1.bf16.msra.mxu0 %v1943
    %1979 = vmatprep.subr.bf16.mxu0 0
    %1980 = vmatpush1.bf16.msra.mxu0 %v1942
    %1981 = vmatprep.subr.bf16.mxu0 0
    %1982 = vmatpush1.bf16.msra.mxu0 %v1941
    %1983 = vmatprep.subr.bf16.mxu0 0
    %1984 = vmatpush1.bf16.msra.mxu0 %v1940
    %1985 = vmatprep.subr.bf16.mxu0 0
    %1986 = vmatpush1.bf16.msra.mxu0 %v1939
    %1987 = vmatprep.subr.bf16.mxu0 0
    %1988 = vmatpush2.bf16.msra.mxu0 %v1954
    %1989 = vmatprep.subr.bf16.mxu0 0
    %1990 = vmatpush2.bf16.msra.mxu0 %v1953
    %1991 = vmatprep.subr.bf16.mxu0 0
    %1992 = vmatpush2.bf16.msra.mxu0 %v1952
    %1993 = vmatprep.subr.bf16.mxu0 0
    %1994 = vmatpush2.bf16.msra.mxu0 %v1951
    %1995 = vmatprep.subr.bf16.mxu0 0
    %1996 = vmatpush2.bf16.msra.mxu0 %v1950
    %1997 = vmatprep.subr.bf16.mxu0 0
    %1998 = vmatpush2.bf16.msra.mxu0 %v1949
    %1999 = vmatprep.subr.bf16.mxu0 0
    %2000 = vmatpush2.bf16.msra.mxu0 %v1948
    %2001 = vmatprep.subr.bf16.mxu0 0
    %2002 = vmatpush2.bf16.msra.mxu0 %v1947
    %2003 = vmatprep.mubr.bf16.mxu0 %v1835
    %2004 = vmatmul.mubr.bf16.gmra.mxu0 %v1834
    %v2005 = vpop.f32.mrf.mxu0
    %v2006 = vadd.f32 %v1873, %v2005
    %v2007 = vpop.f32.mrf.mxu0
    %v2008 = vpop.f32.mrf.mxu0
    %v2009 = vadd.f32 %v1873, %v2008
    %v2010 = vpop.f32.mrf.mxu0
    %2011 = vdwg.mxu0
    %v2012 = vadd.f32 %v1644, %v2006
    %v2013 = vadd.f32 %v1645, %v2009
    %2014 = vadd.xlane.f32.xlu0 %v2012
    %v2015 = vpop.xlane.xlu0 %2014
    %2016 = vadd.xlane.f32.xlu0 %v2013
    %v2017 = vpop.xlane.xlu0 %2016
    %v2018 = vmul.f32 %v2015, %v263
    %v2019 = vmul.f32 %v2017, %v263
    %v2020 = vsub.f32 %v2012, %v2018
    %v2021 = vsub.f32 %v2013, %v2019
    %v2022 = vmul.f32 %v2020, %v2020
    %v2023 = vmul.f32 %v2021, %v2021
    %2024 = vadd.xlane.f32.xlu0 %v2022
    %v2025 = vpop.xlane.xlu0 %2024
    %2026 = vadd.xlane.f32.xlu0 %v2023
    %v2027 = vpop.xlane.xlu0 %2026
    %v2028 = vmul.f32 %v2025, %v263
    %v2029 = vmul.f32 %v2027, %v263
    %v2030 = vadd.f32 %v2028, 1e-05
    %v2031 = vadd.f32 %v2029, 1e-05
    %v2032 = vrsqrt.pop %v2030
    %v2033 = vrsqrt.pop %v2031
    %v2034 = vmul.f32 %v2020, %v2032
    %v2035 = vmul.f32 %v2021, %v2033
    %v2036 = vld [vmem:[%s29] sm:$0x1]
    %v2038 = vlaneseq
    %v2039 = vshrl.u32 %v2038, 7
    %v2040 = vsub.s32 0, %v2039
    %v2041 = vrot.slane %v2036, %v2040
    %v2043 = vmul.f32 %v2034, %v2041
    %v2044 = vmul.f32 %v2035, %v2041
    %v2045 = vld [vmem:[%s31] sm:$0x1]
    %v2047 = vlaneseq
    %v2048 = vshrl.u32 %v2047, 7
    %v2049 = vsub.s32 0, %v2048
    %v2050 = vrot.slane %v2045, %v2049
    %v2052 = vadd.f32 %v2043, %v2050
    %v2053 = vadd.f32 %v2044, %v2050
    %v2054 = vpack.c.bf16 %v2053, %v2052
    %v2055 = vld [vmem:[%s33] sm:$0xff]
    %v2056 = vld [vmem:[%s33 + $0x8] sm:$0xf]
    %v2057 = vld [vmem:[%s33 + $0xc] sm:$0xff]
    %v2058 = vld [vmem:[%s33 + $0x14] sm:$0xf]
    %v2059 = vld [vmem:[%s33 + $0x18] sm:$0xff]
    %v2060 = vld [vmem:[%s33 + $0x20] sm:$0xf]
    %v2061 = vld [vmem:[%s33 + $0x24] sm:$0xff]
    %v2062 = vld [vmem:[%s33 + $0x2c] sm:$0xf]
    %v2063 = vld [vmem:[%s33 + $0x30] sm:$0xff]
    %v2064 = vld [vmem:[%s33 + $0x38] sm:$0xf]
    %v2065 = vld [vmem:[%s33 + $0x3c] sm:$0xff]
    %v2066 = vld [vmem:[%s33 + $0x44] sm:$0xf]
    %v2067 = vld [vmem:[%s33 + $0x48] sm:$0xff]
    %v2068 = vld [vmem:[%s33 + $0x50] sm:$0xf]
    %v2069 = vld [vmem:[%s33 + $0x54] sm:$0xff]
    %v2070 = vld [vmem:[%s33 + $0x5c] sm:$0xf]
    %v2071 = vld [vmem:[%s33 + $0x60] sm:$0xff]
    %v2072 = vld [vmem:[%s33 + $0x68] sm:$0xf]
    %v2073 = vld [vmem:[%s33 + $0x6c] sm:$0xff]
    %v2074 = vld [vmem:[%s33 + $0x74] sm:$0xf]
    %v2075 = vld [vmem:[%s33 + $0x78] sm:$0xff]
    %v2076 = vld [vmem:[%s33 + $0x80] sm:$0xf]
    %v2077 = vld [vmem:[%s33 + $0x84] sm:$0xff]
    %v2078 = vld [vmem:[%s33 + $0x8c] sm:$0xf]
    %v2079 = vld [vmem:[%s33 + $0x90] sm:$0xff]
    %v2080 = vld [vmem:[%s33 + $0x98] sm:$0xf]
    %v2081 = vld [vmem:[%s33 + $0x9c] sm:$0xff]
    %v2082 = vld [vmem:[%s33 + $0xa4] sm:$0xf]
    %v2083 = vld [vmem:[%s33 + $0xa8] sm:$0xff]
    %v2084 = vld [vmem:[%s33 + $0xb0] sm:$0xf]
    %v2085 = vld [vmem:[%s33 + $0xb4] sm:$0xff]
    %v2086 = vld [vmem:[%s33 + $0xbc] sm:$0xf]
    %v2087 = vld [vmem:[%s35] sm:$0x7]
    %v2089 = vlaneseq
    %v2090 = vshrl.u32 %v2089, 7
    %v2091 = vsub.s32 0, %v2090
    %v2092 = vrot.slane %v2087, %v2091
    %v2093 = vlaneseq
    %v2094 = vshrl.u32 %v2093, 7
    %v2095 = vsub.s32 1, %v2094
    %v2096 = vrot.slane %v2087, %v2095
    %v2097 = vlaneseq
    %v2098 = vshrl.u32 %v2097, 7
    %v2099 = vsub.s32 2, %v2098
    %v2100 = vrot.slane %v2087, %v2099
    %v2136 = vunpack.c.l.b16 %v2055
    %v2137 = vunpack.c.h.b16 %v2055
    %v2138 = vunpack.c.l.b16 %v2056
    %v2139 = vunpack.c.l.b16 %v2057
    %v2140 = vunpack.c.h.b16 %v2057
    %v2141 = vunpack.c.l.b16 %v2058
    %v2142 = vunpack.c.l.b16 %v2059
    %v2143 = vunpack.c.h.b16 %v2059
    %v2144 = vunpack.c.l.b16 %v2060
    %v2145 = vunpack.c.l.b16 %v2061
    %v2146 = vunpack.c.h.b16 %v2061
    %v2147 = vunpack.c.l.b16 %v2062
    %v2148 = vunpack.c.l.b16 %v2063
    %v2149 = vunpack.c.h.b16 %v2063
    %v2150 = vunpack.c.l.b16 %v2064
    %v2151 = vunpack.c.l.b16 %v2065
    %v2152 = vunpack.c.h.b16 %v2065
    %v2153 = vunpack.c.l.b16 %v2066
    %v2154 = vunpack.c.l.b16 %v2067
    %v2155 = vunpack.c.h.b16 %v2067
    %v2156 = vunpack.c.l.b16 %v2068
    %v2157 = vunpack.c.l.b16 %v2069
    %v2158 = vunpack.c.h.b16 %v2069
    %v2159 = vunpack.c.l.b16 %v2070
    %v2160 = vunpack.c.l.b16 %v2071
    %v2161 = vunpack.c.h.b16 %v2071
    %v2162 = vunpack.c.l.b16 %v2072
    %v2163 = vunpack.c.l.b16 %v2073
    %v2164 = vunpack.c.h.b16 %v2073
    %v2165 = vunpack.c.l.b16 %v2074
    %v2166 = vunpack.c.l.b16 %v2075
    %v2167 = vunpack.c.h.b16 %v2075
    %v2168 = vunpack.c.l.b16 %v2076
    %v2169 = vunpack.c.l.b16 %v2077
    %v2170 = vunpack.c.h.b16 %v2077
    %v2171 = vunpack.c.l.b16 %v2078
    %v2172 = vunpack.c.l.b16 %v2079
    %v2173 = vunpack.c.h.b16 %v2079
    %v2174 = vunpack.c.l.b16 %v2080
    %v2175 = vunpack.c.l.b16 %v2081
    %v2176 = vunpack.c.h.b16 %v2081
    %v2177 = vunpack.c.l.b16 %v2082
    %v2178 = vunpack.c.l.b16 %v2083
    %v2179 = vunpack.c.h.b16 %v2083
    %v2180 = vunpack.c.l.b16 %v2084
    %v2181 = vunpack.c.l.b16 %v2085
    %v2182 = vunpack.c.h.b16 %v2085
    %v2183 = vunpack.c.l.b16 %v2086
    %v2184 = vpack.c.b16 %v2139, %v2136
    %v2185 = vpack.c.b16 %v2140, %v2137
    %v2186 = vpack.c.b16 %v2141, %v2138
    %v2187 = vpack.c.b16 %v2145, %v2142
    %v2188 = vpack.c.b16 %v2146, %v2143
    %v2189 = vpack.c.b16 %v2147, %v2144
    %v2190 = vpack.c.b16 %v2151, %v2148
    %v2191 = vpack.c.b16 %v2152, %v2149
    %v2192 = vpack.c.b16 %v2153, %v2150
    %v2193 = vpack.c.b16 %v2157, %v2154
    %v2194 = vpack.c.b16 %v2158, %v2155
    %v2195 = vpack.c.b16 %v2159, %v2156
    %v2196 = vpack.c.b16 %v2163, %v2160
    %v2197 = vpack.c.b16 %v2164, %v2161
    %v2198 = vpack.c.b16 %v2165, %v2162
    %v2199 = vpack.c.b16 %v2169, %v2166
    %v2200 = vpack.c.b16 %v2170, %v2167
    %v2201 = vpack.c.b16 %v2171, %v2168
    %v2202 = vpack.c.b16 %v2175, %v2172
    %v2203 = vpack.c.b16 %v2176, %v2173
    %v2204 = vpack.c.b16 %v2177, %v2174
    %v2205 = vpack.c.b16 %v2181, %v2178
    %v2206 = vpack.c.b16 %v2182, %v2179
    %v2207 = vpack.c.b16 %v2183, %v2180
    %2232 = vmatprep.subr.bf16.mxu0 %v2206
    %2233 = vmatpush1.bf16.msra.mxu0 %v2205
    %2234 = vmatprep.subr.bf16.mxu0 %v2203
    %2235 = vmatpush1.bf16.msra.mxu0 %v2202
    %2236 = vmatprep.subr.bf16.mxu0 %v2200
    %2237 = vmatpush1.bf16.msra.mxu0 %v2199
    %2238 = vmatprep.subr.bf16.mxu0 %v2197
    %2239 = vmatpush1.bf16.msra.mxu0 %v2196
    %2240 = vmatprep.subr.bf16.mxu0 %v2194
    %2241 = vmatpush1.bf16.msra.mxu0 %v2193
    %2242 = vmatprep.subr.bf16.mxu0 %v2191
    %2243 = vmatpush1.bf16.msra.mxu0 %v2190
    %2244 = vmatprep.subr.bf16.mxu0 %v2188
    %2245 = vmatpush1.bf16.msra.mxu0 %v2187
    %2246 = vmatprep.subr.bf16.mxu0 %v2185
    %2247 = vmatpush1.bf16.msra.mxu0 %v2184
    %2248 = vmatprep.subr.bf16.mxu0 0
    %2249 = vmatpush2.bf16.msra.mxu0 0
    %2250 = vmatprep.subr.bf16.mxu0 0
    %2251 = vmatpush2.bf16.msra.mxu0 0
    %2252 = vmatprep.subr.bf16.mxu0 0
    %2253 = vmatpush2.bf16.msra.mxu0 0
    %2254 = vmatprep.subr.bf16.mxu0 0
    %2255 = vmatpush2.bf16.msra.mxu0 0
    %2256 = vmatprep.subr.bf16.mxu0 0
    %2257 = vmatpush2.bf16.msra.mxu0 0
    %2258 = vmatprep.subr.bf16.mxu0 0
    %2259 = vmatpush2.bf16.msra.mxu0 0
    %2260 = vmatprep.subr.bf16.mxu0 0
    %2261 = vmatpush2.bf16.msra.mxu0 0
    %2262 = vmatprep.subr.bf16.mxu0 0
    %2263 = vmatpush2.bf16.msra.mxu0 0
    %2264 = vmatprep.mubr.bf16.mxu0 0
    %2265 = vmatmul.mubr.bf16.gmra.mxu0 %v2054
    %v2266 = vpop.f32.mrf.mxu0
    %v2267 = vadd.f32 %v2092, %v2266
    %v2268 = vpop.f32.mrf.mxu0
    %v2269 = vadd.f32 %v2096, %v2268
    %v2270 = vpop.f32.mrf.mxu0
    %v2271 = vadd.f32 %v2092, %v2270
    %v2272 = vpop.f32.mrf.mxu0
    %v2273 = vadd.f32 %v2096, %v2272
    %2274 = vdwg.mxu0
    %2275 = vmatprep.subr.bf16.mxu0 0
    %2276 = vmatpush1.bf16.msra.mxu0 %v2207
    %2277 = vmatprep.subr.bf16.mxu0 0
    %2278 = vmatpush1.bf16.msra.mxu0 %v2204
    %2279 = vmatprep.subr.bf16.mxu0 0
    %2280 = vmatpush1.bf16.msra.mxu0 %v2201
    %2281 = vmatprep.subr.bf16.mxu0 0
    %2282 = vmatpush1.bf16.msra.mxu0 %v2198
    %2283 = vmatprep.subr.bf16.mxu0 0
    %2284 = vmatpush1.bf16.msra.mxu0 %v2195
    %2285 = vmatprep.subr.bf16.mxu0 0
    %2286 = vmatpush1.bf16.msra.mxu0 %v2192
    %2287 = vmatprep.subr.bf16.mxu0 0
    %2288 = vmatpush1.bf16.msra.mxu0 %v2189
    %2289 = vmatprep.subr.bf16.mxu0 0
    %2290 = vmatpush1.bf16.msra.mxu0 %v2186
    %2291 = vmatprep.subr.bf16.mxu0 0
    %2292 = vmatpush2.bf16.msra.mxu0 0
    %2293 = vmatprep.subr.bf16.mxu0 0
    %2294 = vmatpush2.bf16.msra.mxu0 0
    %2295 = vmatprep.subr.bf16.mxu0 0
    %2296 = vmatpush2.bf16.msra.mxu0 0
    %2297 = vmatprep.subr.bf16.mxu0 0
    %2298 = vmatpush2.bf16.msra.mxu0 0
    %2299 = vmatprep.subr.bf16.mxu0 0
    %2300 = vmatpush2.bf16.msra.mxu0 0
    %2301 = vmatprep.subr.bf16.mxu0 0
    %2302 = vmatpush2.bf16.msra.mxu0 0
    %2303 = vmatprep.subr.bf16.mxu0 0
    %2304 = vmatpush2.bf16.msra.mxu0 0
    %2305 = vmatprep.subr.bf16.mxu0 0
    %2306 = vmatpush2.bf16.msra.mxu0 0
    %2307 = vmatprep.mubr.bf16.mxu0 0
    %2308 = vmatmul.mubr.bf16.gmra.mxu0 %v2054
    %v2309 = vpop.f32.mrf.mxu0
    %v2310 = vadd.f32 %v2100, %v2309
    %v2311 = vpop.f32.mrf.mxu0
    %v2312 = vpop.f32.mrf.mxu0
    %v2313 = vadd.f32 %v2100, %v2312
    %v2314 = vpop.f32.mrf.mxu0
    %2315 = vdwg.mxu0
    %v2316 = vpack.c.bf16 %v2267, %v2267
    %v2317 = vpack.c.bf16 %v2269, %v2269
    %v2319 = vsel %vm569, %v2316, 0
    %v2322 = vsel %vm569, %v2317, 0
    %2324 = vmatprep.subr.bf16.mxu0 0
    %2325 = vmatpush1.bf16.xpose.msra.mxu0 0
    %2326 = vmatprep.subr.bf16.mxu0 0
    %2327 = vmatpush1.bf16.xpose.msra.mxu0 0
    %2328 = vmatprep.subr.bf16.mxu0 0
    %2329 = vmatpush1.bf16.xpose.msra.mxu0 0
    %2330 = vmatprep.subr.bf16.mxu0 0
    %2331 = vmatpush1.bf16.xpose.msra.mxu0 0
    %2332 = vmatprep.subr.bf16.mxu0 0
    %2333 = vmatpush1.bf16.xpose.msra.mxu0 0
    %2334 = vmatprep.subr.bf16.mxu0 0
    %2335 = vmatpush1.bf16.xpose.msra.mxu0 0
    %2336 = vmatprep.subr.bf16.mxu0 0
    %2337 = vmatpush1.bf16.xpose.msra.mxu0 0
    %2338 = vmatprep.subr.bf16.mxu0 0
    %2339 = vmatpush1.bf16.xpose.msra.mxu0 %v2322
    %2340 = vmatprep.subr.bf16.mxu0 0
    %2341 = vmatpush2.bf16.xpose.msra.mxu0 0
    %2342 = vmatprep.subr.bf16.mxu0 0
    %2343 = vmatpush2.bf16.xpose.msra.mxu0 0
    %2344 = vmatprep.subr.bf16.mxu0 0
    %2345 = vmatpush2.bf16.xpose.msra.mxu0 0
    %2346 = vmatprep.subr.bf16.mxu0 0
    %2347 = vmatpush2.bf16.xpose.msra.mxu0 0
    %2348 = vmatprep.subr.bf16.mxu0 0
    %2349 = vmatpush2.bf16.xpose.msra.mxu0 0
    %2350 = vmatprep.subr.bf16.mxu0 0
    %2351 = vmatpush2.bf16.xpose.msra.mxu0 0
    %2352 = vmatprep.subr.bf16.mxu0 0
    %2353 = vmatpush2.bf16.xpose.msra.mxu0 0
    %2354 = vmatprep.subr.bf16.mxu0 0
    %2355 = vmatpush2.bf16.xpose.msra.mxu0 0
    %2356 = vmatprep.mubr.bf16.mxu0 0
    %2357 = vmatmul.mubr.bf16.gmra.mxu0 %v2319
    %v2358 = vpop.f32.mrf.mxu0
    %v2359 = vadd.f32 %v568, %v2358
    %v2360 = vpop.f32.mrf.mxu0
    %v2361 = vpop.f32.mrf.mxu0
    %v2362 = vpop.f32.mrf.mxu0
    %2363 = vdwg.mxu0
    %v2364 = vsel %vm616, %v2359, -inf
    %2365 = vmax.xlane.f32.xlu0 %v2364
    %v2366 = vpop.xlane.xlu0 %2365
    %v2367 = vsub.f32 %v2359, %v2366
    %v2368 = vmul.f32 %v2367, 1.442695
    %v2369 = vpow.pop %v2368
    %v2370 = vsel %vm616, %v2369, 0.0
    %2371 = vadd.xlane.f32.xlu0 %v2370
    %v2372 = vpop.xlane.xlu0 %2371
    %v2373 = vpack.c.bf16 %v2369, %v2369
    %v2374 = vpack.c.bf16 %v2310, %v2310
    %v2376 = vsel %vm616, %v2373, 0
    %v2379 = vsel %vm631, %v2374, 0
    %2381 = vmatprep.subr.bf16.mxu0 0
    %2382 = vmatpush1.bf16.msra.mxu0 0
    %2383 = vmatprep.subr.bf16.mxu0 0
    %2384 = vmatpush1.bf16.msra.mxu0 0
    %2385 = vmatprep.subr.bf16.mxu0 0
    %2386 = vmatpush1.bf16.msra.mxu0 0
    %2387 = vmatprep.subr.bf16.mxu0 0
    %2388 = vmatpush1.bf16.msra.mxu0 0
    %2389 = vmatprep.subr.bf16.mxu0 0
    %2390 = vmatpush1.bf16.msra.mxu0 0
    %2391 = vmatprep.subr.bf16.mxu0 0
    %2392 = vmatpush1.bf16.msra.mxu0 0
    %2393 = vmatprep.subr.bf16.mxu0 0
    %2394 = vmatpush1.bf16.msra.mxu0 0
    %2395 = vmatprep.subr.bf16.mxu0 0
    %2396 = vmatpush1.bf16.msra.mxu0 %v2379
    %2397 = vmatprep.subr.bf16.mxu0 0
    %2398 = vmatpush2.bf16.msra.mxu0 0
    %2399 = vmatprep.subr.bf16.mxu0 0
    %2400 = vmatpush2.bf16.msra.mxu0 0
    %2401 = vmatprep.subr.bf16.mxu0 0
    %2402 = vmatpush2.bf16.msra.mxu0 0
    %2403 = vmatprep.subr.bf16.mxu0 0
    %2404 = vmatpush2.bf16.msra.mxu0 0
    %2405 = vmatprep.subr.bf16.mxu0 0
    %2406 = vmatpush2.bf16.msra.mxu0 0
    %2407 = vmatprep.subr.bf16.mxu0 0
    %2408 = vmatpush2.bf16.msra.mxu0 0
    %2409 = vmatprep.subr.bf16.mxu0 0
    %2410 = vmatpush2.bf16.msra.mxu0 0
    %2411 = vmatprep.subr.bf16.mxu0 0
    %2412 = vmatpush2.bf16.msra.mxu0 0
    %2413 = vmatprep.mubr.bf16.mxu0 0
    %2414 = vmatmul.mubr.bf16.gmra.mxu0 %v2376
    %v2415 = vpop.f32.mrf.mxu0
    %v2416 = vadd.f32 0.0, %v2415
    %v2417 = vpop.f32.mrf.mxu0
    %v2418 = vpop.f32.mrf.mxu0
    %v2419 = vpop.f32.mrf.mxu0
    %2420 = vdwg.mxu0
    %v2421 = vrcp.pop %v2372
    %v2422 = vmul.f32 %v2416, %v2421
    %2423 = vst.msk [vmem:[#allocation2] sm:$0xff] %vm569, %v2422
    %2425 = vrot.lane.b32.xlu0 %v2316, 96
    %v2426 = vpop.permute.xlu0 %2425
    %2428 = vrot.lane.b32.xlu0 %v2317, 96
    %v2429 = vpop.permute.xlu0 %2428
    %v2431 = vsel %vm569, %v2426, 0
    %v2434 = vsel %vm569, %v2429, 0
    %2436 = vmatprep.subr.bf16.mxu0 0
    %2437 = vmatpush1.bf16.xpose.msra.mxu0 0
    %2438 = vmatprep.subr.bf16.mxu0 0
    %2439 = vmatpush1.bf16.xpose.msra.mxu0 0
    %2440 = vmatprep.subr.bf16.mxu0 0
    %2441 = vmatpush1.bf16.xpose.msra.mxu0 0
    %2442 = vmatprep.subr.bf16.mxu0 0
    %2443 = vmatpush1.bf16.xpose.msra.mxu0 0
    %2444 = vmatprep.subr.bf16.mxu0 0
    %2445 = vmatpush1.bf16.xpose.msra.mxu0 0
    %2446 = vmatprep.subr.bf16.mxu0 0
    %2447 = vmatpush1.bf16.xpose.msra.mxu0 0
    %2448 = vmatprep.subr.bf16.mxu0 0
    %2449 = vmatpush1.bf16.xpose.msra.mxu0 0
    %2450 = vmatprep.subr.bf16.mxu0 0
    %2451 = vmatpush1.bf16.xpose.msra.mxu0 %v2434
    %2452 = vmatprep.subr.bf16.mxu0 0
    %2453 = vmatpush2.bf16.xpose.msra.mxu0 0
    %2454 = vmatprep.subr.bf16.mxu0 0
    %2455 = vmatpush2.bf16.xpose.msra.mxu0 0
    %2456 = vmatprep.subr.bf16.mxu0 0
    %2457 = vmatpush2.bf16.xpose.msra.mxu0 0
    %2458 = vmatprep.subr.bf16.mxu0 0
    %2459 = vmatpush2.bf16.xpose.msra.mxu0 0
    %2460 = vmatprep.subr.bf16.mxu0 0
    %2461 = vmatpush2.bf16.xpose.msra.mxu0 0
    %2462 = vmatprep.subr.bf16.mxu0 0
    %2463 = vmatpush2.bf16.xpose.msra.mxu0 0
    %2464 = vmatprep.subr.bf16.mxu0 0
    %2465 = vmatpush2.bf16.xpose.msra.mxu0 0
    %2466 = vmatprep.subr.bf16.mxu0 0
    %2467 = vmatpush2.bf16.xpose.msra.mxu0 0
    %2468 = vmatprep.mubr.bf16.mxu0 0
    %2469 = vmatmul.mubr.bf16.gmra.mxu0 %v2431
    %v2470 = vpop.f32.mrf.mxu0
    %v2471 = vadd.f32 %v568, %v2470
    %v2472 = vpop.f32.mrf.mxu0
    %v2473 = vpop.f32.mrf.mxu0
    %v2474 = vpop.f32.mrf.mxu0
    %2475 = vdwg.mxu0
    %v2476 = vsel %vm616, %v2471, -inf
    %2477 = vmax.xlane.f32.xlu0 %v2476
    %v2478 = vpop.xlane.xlu0 %2477
    %v2479 = vsub.f32 %v2471, %v2478
    %v2480 = vmul.f32 %v2479, 1.442695
    %v2481 = vpow.pop %v2480
    %v2482 = vsel %vm616, %v2481, 0.0
    %2483 = vadd.xlane.f32.xlu0 %v2482
    %v2484 = vpop.xlane.xlu0 %2483
    %v2485 = vpack.c.bf16 %v2481, %v2481
    %2487 = vrot.lane.b32.xlu0 %v2374, 96
    %v2488 = vpop.permute.xlu0 %2487
    %v2490 = vsel %vm616, %v2485, 0
    %v2493 = vsel %vm631, %v2488, 0
    %2495 = vmatprep.subr.bf16.mxu0 0
    %2496 = vmatpush1.bf16.msra.mxu0 0
    %2497 = vmatprep.subr.bf16.mxu0 0
    %2498 = vmatpush1.bf16.msra.mxu0 0
    %2499 = vmatprep.subr.bf16.mxu0 0
    %2500 = vmatpush1.bf16.msra.mxu0 0
    %2501 = vmatprep.subr.bf16.mxu0 0
    %2502 = vmatpush1.bf16.msra.mxu0 0
    %2503 = vmatprep.subr.bf16.mxu0 0
    %2504 = vmatpush1.bf16.msra.mxu0 0
    %2505 = vmatprep.subr.bf16.mxu0 0
    %2506 = vmatpush1.bf16.msra.mxu0 0
    %2507 = vmatprep.subr.bf16.mxu0 0
    %2508 = vmatpush1.bf16.msra.mxu0 0
    %2509 = vmatprep.subr.bf16.mxu0 0
    %2510 = vmatpush1.bf16.msra.mxu0 %v2493
    %2511 = vmatprep.subr.bf16.mxu0 0
    %2512 = vmatpush2.bf16.msra.mxu0 0
    %2513 = vmatprep.subr.bf16.mxu0 0
    %2514 = vmatpush2.bf16.msra.mxu0 0
    %2515 = vmatprep.subr.bf16.mxu0 0
    %2516 = vmatpush2.bf16.msra.mxu0 0
    %2517 = vmatprep.subr.bf16.mxu0 0
    %2518 = vmatpush2.bf16.msra.mxu0 0
    %2519 = vmatprep.subr.bf16.mxu0 0
    %2520 = vmatpush2.bf16.msra.mxu0 0
    %2521 = vmatprep.subr.bf16.mxu0 0
    %2522 = vmatpush2.bf16.msra.mxu0 0
    %2523 = vmatprep.subr.bf16.mxu0 0
    %2524 = vmatpush2.bf16.msra.mxu0 0
    %2525 = vmatprep.subr.bf16.mxu0 0
    %2526 = vmatpush2.bf16.msra.mxu0 0
    %2527 = vmatprep.mubr.bf16.mxu0 0
    %2528 = vmatmul.mubr.bf16.gmra.mxu0 %v2490
    %v2529 = vpop.f32.mrf.mxu0
    %v2530 = vadd.f32 0.0, %v2529
    %v2531 = vpop.f32.mrf.mxu0
    %v2532 = vpop.f32.mrf.mxu0
    %v2533 = vpop.f32.mrf.mxu0
    %2534 = vdwg.mxu0
    %v2535 = vrcp.pop %v2484
    %v2536 = vmul.f32 %v2530, %v2535
    %2538 = vrot.lane.b32.xlu0 %v2536, 32
    %v2539 = vpop.permute.xlu0 %2538
    %2541 = vst.msk [vmem:[#allocation2] sm:$0xff] %vm795, %v2539
    %2542 = vrot.lane.b32.xlu0 %v2316, 64
    %v2543 = vpop.permute.xlu0 %2542
    %2544 = vrot.lane.b32.xlu0 %v2317, 64
    %v2545 = vpop.permute.xlu0 %2544
    %v2547 = vsel %vm569, %v2543, 0
    %v2550 = vsel %vm569, %v2545, 0
    %2552 = vmatprep.subr.bf16.mxu0 0
    %2553 = vmatpush1.bf16.xpose.msra.mxu0 0
    %2554 = vmatprep.subr.bf16.mxu0 0
    %2555 = vmatpush1.bf16.xpose.msra.mxu0 0
    %2556 = vmatprep.subr.bf16.mxu0 0
    %2557 = vmatpush1.bf16.xpose.msra.mxu0 0
    %2558 = vmatprep.subr.bf16.mxu0 0
    %2559 = vmatpush1.bf16.xpose.msra.mxu0 0
    %2560 = vmatprep.subr.bf16.mxu0 0
    %2561 = vmatpush1.bf16.xpose.msra.mxu0 0
    %2562 = vmatprep.subr.bf16.mxu0 0
    %2563 = vmatpush1.bf16.xpose.msra.mxu0 0
    %2564 = vmatprep.subr.bf16.mxu0 0
    %2565 = vmatpush1.bf16.xpose.msra.mxu0 0
    %2566 = vmatprep.subr.bf16.mxu0 0
    %2567 = vmatpush1.bf16.xpose.msra.mxu0 %v2550
    %2568 = vmatprep.subr.bf16.mxu0 0
    %2569 = vmatpush2.bf16.xpose.msra.mxu0 0
    %2570 = vmatprep.subr.bf16.mxu0 0
    %2571 = vmatpush2.bf16.xpose.msra.mxu0 0
    %2572 = vmatprep.subr.bf16.mxu0 0
    %2573 = vmatpush2.bf16.xpose.msra.mxu0 0
    %2574 = vmatprep.subr.bf16.mxu0 0
    %2575 = vmatpush2.bf16.xpose.msra.mxu0 0
    %2576 = vmatprep.subr.bf16.mxu0 0
    %2577 = vmatpush2.bf16.xpose.msra.mxu0 0
    %2578 = vmatprep.subr.bf16.mxu0 0
    %2579 = vmatpush2.bf16.xpose.msra.mxu0 0
    %2580 = vmatprep.subr.bf16.mxu0 0
    %2581 = vmatpush2.bf16.xpose.msra.mxu0 0
    %2582 = vmatprep.subr.bf16.mxu0 0
    %2583 = vmatpush2.bf16.xpose.msra.mxu0 0
    %2584 = vmatprep.mubr.bf16.mxu0 0
    %2585 = vmatmul.mubr.bf16.gmra.mxu0 %v2547
    %v2586 = vpop.f32.mrf.mxu0
    %v2587 = vadd.f32 %v568, %v2586
    %v2588 = vpop.f32.mrf.mxu0
    %v2589 = vpop.f32.mrf.mxu0
    %v2590 = vpop.f32.mrf.mxu0
    %2591 = vdwg.mxu0
    %v2592 = vsel %vm616, %v2587, -inf
    %2593 = vmax.xlane.f32.xlu0 %v2592
    %v2594 = vpop.xlane.xlu0 %2593
    %v2595 = vsub.f32 %v2587, %v2594
    %v2596 = vmul.f32 %v2595, 1.442695
    %v2597 = vpow.pop %v2596
    %v2598 = vsel %vm616, %v2597, 0.0
    %2599 = vadd.xlane.f32.xlu0 %v2598
    %v2600 = vpop.xlane.xlu0 %2599
    %v2601 = vpack.c.bf16 %v2597, %v2597
    %2602 = vrot.lane.b32.xlu0 %v2374, 64
    %v2603 = vpop.permute.xlu0 %2602
    %v2605 = vsel %vm616, %v2601, 0
    %v2608 = vsel %vm631, %v2603, 0
    %2610 = vmatprep.subr.bf16.mxu0 0
    %2611 = vmatpush1.bf16.msra.mxu0 0
    %2612 = vmatprep.subr.bf16.mxu0 0
    %2613 = vmatpush1.bf16.msra.mxu0 0
    %2614 = vmatprep.subr.bf16.mxu0 0
    %2615 = vmatpush1.bf16.msra.mxu0 0
    %2616 = vmatprep.subr.bf16.mxu0 0
    %2617 = vmatpush1.bf16.msra.mxu0 0
    %2618 = vmatprep.subr.bf16.mxu0 0
    %2619 = vmatpush1.bf16.msra.mxu0 0
    %2620 = vmatprep.subr.bf16.mxu0 0
    %2621 = vmatpush1.bf16.msra.mxu0 0
    %2622 = vmatprep.subr.bf16.mxu0 0
    %2623 = vmatpush1.bf16.msra.mxu0 0
    %2624 = vmatprep.subr.bf16.mxu0 0
    %2625 = vmatpush1.bf16.msra.mxu0 %v2608
    %2626 = vmatprep.subr.bf16.mxu0 0
    %2627 = vmatpush2.bf16.msra.mxu0 0
    %2628 = vmatprep.subr.bf16.mxu0 0
    %2629 = vmatpush2.bf16.msra.mxu0 0
    %2630 = vmatprep.subr.bf16.mxu0 0
    %2631 = vmatpush2.bf16.msra.mxu0 0
    %2632 = vmatprep.subr.bf16.mxu0 0
    %2633 = vmatpush2.bf16.msra.mxu0 0
    %2634 = vmatprep.subr.bf16.mxu0 0
    %2635 = vmatpush2.bf16.msra.mxu0 0
    %2636 = vmatprep.subr.bf16.mxu0 0
    %2637 = vmatpush2.bf16.msra.mxu0 0
    %2638 = vmatprep.subr.bf16.mxu0 0
    %2639 = vmatpush2.bf16.msra.mxu0 0
    %2640 = vmatprep.subr.bf16.mxu0 0
    %2641 = vmatpush2.bf16.msra.mxu0 0
    %2642 = vmatprep.mubr.bf16.mxu0 0
    %2643 = vmatmul.mubr.bf16.gmra.mxu0 %v2605
    %v2644 = vpop.f32.mrf.mxu0
    %v2645 = vadd.f32 0.0, %v2644
    %v2646 = vpop.f32.mrf.mxu0
    %v2647 = vpop.f32.mrf.mxu0
    %v2648 = vpop.f32.mrf.mxu0
    %2649 = vdwg.mxu0
    %v2650 = vrcp.pop %v2600
    %v2651 = vmul.f32 %v2645, %v2650
    %2653 = vrot.lane.b32.xlu0 %v2651, 64
    %v2654 = vpop.permute.xlu0 %2653
    %2656 = vst.msk [vmem:[#allocation2] sm:$0xff] %vm911, %v2654
    %2657 = vrot.lane.b32.xlu0 %v2316, 32
    %v2658 = vpop.permute.xlu0 %2657
    %2659 = vrot.lane.b32.xlu0 %v2317, 32
    %v2660 = vpop.permute.xlu0 %2659
    %v2662 = vsel %vm569, %v2658, 0
    %v2665 = vsel %vm569, %v2660, 0
    %2667 = vmatprep.subr.bf16.mxu0 0
    %2668 = vmatpush1.bf16.xpose.msra.mxu0 0
    %2669 = vmatprep.subr.bf16.mxu0 0
    %2670 = vmatpush1.bf16.xpose.msra.mxu0 0
    %2671 = vmatprep.subr.bf16.mxu0 0
    %2672 = vmatpush1.bf16.xpose.msra.mxu0 0
    %2673 = vmatprep.subr.bf16.mxu0 0
    %2674 = vmatpush1.bf16.xpose.msra.mxu0 0
    %2675 = vmatprep.subr.bf16.mxu0 0
    %2676 = vmatpush1.bf16.xpose.msra.mxu0 0
    %2677 = vmatprep.subr.bf16.mxu0 0
    %2678 = vmatpush1.bf16.xpose.msra.mxu0 0
    %2679 = vmatprep.subr.bf16.mxu0 0
    %2680 = vmatpush1.bf16.xpose.msra.mxu0 0
    %2681 = vmatprep.subr.bf16.mxu0 0
    %2682 = vmatpush1.bf16.xpose.msra.mxu0 %v2665
    %2683 = vmatprep.subr.bf16.mxu0 0
    %2684 = vmatpush2.bf16.xpose.msra.mxu0 0
    %2685 = vmatprep.subr.bf16.mxu0 0
    %2686 = vmatpush2.bf16.xpose.msra.mxu0 0
    %2687 = vmatprep.subr.bf16.mxu0 0
    %2688 = vmatpush2.bf16.xpose.msra.mxu0 0
    %2689 = vmatprep.subr.bf16.mxu0 0
    %2690 = vmatpush2.bf16.xpose.msra.mxu0 0
    %2691 = vmatprep.subr.bf16.mxu0 0
    %2692 = vmatpush2.bf16.xpose.msra.mxu0 0
    %2693 = vmatprep.subr.bf16.mxu0 0
    %2694 = vmatpush2.bf16.xpose.msra.mxu0 0
    %2695 = vmatprep.subr.bf16.mxu0 0
    %2696 = vmatpush2.bf16.xpose.msra.mxu0 0
    %2697 = vmatprep.subr.bf16.mxu0 0
    %2698 = vmatpush2.bf16.xpose.msra.mxu0 0
    %2699 = vmatprep.mubr.bf16.mxu0 0
    %2700 = vmatmul.mubr.bf16.gmra.mxu0 %v2662
    %v2701 = vpop.f32.mrf.mxu0
    %v2702 = vadd.f32 %v568, %v2701
    %v2703 = vpop.f32.mrf.mxu0
    %v2704 = vpop.f32.mrf.mxu0
    %v2705 = vpop.f32.mrf.mxu0
    %2706 = vdwg.mxu0
    %v2707 = vsel %vm616, %v2702, -inf
    %2708 = vmax.xlane.f32.xlu0 %v2707
    %v2709 = vpop.xlane.xlu0 %2708
    %v2710 = vsub.f32 %v2702, %v2709
    %v2711 = vmul.f32 %v2710, 1.442695
    %v2712 = vpow.pop %v2711
    %v2713 = vsel %vm616, %v2712, 0.0
    %2714 = vadd.xlane.f32.xlu0 %v2713
    %v2715 = vpop.xlane.xlu0 %2714
    %v2716 = vpack.c.bf16 %v2712, %v2712
    %2717 = vrot.lane.b32.xlu0 %v2374, 32
    %v2718 = vpop.permute.xlu0 %2717
    %v2720 = vsel %vm616, %v2716, 0
    %v2723 = vsel %vm631, %v2718, 0
    %2725 = vmatprep.subr.bf16.mxu0 0
    %2726 = vmatpush1.bf16.msra.mxu0 0
    %2727 = vmatprep.subr.bf16.mxu0 0
    %2728 = vmatpush1.bf16.msra.mxu0 0
    %2729 = vmatprep.subr.bf16.mxu0 0
    %2730 = vmatpush1.bf16.msra.mxu0 0
    %2731 = vmatprep.subr.bf16.mxu0 0
    %2732 = vmatpush1.bf16.msra.mxu0 0
    %2733 = vmatprep.subr.bf16.mxu0 0
    %2734 = vmatpush1.bf16.msra.mxu0 0
    %2735 = vmatprep.subr.bf16.mxu0 0
    %2736 = vmatpush1.bf16.msra.mxu0 0
    %2737 = vmatprep.subr.bf16.mxu0 0
    %2738 = vmatpush1.bf16.msra.mxu0 0
    %2739 = vmatprep.subr.bf16.mxu0 0
    %2740 = vmatpush1.bf16.msra.mxu0 %v2723
    %2741 = vmatprep.subr.bf16.mxu0 0
    %2742 = vmatpush2.bf16.msra.mxu0 0
    %2743 = vmatprep.subr.bf16.mxu0 0
    %2744 = vmatpush2.bf16.msra.mxu0 0
    %2745 = vmatprep.subr.bf16.mxu0 0
    %2746 = vmatpush2.bf16.msra.mxu0 0
    %2747 = vmatprep.subr.bf16.mxu0 0
    %2748 = vmatpush2.bf16.msra.mxu0 0
    %2749 = vmatprep.subr.bf16.mxu0 0
    %2750 = vmatpush2.bf16.msra.mxu0 0
    %2751 = vmatprep.subr.bf16.mxu0 0
    %2752 = vmatpush2.bf16.msra.mxu0 0
    %2753 = vmatprep.subr.bf16.mxu0 0
    %2754 = vmatpush2.bf16.msra.mxu0 0
    %2755 = vmatprep.subr.bf16.mxu0 0
    %2756 = vmatpush2.bf16.msra.mxu0 0
    %2757 = vmatprep.mubr.bf16.mxu0 0
    %2758 = vmatmul.mubr.bf16.gmra.mxu0 %v2720
    %v2759 = vpop.f32.mrf.mxu0
    %v2760 = vadd.f32 0.0, %v2759
    %v2761 = vpop.f32.mrf.mxu0
    %v2762 = vpop.f32.mrf.mxu0
    %v2763 = vpop.f32.mrf.mxu0
    %2764 = vdwg.mxu0
    %v2765 = vrcp.pop %v2715
    %v2766 = vmul.f32 %v2760, %v2765
    %2768 = vrot.lane.b32.xlu0 %v2766, 96
    %v2769 = vpop.permute.xlu0 %2768
    %2771 = vst.msk [vmem:[#allocation2] sm:$0xff] %vm1027, %v2769
    %v2772 = vpack.c.bf16 %v2271, %v2271
    %v2773 = vpack.c.bf16 %v2273, %v2273
    %v2775 = vsel %vm569, %v2772, 0
    %v2778 = vsel %vm569, %v2773, 0
    %2780 = vmatprep.subr.bf16.mxu0 0
    %2781 = vmatpush1.bf16.xpose.msra.mxu0 0
    %2782 = vmatprep.subr.bf16.mxu0 0
    %2783 = vmatpush1.bf16.xpose.msra.mxu0 0
    %2784 = vmatprep.subr.bf16.mxu0 0
    %2785 = vmatpush1.bf16.xpose.msra.mxu0 0
    %2786 = vmatprep.subr.bf16.mxu0 0
    %2787 = vmatpush1.bf16.xpose.msra.mxu0 0
    %2788 = vmatprep.subr.bf16.mxu0 0
    %2789 = vmatpush1.bf16.xpose.msra.mxu0 0
    %2790 = vmatprep.subr.bf16.mxu0 0
    %2791 = vmatpush1.bf16.xpose.msra.mxu0 0
    %2792 = vmatprep.subr.bf16.mxu0 0
    %2793 = vmatpush1.bf16.xpose.msra.mxu0 0
    %2794 = vmatprep.subr.bf16.mxu0 0
    %2795 = vmatpush1.bf16.xpose.msra.mxu0 %v2778
    %2796 = vmatprep.subr.bf16.mxu0 0
    %2797 = vmatpush2.bf16.xpose.msra.mxu0 0
    %2798 = vmatprep.subr.bf16.mxu0 0
    %2799 = vmatpush2.bf16.xpose.msra.mxu0 0
    %2800 = vmatprep.subr.bf16.mxu0 0
    %2801 = vmatpush2.bf16.xpose.msra.mxu0 0
    %2802 = vmatprep.subr.bf16.mxu0 0
    %2803 = vmatpush2.bf16.xpose.msra.mxu0 0
    %2804 = vmatprep.subr.bf16.mxu0 0
    %2805 = vmatpush2.bf16.xpose.msra.mxu0 0
    %2806 = vmatprep.subr.bf16.mxu0 0
    %2807 = vmatpush2.bf16.xpose.msra.mxu0 0
    %2808 = vmatprep.subr.bf16.mxu0 0
    %2809 = vmatpush2.bf16.xpose.msra.mxu0 0
    %2810 = vmatprep.subr.bf16.mxu0 0
    %2811 = vmatpush2.bf16.xpose.msra.mxu0 0
    %2812 = vmatprep.mubr.bf16.mxu0 0
    %2813 = vmatmul.mubr.bf16.gmra.mxu0 %v2775
    %v2814 = vpop.f32.mrf.mxu0
    %v2815 = vadd.f32 %v1034, %v2814
    %v2816 = vpop.f32.mrf.mxu0
    %v2817 = vpop.f32.mrf.mxu0
    %v2818 = vpop.f32.mrf.mxu0
    %2819 = vdwg.mxu0
    %v2820 = vsel %vm616, %v2815, -inf
    %2821 = vmax.xlane.f32.xlu0 %v2820
    %v2822 = vpop.xlane.xlu0 %2821
    %v2823 = vsub.f32 %v2815, %v2822
    %v2824 = vmul.f32 %v2823, 1.442695
    %v2825 = vpow.pop %v2824
    %v2826 = vsel %vm616, %v2825, 0.0
    %2827 = vadd.xlane.f32.xlu0 %v2826
    %v2828 = vpop.xlane.xlu0 %2827
    %v2829 = vpack.c.bf16 %v2825, %v2825
    %v2830 = vpack.c.bf16 %v2313, %v2313
    %v2832 = vsel %vm616, %v2829, 0
    %v2835 = vsel %vm631, %v2830, 0
    %2837 = vmatprep.subr.bf16.mxu0 0
    %2838 = vmatpush1.bf16.msra.mxu0 0
    %2839 = vmatprep.subr.bf16.mxu0 0
    %2840 = vmatpush1.bf16.msra.mxu0 0
    %2841 = vmatprep.subr.bf16.mxu0 0
    %2842 = vmatpush1.bf16.msra.mxu0 0
    %2843 = vmatprep.subr.bf16.mxu0 0
    %2844 = vmatpush1.bf16.msra.mxu0 0
    %2845 = vmatprep.subr.bf16.mxu0 0
    %2846 = vmatpush1.bf16.msra.mxu0 0
    %2847 = vmatprep.subr.bf16.mxu0 0
    %2848 = vmatpush1.bf16.msra.mxu0 0
    %2849 = vmatprep.subr.bf16.mxu0 0
    %2850 = vmatpush1.bf16.msra.mxu0 0
    %2851 = vmatprep.subr.bf16.mxu0 0
    %2852 = vmatpush1.bf16.msra.mxu0 %v2835
    %2853 = vmatprep.subr.bf16.mxu0 0
    %2854 = vmatpush2.bf16.msra.mxu0 0
    %2855 = vmatprep.subr.bf16.mxu0 0
    %2856 = vmatpush2.bf16.msra.mxu0 0
    %2857 = vmatprep.subr.bf16.mxu0 0
    %2858 = vmatpush2.bf16.msra.mxu0 0
    %2859 = vmatprep.subr.bf16.mxu0 0
    %2860 = vmatpush2.bf16.msra.mxu0 0
    %2861 = vmatprep.subr.bf16.mxu0 0
    %2862 = vmatpush2.bf16.msra.mxu0 0
    %2863 = vmatprep.subr.bf16.mxu0 0
    %2864 = vmatpush2.bf16.msra.mxu0 0
    %2865 = vmatprep.subr.bf16.mxu0 0
    %2866 = vmatpush2.bf16.msra.mxu0 0
    %2867 = vmatprep.subr.bf16.mxu0 0
    %2868 = vmatpush2.bf16.msra.mxu0 0
    %2869 = vmatprep.mubr.bf16.mxu0 0
    %2870 = vmatmul.mubr.bf16.gmra.mxu0 %v2832
    %v2871 = vpop.f32.mrf.mxu0
    %v2872 = vadd.f32 0.0, %v2871
    %v2873 = vpop.f32.mrf.mxu0
    %v2874 = vpop.f32.mrf.mxu0
    %v2875 = vpop.f32.mrf.mxu0
    %2876 = vdwg.mxu0
    %v2877 = vrcp.pop %v2828
    %v2878 = vmul.f32 %v2872, %v2877
    %2879 = vst.msk [vmem:[#allocation2 + $0x8] sm:$0xff] %vm569, %v2878
    %2881 = vrot.lane.b32.xlu0 %v2772, 96
    %v2882 = vpop.permute.xlu0 %2881
    %2884 = vrot.lane.b32.xlu0 %v2773, 96
    %v2885 = vpop.permute.xlu0 %2884
    %v2887 = vsel %vm569, %v2882, 0
    %v2890 = vsel %vm569, %v2885, 0
    %2892 = vmatprep.subr.bf16.mxu0 0
    %2893 = vmatpush1.bf16.xpose.msra.mxu0 0
    %2894 = vmatprep.subr.bf16.mxu0 0
    %2895 = vmatpush1.bf16.xpose.msra.mxu0 0
    %2896 = vmatprep.subr.bf16.mxu0 0
    %2897 = vmatpush1.bf16.xpose.msra.mxu0 0
    %2898 = vmatprep.subr.bf16.mxu0 0
    %2899 = vmatpush1.bf16.xpose.msra.mxu0 0
    %2900 = vmatprep.subr.bf16.mxu0 0
    %2901 = vmatpush1.bf16.xpose.msra.mxu0 0
    %2902 = vmatprep.subr.bf16.mxu0 0
    %2903 = vmatpush1.bf16.xpose.msra.mxu0 0
    %2904 = vmatprep.subr.bf16.mxu0 0
    %2905 = vmatpush1.bf16.xpose.msra.mxu0 0
    %2906 = vmatprep.subr.bf16.mxu0 0
    %2907 = vmatpush1.bf16.xpose.msra.mxu0 %v2890
    %2908 = vmatprep.subr.bf16.mxu0 0
    %2909 = vmatpush2.bf16.xpose.msra.mxu0 0
    %2910 = vmatprep.subr.bf16.mxu0 0
    %2911 = vmatpush2.bf16.xpose.msra.mxu0 0
    %2912 = vmatprep.subr.bf16.mxu0 0
    %2913 = vmatpush2.bf16.xpose.msra.mxu0 0
    %2914 = vmatprep.subr.bf16.mxu0 0
    %2915 = vmatpush2.bf16.xpose.msra.mxu0 0
    %2916 = vmatprep.subr.bf16.mxu0 0
    %2917 = vmatpush2.bf16.xpose.msra.mxu0 0
    %2918 = vmatprep.subr.bf16.mxu0 0
    %2919 = vmatpush2.bf16.xpose.msra.mxu0 0
    %2920 = vmatprep.subr.bf16.mxu0 0
    %2921 = vmatpush2.bf16.xpose.msra.mxu0 0
    %2922 = vmatprep.subr.bf16.mxu0 0
    %2923 = vmatpush2.bf16.xpose.msra.mxu0 0
    %2924 = vmatprep.mubr.bf16.mxu0 0
    %2925 = vmatmul.mubr.bf16.gmra.mxu0 %v2887
    %v2926 = vpop.f32.mrf.mxu0
    %v2927 = vadd.f32 %v1034, %v2926
    %v2928 = vpop.f32.mrf.mxu0
    %v2929 = vpop.f32.mrf.mxu0
    %v2930 = vpop.f32.mrf.mxu0
    %2931 = vdwg.mxu0
    %v2932 = vsel %vm616, %v2927, -inf
    %2933 = vmax.xlane.f32.xlu0 %v2932
    %v2934 = vpop.xlane.xlu0 %2933
    %v2935 = vsub.f32 %v2927, %v2934
    %v2936 = vmul.f32 %v2935, 1.442695
    %v2937 = vpow.pop %v2936
    %v2938 = vsel %vm616, %v2937, 0.0
    %2939 = vadd.xlane.f32.xlu0 %v2938
    %v2940 = vpop.xlane.xlu0 %2939
    %v2941 = vpack.c.bf16 %v2937, %v2937
    %2943 = vrot.lane.b32.xlu0 %v2830, 96
    %v2944 = vpop.permute.xlu0 %2943
    %v2946 = vsel %vm616, %v2941, 0
    %v2949 = vsel %vm631, %v2944, 0
    %2951 = vmatprep.subr.bf16.mxu0 0
    %2952 = vmatpush1.bf16.msra.mxu0 0
    %2953 = vmatprep.subr.bf16.mxu0 0
    %2954 = vmatpush1.bf16.msra.mxu0 0
    %2955 = vmatprep.subr.bf16.mxu0 0
    %2956 = vmatpush1.bf16.msra.mxu0 0
    %2957 = vmatprep.subr.bf16.mxu0 0
    %2958 = vmatpush1.bf16.msra.mxu0 0
    %2959 = vmatprep.subr.bf16.mxu0 0
    %2960 = vmatpush1.bf16.msra.mxu0 0
    %2961 = vmatprep.subr.bf16.mxu0 0
    %2962 = vmatpush1.bf16.msra.mxu0 0
    %2963 = vmatprep.subr.bf16.mxu0 0
    %2964 = vmatpush1.bf16.msra.mxu0 0
    %2965 = vmatprep.subr.bf16.mxu0 0
    %2966 = vmatpush1.bf16.msra.mxu0 %v2949
    %2967 = vmatprep.subr.bf16.mxu0 0
    %2968 = vmatpush2.bf16.msra.mxu0 0
    %2969 = vmatprep.subr.bf16.mxu0 0
    %2970 = vmatpush2.bf16.msra.mxu0 0
    %2971 = vmatprep.subr.bf16.mxu0 0
    %2972 = vmatpush2.bf16.msra.mxu0 0
    %2973 = vmatprep.subr.bf16.mxu0 0
    %2974 = vmatpush2.bf16.msra.mxu0 0
    %2975 = vmatprep.subr.bf16.mxu0 0
    %2976 = vmatpush2.bf16.msra.mxu0 0
    %2977 = vmatprep.subr.bf16.mxu0 0
    %2978 = vmatpush2.bf16.msra.mxu0 0
    %2979 = vmatprep.subr.bf16.mxu0 0
    %2980 = vmatpush2.bf16.msra.mxu0 0
    %2981 = vmatprep.subr.bf16.mxu0 0
    %2982 = vmatpush2.bf16.msra.mxu0 0
    %2983 = vmatprep.mubr.bf16.mxu0 0
    %2984 = vmatmul.mubr.bf16.gmra.mxu0 %v2946
    %v2985 = vpop.f32.mrf.mxu0
    %v2986 = vadd.f32 0.0, %v2985
    %v2987 = vpop.f32.mrf.mxu0
    %v2988 = vpop.f32.mrf.mxu0
    %v2989 = vpop.f32.mrf.mxu0
    %2990 = vdwg.mxu0
    %v2991 = vrcp.pop %v2940
    %v2992 = vmul.f32 %v2986, %v2991
    %2994 = vrot.lane.b32.xlu0 %v2992, 32
    %v2995 = vpop.permute.xlu0 %2994
    %2997 = vst.msk [vmem:[#allocation2 + $0x8] sm:$0xff] %vm795, %v2995
    %2998 = vrot.lane.b32.xlu0 %v2772, 64
    %v2999 = vpop.permute.xlu0 %2998
    %3000 = vrot.lane.b32.xlu0 %v2773, 64
    %v3001 = vpop.permute.xlu0 %3000
    %v3003 = vsel %vm569, %v2999, 0
    %v3006 = vsel %vm569, %v3001, 0
    %3008 = vmatprep.subr.bf16.mxu0 0
    %3009 = vmatpush1.bf16.xpose.msra.mxu0 0
    %3010 = vmatprep.subr.bf16.mxu0 0
    %3011 = vmatpush1.bf16.xpose.msra.mxu0 0
    %3012 = vmatprep.subr.bf16.mxu0 0
    %3013 = vmatpush1.bf16.xpose.msra.mxu0 0
    %3014 = vmatprep.subr.bf16.mxu0 0
    %3015 = vmatpush1.bf16.xpose.msra.mxu0 0
    %3016 = vmatprep.subr.bf16.mxu0 0
    %3017 = vmatpush1.bf16.xpose.msra.mxu0 0
    %3018 = vmatprep.subr.bf16.mxu0 0
    %3019 = vmatpush1.bf16.xpose.msra.mxu0 0
    %3020 = vmatprep.subr.bf16.mxu0 0
    %3021 = vmatpush1.bf16.xpose.msra.mxu0 0
    %3022 = vmatprep.subr.bf16.mxu0 0
    %3023 = vmatpush1.bf16.xpose.msra.mxu0 %v3006
    %3024 = vmatprep.subr.bf16.mxu0 0
    %3025 = vmatpush2.bf16.xpose.msra.mxu0 0
    %3026 = vmatprep.subr.bf16.mxu0 0
    %3027 = vmatpush2.bf16.xpose.msra.mxu0 0
    %3028 = vmatprep.subr.bf16.mxu0 0
    %3029 = vmatpush2.bf16.xpose.msra.mxu0 0
    %3030 = vmatprep.subr.bf16.mxu0 0
    %3031 = vmatpush2.bf16.xpose.msra.mxu0 0
    %3032 = vmatprep.subr.bf16.mxu0 0
    %3033 = vmatpush2.bf16.xpose.msra.mxu0 0
    %3034 = vmatprep.subr.bf16.mxu0 0
    %3035 = vmatpush2.bf16.xpose.msra.mxu0 0
    %3036 = vmatprep.subr.bf16.mxu0 0
    %3037 = vmatpush2.bf16.xpose.msra.mxu0 0
    %3038 = vmatprep.subr.bf16.mxu0 0
    %3039 = vmatpush2.bf16.xpose.msra.mxu0 0
    %3040 = vmatprep.mubr.bf16.mxu0 0
    %3041 = vmatmul.mubr.bf16.gmra.mxu0 %v3003
    %v3042 = vpop.f32.mrf.mxu0
    %v3043 = vadd.f32 %v1034, %v3042
    %v3044 = vpop.f32.mrf.mxu0
    %v3045 = vpop.f32.mrf.mxu0
    %v3046 = vpop.f32.mrf.mxu0
    %3047 = vdwg.mxu0
    %v3048 = vsel %vm616, %v3043, -inf
    %3049 = vmax.xlane.f32.xlu0 %v3048
    %v3050 = vpop.xlane.xlu0 %3049
    %v3051 = vsub.f32 %v3043, %v3050
    %v3052 = vmul.f32 %v3051, 1.442695
    %v3053 = vpow.pop %v3052
    %v3054 = vsel %vm616, %v3053, 0.0
    %3055 = vadd.xlane.f32.xlu0 %v3054
    %v3056 = vpop.xlane.xlu0 %3055
    %v3057 = vpack.c.bf16 %v3053, %v3053
    %3058 = vrot.lane.b32.xlu0 %v2830, 64
    %v3059 = vpop.permute.xlu0 %3058
    %v3061 = vsel %vm616, %v3057, 0
    %v3064 = vsel %vm631, %v3059, 0
    %3066 = vmatprep.subr.bf16.mxu0 0
    %3067 = vmatpush1.bf16.msra.mxu0 0
    %3068 = vmatprep.subr.bf16.mxu0 0
    %3069 = vmatpush1.bf16.msra.mxu0 0
    %3070 = vmatprep.subr.bf16.mxu0 0
    %3071 = vmatpush1.bf16.msra.mxu0 0
    %3072 = vmatprep.subr.bf16.mxu0 0
    %3073 = vmatpush1.bf16.msra.mxu0 0
    %3074 = vmatprep.subr.bf16.mxu0 0
    %3075 = vmatpush1.bf16.msra.mxu0 0
    %3076 = vmatprep.subr.bf16.mxu0 0
    %3077 = vmatpush1.bf16.msra.mxu0 0
    %3078 = vmatprep.subr.bf16.mxu0 0
    %3079 = vmatpush1.bf16.msra.mxu0 0
    %3080 = vmatprep.subr.bf16.mxu0 0
    %3081 = vmatpush1.bf16.msra.mxu0 %v3064
    %3082 = vmatprep.subr.bf16.mxu0 0
    %3083 = vmatpush2.bf16.msra.mxu0 0
    %3084 = vmatprep.subr.bf16.mxu0 0
    %3085 = vmatpush2.bf16.msra.mxu0 0
    %3086 = vmatprep.subr.bf16.mxu0 0
    %3087 = vmatpush2.bf16.msra.mxu0 0
    %3088 = vmatprep.subr.bf16.mxu0 0
    %3089 = vmatpush2.bf16.msra.mxu0 0
    %3090 = vmatprep.subr.bf16.mxu0 0
    %3091 = vmatpush2.bf16.msra.mxu0 0
    %3092 = vmatprep.subr.bf16.mxu0 0
    %3093 = vmatpush2.bf16.msra.mxu0 0
    %3094 = vmatprep.subr.bf16.mxu0 0
    %3095 = vmatpush2.bf16.msra.mxu0 0
    %3096 = vmatprep.subr.bf16.mxu0 0
    %3097 = vmatpush2.bf16.msra.mxu0 0
    %3098 = vmatprep.mubr.bf16.mxu0 0
    %3099 = vmatmul.mubr.bf16.gmra.mxu0 %v3061
    %v3100 = vpop.f32.mrf.mxu0
    %v3101 = vadd.f32 0.0, %v3100
    %v3102 = vpop.f32.mrf.mxu0
    %v3103 = vpop.f32.mrf.mxu0
    %v3104 = vpop.f32.mrf.mxu0
    %3105 = vdwg.mxu0
    %v3106 = vrcp.pop %v3056
    %v3107 = vmul.f32 %v3101, %v3106
    %3109 = vrot.lane.b32.xlu0 %v3107, 64
    %v3110 = vpop.permute.xlu0 %3109
    %3112 = vst.msk [vmem:[#allocation2 + $0x8] sm:$0xff] %vm911, %v3110
    %3113 = vrot.lane.b32.xlu0 %v2772, 32
    %v3114 = vpop.permute.xlu0 %3113
    %3115 = vrot.lane.b32.xlu0 %v2773, 32
    %v3116 = vpop.permute.xlu0 %3115
    %v3118 = vsel %vm569, %v3114, 0
    %v3121 = vsel %vm569, %v3116, 0
    %3123 = vmatprep.subr.bf16.mxu0 0
    %3124 = vmatpush1.bf16.xpose.msra.mxu0 0
    %3125 = vmatprep.subr.bf16.mxu0 0
    %3126 = vmatpush1.bf16.xpose.msra.mxu0 0
    %3127 = vmatprep.subr.bf16.mxu0 0
    %3128 = vmatpush1.bf16.xpose.msra.mxu0 0
    %3129 = vmatprep.subr.bf16.mxu0 0
    %3130 = vmatpush1.bf16.xpose.msra.mxu0 0
    %3131 = vmatprep.subr.bf16.mxu0 0
    %3132 = vmatpush1.bf16.xpose.msra.mxu0 0
    %3133 = vmatprep.subr.bf16.mxu0 0
    %3134 = vmatpush1.bf16.xpose.msra.mxu0 0
    %3135 = vmatprep.subr.bf16.mxu0 0
    %3136 = vmatpush1.bf16.xpose.msra.mxu0 0
    %3137 = vmatprep.subr.bf16.mxu0 0
    %3138 = vmatpush1.bf16.xpose.msra.mxu0 %v3121
    %3139 = vmatprep.subr.bf16.mxu0 0
    %3140 = vmatpush2.bf16.xpose.msra.mxu0 0
    %3141 = vmatprep.subr.bf16.mxu0 0
    %3142 = vmatpush2.bf16.xpose.msra.mxu0 0
    %3143 = vmatprep.subr.bf16.mxu0 0
    %3144 = vmatpush2.bf16.xpose.msra.mxu0 0
    %3145 = vmatprep.subr.bf16.mxu0 0
    %3146 = vmatpush2.bf16.xpose.msra.mxu0 0
    %3147 = vmatprep.subr.bf16.mxu0 0
    %3148 = vmatpush2.bf16.xpose.msra.mxu0 0
    %3149 = vmatprep.subr.bf16.mxu0 0
    %3150 = vmatpush2.bf16.xpose.msra.mxu0 0
    %3151 = vmatprep.subr.bf16.mxu0 0
    %3152 = vmatpush2.bf16.xpose.msra.mxu0 0
    %3153 = vmatprep.subr.bf16.mxu0 0
    %3154 = vmatpush2.bf16.xpose.msra.mxu0 0
    %3155 = vmatprep.mubr.bf16.mxu0 0
    %3156 = vmatmul.mubr.bf16.gmra.mxu0 %v3118
    %v3157 = vpop.f32.mrf.mxu0
    %v3158 = vadd.f32 %v1034, %v3157
    %v3159 = vpop.f32.mrf.mxu0
    %v3160 = vpop.f32.mrf.mxu0
    %v3161 = vpop.f32.mrf.mxu0
    %3162 = vdwg.mxu0
    %v3163 = vsel %vm616, %v3158, -inf
    %3164 = vmax.xlane.f32.xlu0 %v3163
    %v3165 = vpop.xlane.xlu0 %3164
    %v3166 = vsub.f32 %v3158, %v3165
    %v3167 = vmul.f32 %v3166, 1.442695
    %v3168 = vpow.pop %v3167
    %v3169 = vsel %vm616, %v3168, 0.0
    %3170 = vadd.xlane.f32.xlu0 %v3169
    %v3171 = vpop.xlane.xlu0 %3170
    %v3172 = vpack.c.bf16 %v3168, %v3168
    %3173 = vrot.lane.b32.xlu0 %v2830, 32
    %v3174 = vpop.permute.xlu0 %3173
    %v3176 = vsel %vm616, %v3172, 0
    %v3179 = vsel %vm631, %v3174, 0
    %3181 = vmatprep.subr.bf16.mxu0 0
    %3182 = vmatpush1.bf16.msra.mxu0 0
    %3183 = vmatprep.subr.bf16.mxu0 0
    %3184 = vmatpush1.bf16.msra.mxu0 0
    %3185 = vmatprep.subr.bf16.mxu0 0
    %3186 = vmatpush1.bf16.msra.mxu0 0
    %3187 = vmatprep.subr.bf16.mxu0 0
    %3188 = vmatpush1.bf16.msra.mxu0 0
    %3189 = vmatprep.subr.bf16.mxu0 0
    %3190 = vmatpush1.bf16.msra.mxu0 0
    %3191 = vmatprep.subr.bf16.mxu0 0
    %3192 = vmatpush1.bf16.msra.mxu0 0
    %3193 = vmatprep.subr.bf16.mxu0 0
    %3194 = vmatpush1.bf16.msra.mxu0 0
    %3195 = vmatprep.subr.bf16.mxu0 0
    %3196 = vmatpush1.bf16.msra.mxu0 %v3179
    %3197 = vmatprep.subr.bf16.mxu0 0
    %3198 = vmatpush2.bf16.msra.mxu0 0
    %3199 = vmatprep.subr.bf16.mxu0 0
    %3200 = vmatpush2.bf16.msra.mxu0 0
    %3201 = vmatprep.subr.bf16.mxu0 0
    %3202 = vmatpush2.bf16.msra.mxu0 0
    %3203 = vmatprep.subr.bf16.mxu0 0
    %3204 = vmatpush2.bf16.msra.mxu0 0
    %3205 = vmatprep.subr.bf16.mxu0 0
    %3206 = vmatpush2.bf16.msra.mxu0 0
    %3207 = vmatprep.subr.bf16.mxu0 0
    %3208 = vmatpush2.bf16.msra.mxu0 0
    %3209 = vmatprep.subr.bf16.mxu0 0
    %3210 = vmatpush2.bf16.msra.mxu0 0
    %3211 = vmatprep.subr.bf16.mxu0 0
    %3212 = vmatpush2.bf16.msra.mxu0 0
    %3213 = vmatprep.mubr.bf16.mxu0 0
    %3214 = vmatmul.mubr.bf16.gmra.mxu0 %v3176
    %v3215 = vpop.f32.mrf.mxu0
    %v3216 = vadd.f32 0.0, %v3215
    %v3217 = vpop.f32.mrf.mxu0
    %v3218 = vpop.f32.mrf.mxu0
    %v3219 = vpop.f32.mrf.mxu0
    %3220 = vdwg.mxu0
    %v3221 = vrcp.pop %v3171
    %v3222 = vmul.f32 %v3216, %v3221
    %3224 = vrot.lane.b32.xlu0 %v3222, 96
    %v3225 = vpop.permute.xlu0 %3224
    %3227 = vst.msk [vmem:[#allocation2 + $0x8] sm:$0xff] %vm1027, %v3225
    %v3228 = vld [vmem:[#allocation2] sm:$0xff]
    %v3229 = vld [vmem:[#allocation2 + $0x8] sm:$0xff]
    %v3230 = vpack.c.bf16 %v3229, %v3228
    %v3231 = vld [vmem:[#allocation10] sm:$0xf]
    %v3232 = vld [vmem:[#allocation10 + $0x4] sm:$0xf]
    %v3233 = vld [vmem:[#allocation10 + $0x8] sm:$0xf]
    %v3234 = vld [vmem:[#allocation10 + $0xc] sm:$0xf]
    %v3235 = vld [vmem:[#allocation10 + $0x10] sm:$0xf]
    %v3236 = vld [vmem:[#allocation10 + $0x14] sm:$0xf]
    %v3237 = vld [vmem:[#allocation10 + $0x18] sm:$0xf]
    %v3238 = vld [vmem:[#allocation10 + $0x1c] sm:$0xf]
    %v3239 = vld [vmem:[#allocation10 + $0x20] sm:$0xf]
    %v3240 = vld [vmem:[#allocation10 + $0x24] sm:$0xf]
    %v3241 = vld [vmem:[#allocation10 + $0x28] sm:$0xf]
    %v3242 = vld [vmem:[#allocation10 + $0x2c] sm:$0xf]
    %v3243 = vld [vmem:[#allocation10 + $0x30] sm:$0xf]
    %v3244 = vld [vmem:[#allocation10 + $0x34] sm:$0xf]
    %v3245 = vld [vmem:[#allocation10 + $0x38] sm:$0xf]
    %v3246 = vld [vmem:[#allocation10 + $0x3c] sm:$0xf]
    %v3247 = vld [vmem:[%s39] sm:$0x1]
    %v3249 = vlaneseq
    %v3250 = vshrl.u32 %v3249, 7
    %v3251 = vsub.s32 0, %v3250
    %v3252 = vrot.slane %v3247, %v3251
    %v3270 = vunpack.c.l.b16 %v3231
    %v3271 = vunpack.c.l.b16 %v3232
    %v3272 = vunpack.c.l.b16 %v3233
    %v3273 = vunpack.c.l.b16 %v3234
    %v3274 = vunpack.c.l.b16 %v3235
    %v3275 = vunpack.c.l.b16 %v3236
    %v3276 = vunpack.c.l.b16 %v3237
    %v3277 = vunpack.c.l.b16 %v3238
    %v3278 = vunpack.c.l.b16 %v3239
    %v3279 = vunpack.c.l.b16 %v3240
    %v3280 = vunpack.c.l.b16 %v3241
    %v3281 = vunpack.c.l.b16 %v3242
    %v3282 = vunpack.c.l.b16 %v3243
    %v3283 = vunpack.c.l.b16 %v3244
    %v3284 = vunpack.c.l.b16 %v3245
    %v3285 = vunpack.c.l.b16 %v3246
    %v3286 = vpack.c.b16 %v3271, %v3270
    %v3287 = vpack.c.b16 %v3273, %v3272
    %v3288 = vpack.c.b16 %v3275, %v3274
    %v3289 = vpack.c.b16 %v3277, %v3276
    %v3290 = vpack.c.b16 %v3279, %v3278
    %v3291 = vpack.c.b16 %v3281, %v3280
    %v3292 = vpack.c.b16 %v3283, %v3282
    %v3293 = vpack.c.b16 %v3285, %v3284
    %3302 = vmatprep.subr.bf16.mxu0 0
    %3303 = vmatpush1.bf16.msra.mxu0 %v3293
    %3304 = vmatprep.subr.bf16.mxu0 0
    %3305 = vmatpush1.bf16.msra.mxu0 %v3292
    %3306 = vmatprep.subr.bf16.mxu0 0
    %3307 = vmatpush1.bf16.msra.mxu0 %v3291
    %3308 = vmatprep.subr.bf16.mxu0 0
    %3309 = vmatpush1.bf16.msra.mxu0 %v3290
    %3310 = vmatprep.subr.bf16.mxu0 0
    %3311 = vmatpush1.bf16.msra.mxu0 %v3289
    %3312 = vmatprep.subr.bf16.mxu0 0
    %3313 = vmatpush1.bf16.msra.mxu0 %v3288
    %3314 = vmatprep.subr.bf16.mxu0 0
    %3315 = vmatpush1.bf16.msra.mxu0 %v3287
    %3316 = vmatprep.subr.bf16.mxu0 0
    %3317 = vmatpush1.bf16.msra.mxu0 %v3286
    %3318 = vmatprep.subr.bf16.mxu0 0
    %3319 = vmatpush2.bf16.msra.mxu0 0
    %3320 = vmatprep.subr.bf16.mxu0 0
    %3321 = vmatpush2.bf16.msra.mxu0 0
    %3322 = vmatprep.subr.bf16.mxu0 0
    %3323 = vmatpush2.bf16.msra.mxu0 0
    %3324 = vmatprep.subr.bf16.mxu0 0
    %3325 = vmatpush2.bf16.msra.mxu0 0
    %3326 = vmatprep.subr.bf16.mxu0 0
    %3327 = vmatpush2.bf16.msra.mxu0 0
    %3328 = vmatprep.subr.bf16.mxu0 0
    %3329 = vmatpush2.bf16.msra.mxu0 0
    %3330 = vmatprep.subr.bf16.mxu0 0
    %3331 = vmatpush2.bf16.msra.mxu0 0
    %3332 = vmatprep.subr.bf16.mxu0 0
    %3333 = vmatpush2.bf16.msra.mxu0 0
    %3334 = vmatprep.mubr.bf16.mxu0 0
    %3335 = vmatmul.mubr.bf16.gmra.mxu0 %v3230
    %v3336 = vpop.f32.mrf.mxu0
    %v3337 = vadd.f32 %v3252, %v3336
    %v3338 = vpop.f32.mrf.mxu0
    %v3339 = vpop.f32.mrf.mxu0
    %v3340 = vadd.f32 %v3252, %v3339
    %v3341 = vpop.f32.mrf.mxu0
    %3342 = vdwg.mxu0
    %v3343 = vadd.f32 %v2052, %v3337
    %v3344 = vadd.f32 %v2053, %v3340
    %3345 = vadd.xlane.f32.xlu0 %v3343
    %v3346 = vpop.xlane.xlu0 %3345
    %3347 = vadd.xlane.f32.xlu0 %v3344
    %v3348 = vpop.xlane.xlu0 %3347
    %v3349 = vmul.f32 %v3346, %v263
    %v3350 = vmul.f32 %v3348, %v263
    %v3351 = vsub.f32 %v3343, %v3349
    %v3352 = vsub.f32 %v3344, %v3350
    %v3353 = vmul.f32 %v3351, %v3351
    %v3354 = vmul.f32 %v3352, %v3352
    %3355 = vadd.xlane.f32.xlu0 %v3353
    %v3356 = vpop.xlane.xlu0 %3355
    %3357 = vadd.xlane.f32.xlu0 %v3354
    %v3358 = vpop.xlane.xlu0 %3357
    %v3359 = vmul.f32 %v3356, %v263
    %v3360 = vmul.f32 %v3358, %v263
    %v3361 = vadd.f32 %v3359, 1e-05
    %v3362 = vadd.f32 %v3360, 1e-05
    %v3363 = vrsqrt.pop %v3361
    %v3364 = vrsqrt.pop %v3362
    %v3365 = vmul.f32 %v3351, %v3363
    %v3366 = vmul.f32 %v3352, %v3364
    %v3367 = vld [vmem:[%s41] sm:$0x1]
    %v3369 = vlaneseq
    %v3370 = vshrl.u32 %v3369, 7
    %v3371 = vsub.s32 0, %v3370
    %v3372 = vrot.slane %v3367, %v3371
    %v3374 = vmul.f32 %v3365, %v3372
    %v3375 = vmul.f32 %v3366, %v3372
    %v3376 = vld [vmem:[%s43] sm:$0x1]
    %v3378 = vlaneseq
    %v3379 = vshrl.u32 %v3378, 7
    %v3380 = vsub.s32 0, %v3379
    %v3381 = vrot.slane %v3376, %v3380
    %v3383 = vadd.f32 %v3374, %v3381
    %v3384 = vadd.f32 %v3375, %v3381
    %v3385 = vpack.c.bf16 %v3384, %v3383
    %v3386 = vld [vmem:[#allocation11] sm:$0xff]
    %v3387 = vld [vmem:[#allocation11 + $0x8] sm:$0xff]
    %v3388 = vld [vmem:[#allocation11 + $0x10] sm:$0xff]
    %v3389 = vld [vmem:[#allocation11 + $0x18] sm:$0xff]
    %v3390 = vld [vmem:[#allocation11 + $0x20] sm:$0xff]
    %v3391 = vld [vmem:[#allocation11 + $0x28] sm:$0xff]
    %v3392 = vld [vmem:[#allocation11 + $0x30] sm:$0xff]
    %v3393 = vld [vmem:[#allocation11 + $0x38] sm:$0xff]
    %v3394 = vld [vmem:[#allocation11 + $0x40] sm:$0xff]
    %v3395 = vld [vmem:[#allocation11 + $0x48] sm:$0xff]
    %v3396 = vld [vmem:[#allocation11 + $0x50] sm:$0xff]
    %v3397 = vld [vmem:[#allocation11 + $0x58] sm:$0xff]
    %v3398 = vld [vmem:[#allocation11 + $0x60] sm:$0xff]
    %v3399 = vld [vmem:[#allocation11 + $0x68] sm:$0xff]
    %v3400 = vld [vmem:[#allocation11 + $0x70] sm:$0xff]
    %v3401 = vld [vmem:[#allocation11 + $0x78] sm:$0xff]
    %v3402 = vld [vmem:[%s47] sm:$0x3]
    %v3404 = vlaneseq
    %v3405 = vshrl.u32 %v3404, 7
    %v3406 = vsub.s32 0, %v3405
    %v3407 = vrot.slane %v3402, %v3406
    %v3408 = vlaneseq
    %v3409 = vshrl.u32 %v3408, 7
    %v3410 = vsub.s32 1, %v3409
    %v3411 = vrot.slane %v3402, %v3410
    %v3430 = vunpack.c.l.b16 %v3386
    %v3431 = vunpack.c.h.b16 %v3386
    %v3432 = vunpack.c.l.b16 %v3387
    %v3433 = vunpack.c.h.b16 %v3387
    %v3434 = vunpack.c.l.b16 %v3388
    %v3435 = vunpack.c.h.b16 %v3388
    %v3436 = vunpack.c.l.b16 %v3389
    %v3437 = vunpack.c.h.b16 %v3389
    %v3438 = vunpack.c.l.b16 %v3390
    %v3439 = vunpack.c.h.b16 %v3390
    %v3440 = vunpack.c.l.b16 %v3391
    %v3441 = vunpack.c.h.b16 %v3391
    %v3442 = vunpack.c.l.b16 %v3392
    %v3443 = vunpack.c.h.b16 %v3392
    %v3444 = vunpack.c.l.b16 %v3393
    %v3445 = vunpack.c.h.b16 %v3393
    %v3446 = vunpack.c.l.b16 %v3394
    %v3447 = vunpack.c.h.b16 %v3394
    %v3448 = vunpack.c.l.b16 %v3395
    %v3449 = vunpack.c.h.b16 %v3395
    %v3450 = vunpack.c.l.b16 %v3396
    %v3451 = vunpack.c.h.b16 %v3396
    %v3452 = vunpack.c.l.b16 %v3397
    %v3453 = vunpack.c.h.b16 %v3397
    %v3454 = vunpack.c.l.b16 %v3398
    %v3455 = vunpack.c.h.b16 %v3398
    %v3456 = vunpack.c.l.b16 %v3399
    %v3457 = vunpack.c.h.b16 %v3399
    %v3458 = vunpack.c.l.b16 %v3400
    %v3459 = vunpack.c.h.b16 %v3400
    %v3460 = vunpack.c.l.b16 %v3401
    %v3461 = vunpack.c.h.b16 %v3401
    %v3462 = vpack.c.b16 %v3432, %v3430
    %v3463 = vpack.c.b16 %v3433, %v3431
    %v3464 = vpack.c.b16 %v3436, %v3434
    %v3465 = vpack.c.b16 %v3437, %v3435
    %v3466 = vpack.c.b16 %v3440, %v3438
    %v3467 = vpack.c.b16 %v3441, %v3439
    %v3468 = vpack.c.b16 %v3444, %v3442
    %v3469 = vpack.c.b16 %v3445, %v3443
    %v3470 = vpack.c.b16 %v3448, %v3446
    %v3471 = vpack.c.b16 %v3449, %v3447
    %v3472 = vpack.c.b16 %v3452, %v3450
    %v3473 = vpack.c.b16 %v3453, %v3451
    %v3474 = vpack.c.b16 %v3456, %v3454
    %v3475 = vpack.c.b16 %v3457, %v3455
    %v3476 = vpack.c.b16 %v3460, %v3458
    %v3477 = vpack.c.b16 %v3461, %v3459
    %3494 = vmatprep.subr.bf16.mxu0 %v3477
    %3495 = vmatpush1.bf16.msra.mxu0 %v3476
    %3496 = vmatprep.subr.bf16.mxu0 %v3475
    %3497 = vmatpush1.bf16.msra.mxu0 %v3474
    %3498 = vmatprep.subr.bf16.mxu0 %v3473
    %3499 = vmatpush1.bf16.msra.mxu0 %v3472
    %3500 = vmatprep.subr.bf16.mxu0 %v3471
    %3501 = vmatpush1.bf16.msra.mxu0 %v3470
    %3502 = vmatprep.subr.bf16.mxu0 %v3469
    %3503 = vmatpush1.bf16.msra.mxu0 %v3468
    %3504 = vmatprep.subr.bf16.mxu0 %v3467
    %3505 = vmatpush1.bf16.msra.mxu0 %v3466
    %3506 = vmatprep.subr.bf16.mxu0 %v3465
    %3507 = vmatpush1.bf16.msra.mxu0 %v3464
    %3508 = vmatprep.subr.bf16.mxu0 %v3463
    %3509 = vmatpush1.bf16.msra.mxu0 %v3462
    %3510 = vmatprep.subr.bf16.mxu0 0
    %3511 = vmatpush2.bf16.msra.mxu0 0
    %3512 = vmatprep.subr.bf16.mxu0 0
    %3513 = vmatpush2.bf16.msra.mxu0 0
    %3514 = vmatprep.subr.bf16.mxu0 0
    %3515 = vmatpush2.bf16.msra.mxu0 0
    %3516 = vmatprep.subr.bf16.mxu0 0
    %3517 = vmatpush2.bf16.msra.mxu0 0
    %3518 = vmatprep.subr.bf16.mxu0 0
    %3519 = vmatpush2.bf16.msra.mxu0 0
    %3520 = vmatprep.subr.bf16.mxu0 0
    %3521 = vmatpush2.bf16.msra.mxu0 0
    %3522 = vmatprep.subr.bf16.mxu0 0
    %3523 = vmatpush2.bf16.msra.mxu0 0
    %3524 = vmatprep.subr.bf16.mxu0 0
    %3525 = vmatpush2.bf16.msra.mxu0 0
    %3526 = vmatprep.mubr.bf16.mxu0 0
    %3527 = vmatmul.mubr.bf16.gmra.mxu0 %v3385
    %v3528 = vpop.f32.mrf.mxu0
    %v3529 = vadd.f32 %v3407, %v3528
    %v3530 = vpop.f32.mrf.mxu0
    %v3531 = vadd.f32 %v3411, %v3530
    %v3532 = vpop.f32.mrf.mxu0
    %v3533 = vadd.f32 %v3407, %v3532
    %v3534 = vpop.f32.mrf.mxu0
    %v3535 = vadd.f32 %v3411, %v3534
    %3536 = vdwg.mxu0
    %v3537 = vmul.f32 %v3529, %v3529
    %v3538 = vmul.f32 %v3531, %v3531
    %v3539 = vmul.f32 %v3533, %v3533
    %v3540 = vmul.f32 %v3535, %v3535
    %v3541 = vmul.f32 %v3529, %v3537
    %v3542 = vmul.f32 %v3531, %v3538
    %v3543 = vmul.f32 %v3533, %v3539
    %v3544 = vmul.f32 %v3535, %v3540
    %v3545 = vmul.f32 %v3541, 0.044715
    %v3546 = vmul.f32 %v3542, 0.044715
    %v3547 = vmul.f32 %v3543, 0.044715
    %v3548 = vmul.f32 %v3544, 0.044715
    %v3549 = vadd.f32 %v3529, %v3545
    %v3550 = vadd.f32 %v3531, %v3546
    %v3551 = vadd.f32 %v3533, %v3547
    %v3552 = vadd.f32 %v3535, %v3548
    %v3553 = vmul.f32 %v3549, 0.7978846
    %v3554 = vmul.f32 %v3550, 0.7978846
    %v3555 = vmul.f32 %v3551, 0.7978846
    %v3556 = vmul.f32 %v3552, 0.7978846
    %v3557 = vtanh.pop %v3553
    %v3558 = vtanh.pop %v3554
    %v3559 = vtanh.pop %v3555
    %v3560 = vtanh.pop %v3556
    %v3561 = vadd.f32 %v3557, 1.0
    %v3562 = vadd.f32 %v3558, 1.0
    %v3563 = vadd.f32 %v3559, 1.0
    %v3564 = vadd.f32 %v3560, 1.0
    %v3565 = vmul.f32 %v3561, 0.5
    %v3566 = vmul.f32 %v3562, 0.5
    %v3567 = vmul.f32 %v3563, 0.5
    %v3568 = vmul.f32 %v3564, 0.5
    %v3569 = vmul.f32 %v3529, %v3565
    %v3570 = vmul.f32 %v3531, %v3566
    %v3571 = vmul.f32 %v3533, %v3567
    %v3572 = vmul.f32 %v3535, %v3568
    %v3573 = vpack.c.bf16 %v3571, %v3569
    %v3574 = vpack.c.bf16 %v3572, %v3570
    %v3575 = vld [vmem:[#allocation13] sm:$0xf]
    %v3576 = vld [vmem:[#allocation13 + $0x4] sm:$0xf]
    %v3577 = vld [vmem:[#allocation13 + $0x8] sm:$0xf]
    %v3578 = vld [vmem:[#allocation13 + $0xc] sm:$0xf]
    %v3579 = vld [vmem:[#allocation13 + $0x10] sm:$0xf]
    %v3580 = vld [vmem:[#allocation13 + $0x14] sm:$0xf]
    %v3581 = vld [vmem:[#allocation13 + $0x18] sm:$0xf]
    %v3582 = vld [vmem:[#allocation13 + $0x1c] sm:$0xf]
    %v3583 = vld [vmem:[#allocation13 + $0x20] sm:$0xf]
    %v3584 = vld [vmem:[#allocation13 + $0x24] sm:$0xf]
    %v3585 = vld [vmem:[#allocation13 + $0x28] sm:$0xf]
    %v3586 = vld [vmem:[#allocation13 + $0x2c] sm:$0xf]
    %v3587 = vld [vmem:[#allocation13 + $0x30] sm:$0xf]
    %v3588 = vld [vmem:[#allocation13 + $0x34] sm:$0xf]
    %v3589 = vld [vmem:[#allocation13 + $0x38] sm:$0xf]
    %v3590 = vld [vmem:[#allocation13 + $0x3c] sm:$0xf]
    %v3591 = vld [vmem:[#allocation13 + $0x40] sm:$0xf]
    %v3592 = vld [vmem:[#allocation13 + $0x44] sm:$0xf]
    %v3593 = vld [vmem:[#allocation13 + $0x48] sm:$0xf]
    %v3594 = vld [vmem:[#allocation13 + $0x4c] sm:$0xf]
    %v3595 = vld [vmem:[#allocation13 + $0x50] sm:$0xf]
    %v3596 = vld [vmem:[#allocation13 + $0x54] sm:$0xf]
    %v3597 = vld [vmem:[#allocation13 + $0x58] sm:$0xf]
    %v3598 = vld [vmem:[#allocation13 + $0x5c] sm:$0xf]
    %v3599 = vld [vmem:[#allocation13 + $0x60] sm:$0xf]
    %v3600 = vld [vmem:[#allocation13 + $0x64] sm:$0xf]
    %v3601 = vld [vmem:[#allocation13 + $0x68] sm:$0xf]
    %v3602 = vld [vmem:[#allocation13 + $0x6c] sm:$0xf]
    %v3603 = vld [vmem:[#allocation13 + $0x70] sm:$0xf]
    %v3604 = vld [vmem:[#allocation13 + $0x74] sm:$0xf]
    %v3605 = vld [vmem:[#allocation13 + $0x78] sm:$0xf]
    %v3606 = vld [vmem:[#allocation13 + $0x7c] sm:$0xf]
    %v3607 = vld [vmem:[%s51] sm:$0x1]
    %v3609 = vlaneseq
    %v3610 = vshrl.u32 %v3609, 7
    %v3611 = vsub.s32 0, %v3610
    %v3612 = vrot.slane %v3607, %v3611
    %v3646 = vunpack.c.l.b16 %v3575
    %v3647 = vunpack.c.l.b16 %v3576
    %v3648 = vunpack.c.l.b16 %v3577
    %v3649 = vunpack.c.l.b16 %v3578
    %v3650 = vunpack.c.l.b16 %v3579
    %v3651 = vunpack.c.l.b16 %v3580
    %v3652 = vunpack.c.l.b16 %v3581
    %v3653 = vunpack.c.l.b16 %v3582
    %v3654 = vunpack.c.l.b16 %v3583
    %v3655 = vunpack.c.l.b16 %v3584
    %v3656 = vunpack.c.l.b16 %v3585
    %v3657 = vunpack.c.l.b16 %v3586
    %v3658 = vunpack.c.l.b16 %v3587
    %v3659 = vunpack.c.l.b16 %v3588
    %v3660 = vunpack.c.l.b16 %v3589
    %v3661 = vunpack.c.l.b16 %v3590
    %v3662 = vunpack.c.l.b16 %v3591
    %v3663 = vunpack.c.l.b16 %v3592
    %v3664 = vunpack.c.l.b16 %v3593
    %v3665 = vunpack.c.l.b16 %v3594
    %v3666 = vunpack.c.l.b16 %v3595
    %v3667 = vunpack.c.l.b16 %v3596
    %v3668 = vunpack.c.l.b16 %v3597
    %v3669 = vunpack.c.l.b16 %v3598
    %v3670 = vunpack.c.l.b16 %v3599
    %v3671 = vunpack.c.l.b16 %v3600
    %v3672 = vunpack.c.l.b16 %v3601
    %v3673 = vunpack.c.l.b16 %v3602
    %v3674 = vunpack.c.l.b16 %v3603
    %v3675 = vunpack.c.l.b16 %v3604
    %v3676 = vunpack.c.l.b16 %v3605
    %v3677 = vunpack.c.l.b16 %v3606
    %v3678 = vpack.c.b16 %v3647, %v3646
    %v3679 = vpack.c.b16 %v3649, %v3648
    %v3680 = vpack.c.b16 %v3651, %v3650
    %v3681 = vpack.c.b16 %v3653, %v3652
    %v3682 = vpack.c.b16 %v3655, %v3654
    %v3683 = vpack.c.b16 %v3657, %v3656
    %v3684 = vpack.c.b16 %v3659, %v3658
    %v3685 = vpack.c.b16 %v3661, %v3660
    %v3686 = vpack.c.b16 %v3663, %v3662
    %v3687 = vpack.c.b16 %v3665, %v3664
    %v3688 = vpack.c.b16 %v3667, %v3666
    %v3689 = vpack.c.b16 %v3669, %v3668
    %v3690 = vpack.c.b16 %v3671, %v3670
    %v3691 = vpack.c.b16 %v3673, %v3672
    %v3692 = vpack.c.b16 %v3675, %v3674
    %v3693 = vpack.c.b16 %v3677, %v3676
    %3710 = vmatprep.subr.bf16.mxu0 0
    %3711 = vmatpush1.bf16.msra.mxu0 %v3685
    %3712 = vmatprep.subr.bf16.mxu0 0
    %3713 = vmatpush1.bf16.msra.mxu0 %v3684
    %3714 = vmatprep.subr.bf16.mxu0 0
    %3715 = vmatpush1.bf16.msra.mxu0 %v3683
    %3716 = vmatprep.subr.bf16.mxu0 0
    %3717 = vmatpush1.bf16.msra.mxu0 %v3682
    %3718 = vmatprep.subr.bf16.mxu0 0
    %3719 = vmatpush1.bf16.msra.mxu0 %v3681
    %3720 = vmatprep.subr.bf16.mxu0 0
    %3721 = vmatpush1.bf16.msra.mxu0 %v3680
    %3722 = vmatprep.subr.bf16.mxu0 0
    %3723 = vmatpush1.bf16.msra.mxu0 %v3679
    %3724 = vmatprep.subr.bf16.mxu0 0
    %3725 = vmatpush1.bf16.msra.mxu0 %v3678
    %3726 = vmatprep.subr.bf16.mxu0 0
    %3727 = vmatpush2.bf16.msra.mxu0 %v3693
    %3728 = vmatprep.subr.bf16.mxu0 0
    %3729 = vmatpush2.bf16.msra.mxu0 %v3692
    %3730 = vmatprep.subr.bf16.mxu0 0
    %3731 = vmatpush2.bf16.msra.mxu0 %v3691
    %3732 = vmatprep.subr.bf16.mxu0 0
    %3733 = vmatpush2.bf16.msra.mxu0 %v3690
    %3734 = vmatprep.subr.bf16.mxu0 0
    %3735 = vmatpush2.bf16.msra.mxu0 %v3689
    %3736 = vmatprep.subr.bf16.mxu0 0
    %3737 = vmatpush2.bf16.msra.mxu0 %v3688
    %3738 = vmatprep.subr.bf16.mxu0 0
    %3739 = vmatpush2.bf16.msra.mxu0 %v3687
    %3740 = vmatprep.subr.bf16.mxu0 0
    %3741 = vmatpush2.bf16.msra.mxu0 %v3686
    %3742 = vmatprep.mubr.bf16.mxu0 %v3574
    %3743 = vmatmul.mubr.bf16.gmra.mxu0 %v3573
    %v3744 = vpop.f32.mrf.mxu0
    %v3745 = vadd.f32 %v3612, %v3744
    %v3746 = vpop.f32.mrf.mxu0
    %v3747 = vpop.f32.mrf.mxu0
    %v3748 = vadd.f32 %v3612, %v3747
    %v3749 = vpop.f32.mrf.mxu0
    %3750 = vdwg.mxu0
    %v3751 = vadd.f32 %v3383, %v3745
    %v3752 = vadd.f32 %v3384, %v3748
    %3753 = vadd.xlane.f32.xlu0 %v3751
    %v3754 = vpop.xlane.xlu0 %3753
    %3755 = vadd.xlane.f32.xlu0 %v3752
    %v3756 = vpop.xlane.xlu0 %3755
    %v3757 = vmul.f32 %v3754, %v263
    %v3758 = vmul.f32 %v3756, %v263
    %v3759 = vsub.f32 %v3751, %v3757
    %v3760 = vsub.f32 %v3752, %v3758
    %v3761 = vmul.f32 %v3759, %v3759
    %v3762 = vmul.f32 %v3760, %v3760
    %3763 = vadd.xlane.f32.xlu0 %v3761
    %v3764 = vpop.xlane.xlu0 %3763
    %3765 = vadd.xlane.f32.xlu0 %v3762
    %v3766 = vpop.xlane.xlu0 %3765
    %v3767 = vmul.f32 %v3764, %v263
    %v3768 = vmul.f32 %v3766, %v263
    %v3769 = vadd.f32 %v3767, 1e-05
    %v3770 = vadd.f32 %v3768, 1e-05
    %v3771 = vrsqrt.pop %v3769
    %v3772 = vrsqrt.pop %v3770
    %v3773 = vmul.f32 %v3759, %v3771
    %v3774 = vmul.f32 %v3760, %v3772
    %v3775 = vld [vmem:[%s53] sm:$0x1]
    %v3777 = vlaneseq
    %v3778 = vshrl.u32 %v3777, 7
    %v3779 = vsub.s32 0, %v3778
    %v3780 = vrot.slane %v3775, %v3779
    %v3782 = vmul.f32 %v3773, %v3780
    %v3783 = vmul.f32 %v3774, %v3780
    %v3784 = vld [vmem:[%s55] sm:$0x1]
    %v3786 = vlaneseq
    %v3787 = vshrl.u32 %v3786, 7
    %v3788 = vsub.s32 0, %v3787
    %v3789 = vrot.slane %v3784, %v3788
    %v3791 = vadd.f32 %v3782, %v3789
    %v3792 = vadd.f32 %v3783, %v3789
    %v3793 = vpack.c.bf16 %v3792, %v3791
    %v3794 = vld [vmem:[#allocation14] sm:$0xf]
    %v3795 = vld [vmem:[#allocation14 + $0x4] sm:$0xf]
    %v3796 = vld [vmem:[#allocation14 + $0x8] sm:$0xf]
    %v3797 = vld [vmem:[#allocation14 + $0xc] sm:$0xf]
    %v3798 = vld [vmem:[#allocation14 + $0x10] sm:$0xf]
    %v3799 = vld [vmem:[#allocation14 + $0x14] sm:$0xf]
    %v3800 = vld [vmem:[#allocation14 + $0x18] sm:$0xf]
    %v3801 = vld [vmem:[#allocation14 + $0x1c] sm:$0xf]
    %v3802 = vld [vmem:[#allocation14 + $0x20] sm:$0xf]
    %v3803 = vld [vmem:[#allocation14 + $0x24] sm:$0xf]
    %v3804 = vld [vmem:[#allocation14 + $0x28] sm:$0xf]
    %v3805 = vld [vmem:[#allocation14 + $0x2c] sm:$0xf]
    %v3806 = vld [vmem:[#allocation14 + $0x30] sm:$0xf]
    %v3807 = vld [vmem:[#allocation14 + $0x34] sm:$0xf]
    %v3808 = vld [vmem:[#allocation14 + $0x38] sm:$0xf]
    %v3809 = vld [vmem:[#allocation14 + $0x3c] sm:$0xf]
    %v3810 = vld [vmem:[%s59] sm:$0x1]
    %v3812 = vlaneseq
    %v3813 = vshrl.u32 %v3812, 7
    %v3814 = vsub.s32 0, %v3813
    %v3815 = vrot.slane %v3810, %v3814
    %v3833 = vunpack.c.l.b16 %v3794
    %v3834 = vunpack.c.l.b16 %v3795
    %v3835 = vunpack.c.l.b16 %v3796
    %v3836 = vunpack.c.l.b16 %v3797
    %v3837 = vunpack.c.l.b16 %v3798
    %v3838 = vunpack.c.l.b16 %v3799
    %v3839 = vunpack.c.l.b16 %v3800
    %v3840 = vunpack.c.l.b16 %v3801
    %v3841 = vunpack.c.l.b16 %v3802
    %v3842 = vunpack.c.l.b16 %v3803
    %v3843 = vunpack.c.l.b16 %v3804
    %v3844 = vunpack.c.l.b16 %v3805
    %v3845 = vunpack.c.l.b16 %v3806
    %v3846 = vunpack.c.l.b16 %v3807
    %v3847 = vunpack.c.l.b16 %v3808
    %v3848 = vunpack.c.l.b16 %v3809
    %v3849 = vpack.c.b16 %v3834, %v3833
    %v3850 = vpack.c.b16 %v3836, %v3835
    %v3851 = vpack.c.b16 %v3838, %v3837
    %v3852 = vpack.c.b16 %v3840, %v3839
    %v3853 = vpack.c.b16 %v3842, %v3841
    %v3854 = vpack.c.b16 %v3844, %v3843
    %v3855 = vpack.c.b16 %v3846, %v3845
    %v3856 = vpack.c.b16 %v3848, %v3847
    %3865 = vmatprep.subr.bf16.mxu0 0
    %3866 = vmatpush1.bf16.msra.mxu0 %v3856
    %3867 = vmatprep.subr.bf16.mxu0 0
    %3868 = vmatpush1.bf16.msra.mxu0 %v3855
    %3869 = vmatprep.subr.bf16.mxu0 0
    %3870 = vmatpush1.bf16.msra.mxu0 %v3854
    %3871 = vmatprep.subr.bf16.mxu0 0
    %3872 = vmatpush1.bf16.msra.mxu0 %v3853
    %3873 = vmatprep.subr.bf16.mxu0 0
    %3874 = vmatpush1.bf16.msra.mxu0 %v3852
    %3875 = vmatprep.subr.bf16.mxu0 0
    %3876 = vmatpush1.bf16.msra.mxu0 %v3851
    %3877 = vmatprep.subr.bf16.mxu0 0
    %3878 = vmatpush1.bf16.msra.mxu0 %v3850
    %3879 = vmatprep.subr.bf16.mxu0 0
    %3880 = vmatpush1.bf16.msra.mxu0 %v3849
    %3881 = vmatprep.subr.bf16.mxu0 0
    %3882 = vmatpush2.bf16.msra.mxu0 0
    %3883 = vmatprep.subr.bf16.mxu0 0
    %3884 = vmatpush2.bf16.msra.mxu0 0
    %3885 = vmatprep.subr.bf16.mxu0 0
    %3886 = vmatpush2.bf16.msra.mxu0 0
    %3887 = vmatprep.subr.bf16.mxu0 0
    %3888 = vmatpush2.bf16.msra.mxu0 0
    %3889 = vmatprep.subr.bf16.mxu0 0
    %3890 = vmatpush2.bf16.msra.mxu0 0
    %3891 = vmatprep.subr.bf16.mxu0 0
    %3892 = vmatpush2.bf16.msra.mxu0 0
    %3893 = vmatprep.subr.bf16.mxu0 0
    %3894 = vmatpush2.bf16.msra.mxu0 0
    %3895 = vmatprep.subr.bf16.mxu0 0
    %3896 = vmatpush2.bf16.msra.mxu0 0
    %3897 = vmatprep.mubr.bf16.mxu0 0
    %3898 = vmatmul.mubr.bf16.gmra.mxu0 %v3793
    %v3899 = vpop.f32.mrf.mxu0
    %v3900 = vadd.f32 %v3815, %v3899
    %v3901 = vpop.f32.mrf.mxu0
    %v3902 = vpop.f32.mrf.mxu0
    %v3903 = vadd.f32 %v3815, %v3902
    %v3904 = vpop.f32.mrf.mxu0
    %3905 = vdwg.mxu0
    %v3906 = vmax.f32 %v3900, 0.0
    %v3907 = vmax.f32 %v3903, 0.0
    %v3908 = vpack.c.bf16 %v3907, %v3906
    %v3909 = vld [vmem:[#allocation16] sm:$0xf]
    %v3910 = vld [vmem:[#allocation16 + $0x4] sm:$0xf]
    %v3911 = vld [vmem:[#allocation16 + $0x8] sm:$0xf]
    %v3912 = vld [vmem:[#allocation16 + $0xc] sm:$0xf]
    %v3913 = vld [vmem:[#allocation16 + $0x10] sm:$0xf]
    %v3914 = vld [vmem:[#allocation16 + $0x14] sm:$0xf]
    %v3915 = vld [vmem:[#allocation16 + $0x18] sm:$0xf]
    %v3916 = vld [vmem:[#allocation16 + $0x1c] sm:$0xf]
    %v3917 = vld [vmem:[#allocation16 + $0x20] sm:$0xf]
    %v3918 = vld [vmem:[#allocation16 + $0x24] sm:$0xf]
    %v3919 = vld [vmem:[#allocation16 + $0x28] sm:$0xf]
    %v3920 = vld [vmem:[#allocation16 + $0x2c] sm:$0xf]
    %v3921 = vld [vmem:[#allocation16 + $0x30] sm:$0xf]
    %v3922 = vld [vmem:[#allocation16 + $0x34] sm:$0xf]
    %v3923 = vld [vmem:[#allocation16 + $0x38] sm:$0xf]
    %v3924 = vld [vmem:[#allocation16 + $0x3c] sm:$0xf]
    %v3925 = vld [vmem:[%s63] sm:$0x1]
    %v3927 = vlaneseq
    %v3928 = vshrl.u32 %v3927, 7
    %v3929 = vsub.s32 0, %v3928
    %v3930 = vrot.slane %v3925, %v3929
    %v3948 = vunpack.c.l.b16 %v3909
    %v3949 = vunpack.c.l.b16 %v3910
    %v3950 = vunpack.c.l.b16 %v3911
    %v3951 = vunpack.c.l.b16 %v3912
    %v3952 = vunpack.c.l.b16 %v3913
    %v3953 = vunpack.c.l.b16 %v3914
    %v3954 = vunpack.c.l.b16 %v3915
    %v3955 = vunpack.c.l.b16 %v3916
    %v3956 = vunpack.c.l.b16 %v3917
    %v3957 = vunpack.c.l.b16 %v3918
    %v3958 = vunpack.c.l.b16 %v3919
    %v3959 = vunpack.c.l.b16 %v3920
    %v3960 = vunpack.c.l.b16 %v3921
    %v3961 = vunpack.c.l.b16 %v3922
    %v3962 = vunpack.c.l.b16 %v3923
    %v3963 = vunpack.c.l.b16 %v3924
    %v3964 = vpack.c.b16 %v3949, %v3948
    %v3965 = vpack.c.b16 %v3951, %v3950
    %v3966 = vpack.c.b16 %v3953, %v3952
    %v3967 = vpack.c.b16 %v3955, %v3954
    %v3968 = vpack.c.b16 %v3957, %v3956
    %v3969 = vpack.c.b16 %v3959, %v3958
    %v3970 = vpack.c.b16 %v3961, %v3960
    %v3971 = vpack.c.b16 %v3963, %v3962
    %3980 = vmatprep.subr.bf16.mxu0 0
    %3981 = vmatpush1.bf16.msra.mxu0 %v3971
    %3982 = vmatprep.subr.bf16.mxu0 0
    %3983 = vmatpush1.bf16.msra.mxu0 %v3970
    %3984 = vmatprep.subr.bf16.mxu0 0
    %3985 = vmatpush1.bf16.msra.mxu0 %v3969
    %3986 = vmatprep.subr.bf16.mxu0 0
    %3987 = vmatpush1.bf16.msra.mxu0 %v3968
    %3988 = vmatprep.subr.bf16.mxu0 0
    %3989 = vmatpush1.bf16.msra.mxu0 %v3967
    %3990 = vmatprep.subr.bf16.mxu0 0
    %3991 = vmatpush1.bf16.msra.mxu0 %v3966
    %3992 = vmatprep.subr.bf16.mxu0 0
    %3993 = vmatpush1.bf16.msra.mxu0 %v3965
    %3994 = vmatprep.subr.bf16.mxu0 0
    %3995 = vmatpush1.bf16.msra.mxu0 %v3964
    %3996 = vmatprep.subr.bf16.mxu0 0
    %3997 = vmatpush2.bf16.msra.mxu0 0
    %3998 = vmatprep.subr.bf16.mxu0 0
    %3999 = vmatpush2.bf16.msra.mxu0 0
    %4000 = vmatprep.subr.bf16.mxu0 0
    %4001 = vmatpush2.bf16.msra.mxu0 0
    %4002 = vmatprep.subr.bf16.mxu0 0
    %4003 = vmatpush2.bf16.msra.mxu0 0
    %4004 = vmatprep.subr.bf16.mxu0 0
    %4005 = vmatpush2.bf16.msra.mxu0 0
    %4006 = vmatprep.subr.bf16.mxu0 0
    %4007 = vmatpush2.bf16.msra.mxu0 0
    %4008 = vmatprep.subr.bf16.mxu0 0
    %4009 = vmatpush2.bf16.msra.mxu0 0
    %4010 = vmatprep.subr.bf16.mxu0 0
    %4011 = vmatpush2.bf16.msra.mxu0 0
    %4012 = vmatprep.mubr.bf16.mxu0 0
    %4013 = vmatmul.mubr.bf16.gmra.mxu0 %v3908
    %v4014 = vpop.f32.mrf.mxu0
    %v4015 = vadd.f32 %v3930, %v4014
    %v4016 = vpop.f32.mrf.mxu0
    %v4017 = vpop.f32.mrf.mxu0
    %v4018 = vadd.f32 %v3930, %v4017
    %v4019 = vpop.f32.mrf.mxu0
    %4020 = vdwg.mxu0
    %4021 = vst [vmem:[%s65] sm:$0xff] %v4015
    %4022 = vst [vmem:[%s65 + $0x8] sm:$0xff] %v4018
    // Predicated region
    $region166: #{forward.1} parent=1 // pred_check
      _
    $region167: #{forward.1} parent=1 // pred_check_branch
      %4024 = sbr.rel (0) target = $region169
    $region168: #{forward.1} parent=1 // pred_region
      _
    $region169: #{forward.1} parent=1 // pred_fallthru
      _
    // Predicated region
    $region170: #{forward.1} parent=1 // pred_check
      _
    $region171: #{forward.1} parent=1 // pred_check_branch
      %4026 = sbr.rel (0) target = $region173
    $region172: #{forward.1} parent=1 // pred_region
      _
    $region173: #{forward.1} parent=1 // pred_fallthru
      _
    %4027 = vsyncpa [#allocation4], 1
    %4028 = vsyncpa [#allocation6], 1
    %4029 = vsyncpa [#allocation9], 1
    %4030 = vsyncpa [#allocation12], 1
    %4031 = vsyncpa [#allocation15], 1

</llo_original>
